<compile_context>
chip_gen: v7x
topology: tpu7x:2x2x1
jax: 0.10.0
libtpu: 0.0.40
codegen_flags: <defaults>
</compile_context>

<pallas_src>
import jax
import jax.numpy as jnp
from jax.experimental import pallas as pl
from jax.experimental.pallas import tpu as pltpu


def _layer_dims(d_in):
    return [(d_in, 128), (128, 64), (64, 32),    # encoder
            (32, 64), (64, 128), (128, d_in)]    # decoder


def ae4_kernel(x_ref, y_ref,
               w1_ref, b1_ref, w2_ref, b2_ref, w3_ref, b3_ref,
               w4_ref, b4_ref, w5_ref, b5_ref, w6_ref, b6_ref,
               yprd_ref, ploss_ref):
    x = x_ref[...]
    y = y_ref[...]

    def linear(h, w_ref, b_ref):
        # bf16 x bf16 -> f32 accumulate on the MXU; bias add in f32 on the VPU.
        return jnp.dot(h.astype(jnp.bfloat16), w_ref[...],
                       preferred_element_type=jnp.float32) + b_ref[...]

    # Encoder: D_in -> 128 -> 64 -> 32, ReLU after each layer.
    h = jnp.maximum(linear(x, w1_ref, b1_ref), 0.0)
    h = jnp.maximum(linear(h, w2_ref, b2_ref), 0.0)
    h = jnp.maximum(linear(h, w3_ref, b3_ref), 0.0)
    # Decoder: 32 -> 64 -> 128 -> D_in, ReLU, ReLU, Sigmoid.
    h = jnp.maximum(linear(h, w4_ref, b4_ref), 0.0)
    h = jnp.maximum(linear(h, w5_ref, b5_ref), 0.0)
    z = linear(h, w6_ref, b6_ref)                        # logits (f32)

    # Sigmoid via a single exp(-|z|), shared with the BCE below.
    e = jnp.exp(-jnp.abs(z))
    inv = pl.reciprocal(1.0 + e, approx=True)            # EUP vrcp, frees VALU
    y_prd = jnp.where(z >= 0, inv, e * inv)
    yprd_ref[...] = y_prd.astype(yprd_ref.dtype)

    # F.binary_cross_entropy(sigmoid(z), Y, reduce=False), from logits:
    #   log(sigmoid(z))     = min(z, 0) - log(1 + exp(-|z|))
    #   log(1 - sigmoid(z)) = -max(z, 0) - log(1 + exp(-|z|))
    # with torch's clamp of log() at -100.
    t = jnp.log(1.0 + e)
    log_p = jnp.maximum(jnp.minimum(z, 0.0) - t, -100.0)
    log_1mp = jnp.maximum(-jnp.maximum(z, 0.0) - t, -100.0)
    bce = -(y * log_p + (1.0 - y) * log_1mp)

    # .mean(dim=1): per-sample loss, (TILE_B, 1); final .sum() in the wrapper.
    ploss_ref[...] = jnp.mean(bce, axis=1, keepdims=True)


def _pick_tile(B, prefer=256):
    for t in (prefer, 256, 128, 64, 32, 16, 8):
        if t <= B and B % t == 0:
            return t
    return B  # fall back to a full-batch block


def ae4_forward(x, y, params, tile_b=None):
    B, d_in = x.shape
    tb = tile_b if tile_b is not None else _pick_tile(B)
    assert B % tb == 0, "batch must be divisible by the batch tile"
    nb = B // tb

    batch_spec = pl.BlockSpec((tb, d_in), lambda i: (i, 0))
    # Weights/biases: full-array blocks with a constant index_map -> resident.
    param_specs = [pl.BlockSpec(p.shape, lambda i: (0, 0)) for p in params]

    dims = _layer_dims(d_in)
    flops = 2 * B * sum(fi * fo for fi, fo in dims)
    bytes_accessed = ((3 * B * d_in + B) * 4                          # x, y, y_prd, loss (f32)
                      + sum(fi * fo * 2 + fo * 4 for fi, fo in dims))  # bf16 W, f32 b
    cost = pl.CostEstimate(flops=flops,
                           transcendentals=2 * B * d_in,
                           bytes_accessed=bytes_accessed)

    y_prd, per_sample = pl.pallas_call(
        ae4_kernel,
        grid=(nb,),
        in_specs=[batch_spec, batch_spec] + param_specs,
        out_specs=(batch_spec,
                   pl.BlockSpec((tb, 1), lambda i: (i, 0))),
        out_shape=(jax.ShapeDtypeStruct((B, d_in), jnp.float32),
                   jax.ShapeDtypeStruct((B, 1), jnp.float32)),
        compiler_params=pltpu.CompilerParams(
            dimension_semantics=("parallel",)),
        cost_estimate=cost,
    )(x, y, *params)

    loss = jnp.sum(per_sample)   # .sum() over the batch
    return y_prd, loss


def init_params(key, d_in):
    """nn.Linear-style init; weights stored bf16 [in, out], biases f32 [1, out]."""
    params = []
    for i, (fi, fo) in enumerate(_layer_dims(d_in)):
        kw, kb = jax.random.split(jax.random.fold_in(key, i))
        bound = 1.0 / (fi ** 0.5)
        w = jax.random.uniform(kw, (fi, fo), jnp.float32, -bound, bound)
        b = jax.random.uniform(kb, (1, fo), jnp.float32, -bound, bound)
        params += [w.astype(jnp.bfloat16), b]
    return params


def ae4_reference(x, y, params):
    """Pure-JAX reference mirroring the kernel numerics (bf16 MXU, f32 math)."""
    ws, bs = params[0::2], params[1::2]
    h = x
    z = None
    for idx, (w, b) in enumerate(zip(ws, bs)):
        z = jnp.dot(h.astype(jnp.bfloat16), w,
                    preferred_element_type=jnp.float32) + b
        if idx < len(ws) - 1:
            h = jnp.maximum(z, 0.0)
    y_prd = jax.nn.sigmoid(z)
    log_p = jnp.maximum(jax.nn.log_sigmoid(z), -100.0)
    log_1mp = jnp.maximum(jax.nn.log_sigmoid(-z), -100.0)
    bce = -(y * log_p + (1.0 - y) * log_1mp)
    return y_prd, jnp.sum(jnp.mean(bce, axis=1))


if __name__ == "__main__":
    B, D_in = 512, 16   # two batch tiles at the default TILE_B=256

    key = jax.random.PRNGKey(0)
    k_x, k_y, k_p = jax.random.split(key, 3)
    # BCE inputs/targets live in [0, 1].
    X = jax.random.uniform(k_x, (B, D_in), jnp.float32)
    Y = jax.random.uniform(k_y, (B, D_in), jnp.float32)
    params = init_params(k_p, D_in)

    y_prd, loss = jax.jit(ae4_forward)(X, Y, params)
    jax.block_until_ready((y_prd, loss))

    y_ref, loss_ref = ae4_reference(X, Y, params)
    # approx EUP reciprocal affects only y_prd, at ~1e-4 relative accuracy.
    assert jnp.allclose(y_prd, y_ref, atol=5e-3, rtol=5e-3), "y_prd mismatch"
    assert jnp.allclose(loss, loss_ref, atol=1e-2, rtol=1e-3), "loss mismatch"

    print("KERNEL_OK")
</pallas_src>

<mosaic_0001>
module attributes {stable_mosaic.version = 11 : i64} {
  func.func @ae4_kernel(%arg0: i32, %arg1: memref<256x16xf32, #tpu.memory_space<vmem>>, %arg2: memref<256x16xf32, #tpu.memory_space<vmem>>, %arg3: memref<16x128xbf16, #tpu.memory_space<vmem>>, %arg4: memref<1x128xf32, #tpu.memory_space<vmem>>, %arg5: memref<128x64xbf16, #tpu.memory_space<vmem>>, %arg6: memref<1x64xf32, #tpu.memory_space<vmem>>, %arg7: memref<64x32xbf16, #tpu.memory_space<vmem>>, %arg8: memref<1x32xf32, #tpu.memory_space<vmem>>, %arg9: memref<32x64xbf16, #tpu.memory_space<vmem>>, %arg10: memref<1x64xf32, #tpu.memory_space<vmem>>, %arg11: memref<64x128xbf16, #tpu.memory_space<vmem>>, %arg12: memref<1x128xf32, #tpu.memory_space<vmem>>, %arg13: memref<128x16xbf16, #tpu.memory_space<vmem>>, %arg14: memref<1x16xf32, #tpu.memory_space<vmem>>, %arg15: memref<256x16xf32, #tpu.memory_space<vmem>>, %arg16: memref<256x1xf32, #tpu.memory_space<vmem>>) attributes {dimension_semantics = [#tpu.dimension_semantics<parallel>], iteration_bounds = array<i64: 2>, scalar_prefetch = 0 : i64, scratch_operands = 0 : i64, tpu.core_type = #tpu.core_type<tc>, window_params = [{transform_indices = @transform_0, window_bounds = array<i64: 256, 16>}, {transform_indices = @transform_1, window_bounds = array<i64: 256, 16>}, {pipeline_mode = #tpu.pipeline_mode<synchronous>, transform_indices = @transform_2, window_bounds = array<i64: 16, 128>}, {pipeline_mode = #tpu.pipeline_mode<synchronous>, transform_indices = @transform_3, window_bounds = array<i64: 1, 128>}, {pipeline_mode = #tpu.pipeline_mode<synchronous>, transform_indices = @transform_4, window_bounds = array<i64: 128, 64>}, {pipeline_mode = #tpu.pipeline_mode<synchronous>, transform_indices = @transform_5, window_bounds = array<i64: 1, 64>}, {pipeline_mode = #tpu.pipeline_mode<synchronous>, transform_indices = @transform_6, window_bounds = array<i64: 64, 32>}, {pipeline_mode = #tpu.pipeline_mode<synchronous>, transform_indices = @transform_7, window_bounds = array<i64: 1, 32>}, {pipeline_mode = #tpu.pipeline_mode<synchronous>, transform_indices = @transform_8, window_bounds = array<i64: 32, 64>}, {pipeline_mode = #tpu.pipeline_mode<synchronous>, transform_indices = @transform_9, window_bounds = array<i64: 1, 64>}, {pipeline_mode = #tpu.pipeline_mode<synchronous>, transform_indices = @transform_10, window_bounds = array<i64: 64, 128>}, {pipeline_mode = #tpu.pipeline_mode<synchronous>, transform_indices = @transform_11, window_bounds = array<i64: 1, 128>}, {pipeline_mode = #tpu.pipeline_mode<synchronous>, transform_indices = @transform_12, window_bounds = array<i64: 128, 16>}, {pipeline_mode = #tpu.pipeline_mode<synchronous>, transform_indices = @transform_13, window_bounds = array<i64: 1, 16>}, {transform_indices = @transform_14, window_bounds = array<i64: 256, 16>}, {transform_indices = @transform_15, window_bounds = array<i64: 256, 1>}]} {
    %c0 = arith.constant 0 : index
    %c0_0 = arith.constant 0 : index
    %0 = vector.load %arg1[%c0, %c0_0] : memref<256x16xf32, #tpu.memory_space<vmem>>, vector<256x16xf32>
    %c0_1 = arith.constant 0 : index
    %c0_2 = arith.constant 0 : index
    %1 = vector.load %arg2[%c0_1, %c0_2] : memref<256x16xf32, #tpu.memory_space<vmem>>, vector<256x16xf32>
    %2 = arith.truncf %0 : vector<256x16xf32> to vector<256x16xbf16>
    %c0_3 = arith.constant 0 : index
    %c0_4 = arith.constant 0 : index
    %3 = vector.load %arg3[%c0_3, %c0_4] : memref<16x128xbf16, #tpu.memory_space<vmem>>, vector<16x128xbf16>
    %cst = arith.constant dense<0.000000e+00> : vector<256x128xf32>
    %4 = tpu.matmul %2, %3, %cst {dimension_numbers = #tpu.dot_dimension_numbers<[1], [0], [0], [1], [0, 0, 1, 1], [], []>} : vector<256x16xbf16>, vector<16x128xbf16>, vector<256x128xf32> -> vector<256x128xf32>
    %c0_5 = arith.constant 0 : index
    %c0_6 = arith.constant 0 : index
    %5 = vector.load %arg4[%c0_5, %c0_6] : memref<1x128xf32, #tpu.memory_space<vmem>>, vector<1x128xf32>
    %6 = vector.broadcast %5 : vector<1x128xf32> to vector<256x128xf32>
    %7 = arith.addf %4, %6 : vector<256x128xf32>
    %cst_7 = arith.constant 0.000000e+00 : f32
    %8 = vector.broadcast %cst_7 : f32 to vector<256x128xf32>
    %9 = arith.maximumf %7, %8 : vector<256x128xf32>
    %10 = arith.truncf %9 : vector<256x128xf32> to vector<256x128xbf16>
    %c0_8 = arith.constant 0 : index
    %c0_9 = arith.constant 0 : index
    %11 = vector.load %arg5[%c0_8, %c0_9] : memref<128x64xbf16, #tpu.memory_space<vmem>>, vector<128x64xbf16>
    %cst_10 = arith.constant dense<0.000000e+00> : vector<256x64xf32>
    %12 = tpu.matmul %10, %11, %cst_10 {dimension_numbers = #tpu.dot_dimension_numbers<[1], [0], [0], [1], [0, 0, 1, 1], [], []>} : vector<256x128xbf16>, vector<128x64xbf16>, vector<256x64xf32> -> vector<256x64xf32>
    %c0_11 = arith.constant 0 : index
    %c0_12 = arith.constant 0 : index
    %13 = vector.load %arg6[%c0_11, %c0_12] : memref<1x64xf32, #tpu.memory_space<vmem>>, vector<1x64xf32>
    %14 = vector.broadcast %13 : vector<1x64xf32> to vector<256x64xf32>
    %15 = arith.addf %12, %14 : vector<256x64xf32>
    %cst_13 = arith.constant 0.000000e+00 : f32
    %16 = vector.broadcast %cst_13 : f32 to vector<256x64xf32>
    %17 = arith.maximumf %15, %16 : vector<256x64xf32>
    %18 = arith.truncf %17 : vector<256x64xf32> to vector<256x64xbf16>
    %c0_14 = arith.constant 0 : index
    %c0_15 = arith.constant 0 : index
    %19 = vector.load %arg7[%c0_14, %c0_15] : memref<64x32xbf16, #tpu.memory_space<vmem>>, vector<64x32xbf16>
    %cst_16 = arith.constant dense<0.000000e+00> : vector<256x32xf32>
    %20 = tpu.matmul %18, %19, %cst_16 {dimension_numbers = #tpu.dot_dimension_numbers<[1], [0], [0], [1], [0, 0, 1, 1], [], []>} : vector<256x64xbf16>, vector<64x32xbf16>, vector<256x32xf32> -> vector<256x32xf32>
    %c0_17 = arith.constant 0 : index
    %c0_18 = arith.constant 0 : index
    %21 = vector.load %arg8[%c0_17, %c0_18] : memref<1x32xf32, #tpu.memory_space<vmem>>, vector<1x32xf32>
    %22 = vector.broadcast %21 : vector<1x32xf32> to vector<256x32xf32>
    %23 = arith.addf %20, %22 : vector<256x32xf32>
    %cst_19 = arith.constant 0.000000e+00 : f32
    %24 = vector.broadcast %cst_19 : f32 to vector<256x32xf32>
    %25 = arith.maximumf %23, %24 : vector<256x32xf32>
    %26 = arith.truncf %25 : vector<256x32xf32> to vector<256x32xbf16>
    %c0_20 = arith.constant 0 : index
    %c0_21 = arith.constant 0 : index
    %27 = vector.load %arg9[%c0_20, %c0_21] : memref<32x64xbf16, #tpu.memory_space<vmem>>, vector<32x64xbf16>
    %cst_22 = arith.constant dense<0.000000e+00> : vector<256x64xf32>
    %28 = tpu.matmul %26, %27, %cst_22 {dimension_numbers = #tpu.dot_dimension_numbers<[1], [0], [0], [1], [0, 0, 1, 1], [], []>} : vector<256x32xbf16>, vector<32x64xbf16>, vector<256x64xf32> -> vector<256x64xf32>
    %c0_23 = arith.constant 0 : index
    %c0_24 = arith.constant 0 : index
    %29 = vector.load %arg10[%c0_23, %c0_24] : memref<1x64xf32, #tpu.memory_space<vmem>>, vector<1x64xf32>
    %30 = vector.broadcast %29 : vector<1x64xf32> to vector<256x64xf32>
    %31 = arith.addf %28, %30 : vector<256x64xf32>
    %cst_25 = arith.constant 0.000000e+00 : f32
    %32 = vector.broadcast %cst_25 : f32 to vector<256x64xf32>
    %33 = arith.maximumf %31, %32 : vector<256x64xf32>
    %34 = arith.truncf %33 : vector<256x64xf32> to vector<256x64xbf16>
    %c0_26 = arith.constant 0 : index
    %c0_27 = arith.constant 0 : index
    %35 = vector.load %arg11[%c0_26, %c0_27] : memref<64x128xbf16, #tpu.memory_space<vmem>>, vector<64x128xbf16>
    %cst_28 = arith.constant dense<0.000000e+00> : vector<256x128xf32>
    %36 = tpu.matmul %34, %35, %cst_28 {dimension_numbers = #tpu.dot_dimension_numbers<[1], [0], [0], [1], [0, 0, 1, 1], [], []>} : vector<256x64xbf16>, vector<64x128xbf16>, vector<256x128xf32> -> vector<256x128xf32>
    %c0_29 = arith.constant 0 : index
    %c0_30 = arith.constant 0 : index
    %37 = vector.load %arg12[%c0_29, %c0_30] : memref<1x128xf32, #tpu.memory_space<vmem>>, vector<1x128xf32>
    %38 = vector.broadcast %37 : vector<1x128xf32> to vector<256x128xf32>
    %39 = arith.addf %36, %38 : vector<256x128xf32>
    %cst_31 = arith.constant 0.000000e+00 : f32
    %40 = vector.broadcast %cst_31 : f32 to vector<256x128xf32>
    %41 = arith.maximumf %39, %40 : vector<256x128xf32>
    %42 = arith.truncf %41 : vector<256x128xf32> to vector<256x128xbf16>
    %c0_32 = arith.constant 0 : index
    %c0_33 = arith.constant 0 : index
    %43 = vector.load %arg13[%c0_32, %c0_33] : memref<128x16xbf16, #tpu.memory_space<vmem>>, vector<128x16xbf16>
    %cst_34 = arith.constant dense<0.000000e+00> : vector<256x16xf32>
    %44 = tpu.matmul %42, %43, %cst_34 {dimension_numbers = #tpu.dot_dimension_numbers<[1], [0], [0], [1], [0, 0, 1, 1], [], []>} : vector<256x128xbf16>, vector<128x16xbf16>, vector<256x16xf32> -> vector<256x16xf32>
    %c0_35 = arith.constant 0 : index
    %c0_36 = arith.constant 0 : index
    %45 = vector.load %arg14[%c0_35, %c0_36] : memref<1x16xf32, #tpu.memory_space<vmem>>, vector<1x16xf32>
    %46 = vector.broadcast %45 : vector<1x16xf32> to vector<256x16xf32>
    %47 = arith.addf %44, %46 : vector<256x16xf32>
    %48 = math.absf %47 : vector<256x16xf32>
    %cst_37 = arith.constant 0.000000e+00 : f32
    %49 = vector.broadcast %cst_37 : f32 to vector<256x16xf32>
    %50 = arith.subf %49, %48 : vector<256x16xf32>
    %51 = math.exp %50 : vector<256x16xf32>
    %cst_38 = arith.constant 1.000000e+00 : f32
    %52 = vector.broadcast %cst_38 : f32 to vector<256x16xf32>
    %53 = arith.addf %52, %51 : vector<256x16xf32>
    %54 = tpu.reciprocal %53 {approx = true} : vector<256x16xf32> -> vector<256x16xf32>
    %cst_39 = arith.constant 0.000000e+00 : f32
    %55 = vector.broadcast %cst_39 : f32 to vector<256x16xf32>
    %56 = arith.cmpf oge, %47, %55 : vector<256x16xf32>
    %57 = arith.mulf %51, %54 : vector<256x16xf32>
    %58 = arith.select %56, %54, %57 : vector<256x16xi1>, vector<256x16xf32>
    %c0_40 = arith.constant 0 : index
    %c0_41 = arith.constant 0 : index
    %59 = vector.load %arg15[%c0_40, %c0_41] : memref<256x16xf32, #tpu.memory_space<vmem>>, vector<256x16xf32>
    tpu.vector_store %arg15[%c0_40, %c0_41], %58 {strides = array<i32>} : memref<256x16xf32, #tpu.memory_space<vmem>>, vector<256x16xf32>,
    %cst_42 = arith.constant 1.000000e+00 : f32
    %60 = vector.broadcast %cst_42 : f32 to vector<256x16xf32>
    %61 = arith.addf %60, %51 : vector<256x16xf32>
    %62 = math.log %61 : vector<256x16xf32>
    %cst_43 = arith.constant 0.000000e+00 : f32
    %63 = vector.broadcast %cst_43 : f32 to vector<256x16xf32>
    %64 = arith.minimumf %47, %63 : vector<256x16xf32>
    %65 = arith.subf %64, %62 : vector<256x16xf32>
    %cst_44 = arith.constant -1.000000e+02 : f32
    %66 = vector.broadcast %cst_44 : f32 to vector<256x16xf32>
    %67 = arith.maximumf %65, %66 : vector<256x16xf32>
    %cst_45 = arith.constant 0.000000e+00 : f32
    %68 = vector.broadcast %cst_45 : f32 to vector<256x16xf32>
    %69 = arith.maximumf %47, %68 : vector<256x16xf32>
    %cst_46 = arith.constant 0.000000e+00 : f32
    %70 = vector.broadcast %cst_46 : f32 to vector<256x16xf32>
    %71 = arith.subf %70, %69 : vector<256x16xf32>
    %72 = arith.subf %71, %62 : vector<256x16xf32>
    %cst_47 = arith.constant -1.000000e+02 : f32
    %73 = vector.broadcast %cst_47 : f32 to vector<256x16xf32>
    %74 = arith.maximumf %72, %73 : vector<256x16xf32>
    %75 = arith.mulf %1, %67 : vector<256x16xf32>
    %cst_48 = arith.constant 1.000000e+00 : f32
    %76 = vector.broadcast %cst_48 : f32 to vector<256x16xf32>
    %77 = arith.subf %76, %1 : vector<256x16xf32>
    %78 = arith.mulf %77, %74 : vector<256x16xf32>
    %79 = arith.addf %75, %78 : vector<256x16xf32>
    %cst_49 = arith.constant 0.000000e+00 : f32
    %80 = vector.broadcast %cst_49 : f32 to vector<256x16xf32>
    %81 = arith.subf %80, %79 : vector<256x16xf32>
    %cst_50 = arith.constant dense<0.000000e+00> : vector<256xf32>
    %82 = vector.multi_reduction <add>, %81, %cst_50 [1] : vector<256x16xf32> to vector<256xf32>
    %83 = vector.shape_cast %82 : vector<256xf32> to vector<256x1xf32>
    %cst_51 = arith.constant 1.600000e+01 : f32
    %84 = vector.broadcast %cst_51 : f32 to vector<256x1xf32>
    %85 = arith.divf %83, %84 : vector<256x1xf32>
    %c0_52 = arith.constant 0 : index
    %c0_53 = arith.constant 0 : index
    %86 = vector.load %arg16[%c0_52, %c0_53] : memref<256x1xf32, #tpu.memory_space<vmem>>, vector<256x1xf32>
    tpu.vector_store %arg16[%c0_52, %c0_53], %85 {strides = array<i32>} : memref<256x1xf32, #tpu.memory_space<vmem>>, vector<256x1xf32>,
    return
  }
  func.func @transform_0(%arg0: i32) -> (i32, i32) {
    %c0_i32 = arith.constant 0 : i32
    %c0_i32_0 = arith.constant 0 : i32
    return %arg0, %c0_i32 : i32, i32
  }
  func.func @transform_1(%arg0: i32) -> (i32, i32) {
    %c0_i32 = arith.constant 0 : i32
    %c0_i32_0 = arith.constant 0 : i32
    return %arg0, %c0_i32 : i32, i32
  }
  func.func @transform_2(%arg0: i32) -> (i32, i32) {
    %c0_i32 = arith.constant 0 : i32
    %c0_i32_0 = arith.constant 0 : i32
    %c0_i32_1 = arith.constant 0 : i32
    return %c0_i32, %c0_i32_0 : i32, i32
  }
  func.func @transform_3(%arg0: i32) -> (i32, i32) {
    %c0_i32 = arith.constant 0 : i32
    %c0_i32_0 = arith.constant 0 : i32
    %c0_i32_1 = arith.constant 0 : i32
    return %c0_i32, %c0_i32_0 : i32, i32
  }
  func.func @transform_4(%arg0: i32) -> (i32, i32) {
    %c0_i32 = arith.constant 0 : i32
    %c0_i32_0 = arith.constant 0 : i32
    %c0_i32_1 = arith.constant 0 : i32
    return %c0_i32, %c0_i32_0 : i32, i32
  }
  func.func @transform_5(%arg0: i32) -> (i32, i32) {
    %c0_i32 = arith.constant 0 : i32
    %c0_i32_0 = arith.constant 0 : i32
    %c0_i32_1 = arith.constant 0 : i32
    return %c0_i32, %c0_i32_0 : i32, i32
  }
  func.func @transform_6(%arg0: i32) -> (i32, i32) {
    %c0_i32 = arith.constant 0 : i32
    %c0_i32_0 = arith.constant 0 : i32
    %c0_i32_1 = arith.constant 0 : i32
    return %c0_i32, %c0_i32_0 : i32, i32
  }
  func.func @transform_7(%arg0: i32) -> (i32, i32) {
    %c0_i32 = arith.constant 0 : i32
    %c0_i32_0 = arith.constant 0 : i32
    %c0_i32_1 = arith.constant 0 : i32
    return %c0_i32, %c0_i32_0 : i32, i32
  }
  func.func @transform_8(%arg0: i32) -> (i32, i32) {
    %c0_i32 = arith.constant 0 : i32
    %c0_i32_0 = arith.constant 0 : i32
    %c0_i32_1 = arith.constant 0 : i32
    return %c0_i32, %c0_i32_0 : i32, i32
  }
  func.func @transform_9(%arg0: i32) -> (i32, i32) {
    %c0_i32 = arith.constant 0 : i32
    %c0_i32_0 = arith.constant 0 : i32
    %c0_i32_1 = arith.constant 0 : i32
    return %c0_i32, %c0_i32_0 : i32, i32
  }
  func.func @transform_10(%arg0: i32) -> (i32, i32) {
    %c0_i32 = arith.constant 0 : i32
    %c0_i32_0 = arith.constant 0 : i32
    %c0_i32_1 = arith.constant 0 : i32
    return %c0_i32, %c0_i32_0 : i32, i32
  }
  func.func @transform_11(%arg0: i32) -> (i32, i32) {
    %c0_i32 = arith.constant 0 : i32
    %c0_i32_0 = arith.constant 0 : i32
    %c0_i32_1 = arith.constant 0 : i32
    return %c0_i32, %c0_i32_0 : i32, i32
  }
  func.func @transform_12(%arg0: i32) -> (i32, i32) {
    %c0_i32 = arith.constant 0 : i32
    %c0_i32_0 = arith.constant 0 : i32
    %c0_i32_1 = arith.constant 0 : i32
    return %c0_i32, %c0_i32_0 : i32, i32
  }
  func.func @transform_13(%arg0: i32) -> (i32, i32) {
    %c0_i32 = arith.constant 0 : i32
    %c0_i32_0 = arith.constant 0 : i32
    %c0_i32_1 = arith.constant 0 : i32
    return %c0_i32, %c0_i32_0 : i32, i32
  }
  func.func @transform_14(%arg0: i32) -> (i32, i32) {
    %c0_i32 = arith.constant 0 : i32
    %c0_i32_0 = arith.constant 0 : i32
    return %arg0, %c0_i32 : i32, i32
  }
  func.func @transform_15(%arg0: i32) -> (i32, i32) {
    %c0_i32 = arith.constant 0 : i32
    %c0_i32_0 = arith.constant 0 : i32
    return %arg0, %c0_i32 : i32, i32
  }
}

</mosaic_0001>

<llo_original>
// kernel: ae4_forward.1
$region0: #{ae4_forward.1}
  #allocation0 [shape = 'u32[]', space=smem, size = 0x4, offset = 0x4, fixed_abs, tag = 'smem constant byte address 0x4 - core index']
  #allocation1 [shape = 'u32[144,128]{1,0:T(1,128)}', space=vmem, size = 0x12000, scoped, tag = 'internal scratch']
  %s0 = inlined_call_operand.vmem [shape: f32[512,16], index: 0, kind: input, shape index: {}]
  %s1 = inlined_call_operand.vmem [shape: f32[512,16], index: 1, kind: input, shape index: {}]
  %s2 = inlined_call_operand.vmem [shape: bf16[16,128], index: 2, kind: input, shape index: {}]
  %s3 = inlined_call_operand.vmem [shape: f32[1,128], index: 3, kind: input, shape index: {}]
  %s4 = inlined_call_operand.vmem [shape: bf16[128,64], index: 4, kind: input, shape index: {}]
  %s5 = inlined_call_operand.vmem [shape: f32[1,64], index: 5, kind: input, shape index: {}]
  %s6 = inlined_call_operand.vmem [shape: bf16[64,32], index: 6, kind: input, shape index: {}]
  %s7 = inlined_call_operand.vmem [shape: f32[1,32], index: 7, kind: input, shape index: {}]
  %s8 = inlined_call_operand.vmem [shape: bf16[32,64], index: 8, kind: input, shape index: {}]
  %s9 = inlined_call_operand.vmem [shape: f32[1,64], index: 9, kind: input, shape index: {}]
  %s10 = inlined_call_operand.vmem [shape: bf16[64,128], index: 10, kind: input, shape index: {}]
  %s11 = inlined_call_operand.vmem [shape: f32[1,128], index: 11, kind: input, shape index: {}]
  %s12 = inlined_call_operand.vmem [shape: bf16[128,16], index: 12, kind: input, shape index: {}]
  %s13 = inlined_call_operand.vmem [shape: f32[1,16], index: 13, kind: input, shape index: {}]
  %s14 = inlined_call_operand.vmem [shape: f32[512,16], index: 14, kind: output, shape index: {0}]
  %s15 = inlined_call_operand.vmem [shape: f32[512,1], index: 15, kind: output, shape index: {1}]
  %16 = xla_tuple %s14, %s15
  %s17 = sld [smem:[#allocation0]]
  $region97: #{ae4_forward.1} parent=0
    _
  %s19 = ssub.s32 1, %s17
  %s20 = scalar_select 0, %s19, %s17
  loop: start=0, step=1, limit=4
  $region2: #{ae4_forward.1} parent=0 // loop_pre_header
    _
  $region3: #{ae4_forward.1} parent=0 // loop_header
    %s22 = sphi 0, %s26
    %p23 = scmp.ge.s32.totalorder %s22, 4
    %s32 = sphi 0, %s34
    %s35 = sphi 0, %s32
    %s36 = sphi 0, %s35
    %s52 = sphi 0, %s36
    %s58 = sphi 0, %s60
    %s61 = sphi 0, %s58
    %s62 = sphi 0, %s61
    %s78 = sphi 0, %s62
    %s82 = sphi 0, %s82
    %s84 = sphi 0, %s82
    %s85 = sphi 0, %s84
    %s99 = sphi 0, %s85
    %s103 = sphi 0, %s103
    %s105 = sphi 0, %s103
    %s106 = sphi 0, %s105
    %s120 = sphi 0, %s106
    %s124 = sphi 0, %s124
    %s126 = sphi 0, %s124
    %s127 = sphi 0, %s126
    %s141 = sphi 0, %s127
    %s145 = sphi 0, %s145
    %s147 = sphi 0, %s145
    %s148 = sphi 0, %s147
    %s162 = sphi 0, %s148
    %s166 = sphi 0, %s166
    %s168 = sphi 0, %s166
    %s169 = sphi 0, %s168
    %s183 = sphi 0, %s169
    %s187 = sphi 0, %s187
    %s189 = sphi 0, %s187
    %s190 = sphi 0, %s189
    %s204 = sphi 0, %s190
    %s208 = sphi 0, %s208
    %s210 = sphi 0, %s208
    %s211 = sphi 0, %s210
    %s225 = sphi 0, %s211
    %s229 = sphi 0, %s229
    %s231 = sphi 0, %s229
    %s232 = sphi 0, %s231
    %s246 = sphi 0, %s232
    %s250 = sphi 0, %s250
    %s252 = sphi 0, %s250
    %s253 = sphi 0, %s252
    %s267 = sphi 0, %s253
    %s271 = sphi 0, %s271
    %s273 = sphi 0, %s271
    %s274 = sphi 0, %s273
    %s288 = sphi 0, %s274
    %s292 = sphi 0, %s292
    %s294 = sphi 0, %s292
    %s295 = sphi 0, %s294
    %s309 = sphi 0, %s295
    %s313 = sphi 0, %s313
    %s315 = sphi 0, %s313
    %s316 = sphi 0, %s315
    %s330 = sphi 0, %s316
    %s336 = sphi 0, %s338
    %s339 = sphi 0, %s336
    %s340 = sphi 0, %s339
    %s356 = sphi 0, %s340
    %s362 = sphi 0, %s364
    %s365 = sphi 0, %s362
    %s366 = sphi 0, %s365
    %s382 = sphi 0, %s366
  $region4: #{ae4_forward.1} parent=0 // loop_header_branch
    %25 = sbr.rel (%p23) target = $region8
  $region5: #{ae4_forward.1} parent=0 // loop_body
    %s27 = ssub.s32 %s22, 1
    %s28 = ssub.s32 %s22, 2
    %s29 = sadd.s32 %s22, 1
    %s30 = ssub.s32 %s22, %s29
    %p31 = scmp.eq.s32.totalorder %s30, 0
    %s33 = sadd.s32 %s32, 1
    %s34 = scalar_select %p31, %s32, %s33
    %p37 = pneg %p31
    %p38 = scmp.eq.s32.totalorder %s22, 1
    %p39 = por %p37, %p38
    %p40 = scmp.ne.s32.totalorder %s32, %s35
    %p41 = scmp.eq.s32.totalorder %s22, 0
    %p42 = por %p40, %p41
    %p43 = scmp.ne.s32.totalorder %s32, %s35
    %p44 = scmp.eq.s32.totalorder %s27, 1
    %p45 = por %p43, %p44
    %p46 = scmp.ne.s32.totalorder %s35, %s36
    %p47 = scmp.eq.s32.totalorder %s27, 0
    %p48 = por %p46, %p47
    %p49 = scmp.ne.s32.totalorder %s35, %s36
    %p50 = scmp.eq.s32.totalorder %s28, 1
    %p51 = por %p49, %p50
    %p53 = scmp.ne.s32.totalorder %s36, %s52
    %p54 = scmp.eq.s32.totalorder %s28, 0
    %p55 = por %p53, %p54
    %s56 = ssub.s32 %s22, %s29
    %p57 = scmp.eq.s32.totalorder %s56, 0
    %s59 = sadd.s32 %s58, 1
    %s60 = scalar_select %p57, %s58, %s59
    %p63 = pneg %p57
    %p64 = scmp.eq.s32.totalorder %s22, 1
    %p65 = por %p63, %p64
    %p66 = scmp.ne.s32.totalorder %s58, %s61
    %p67 = scmp.eq.s32.totalorder %s22, 0
    %p68 = por %p66, %p67
    %p69 = scmp.ne.s32.totalorder %s58, %s61
    %p70 = scmp.eq.s32.totalorder %s27, 1
    %p71 = por %p69, %p70
    %p72 = scmp.ne.s32.totalorder %s61, %s62
    %p73 = scmp.eq.s32.totalorder %s27, 0
    %p74 = por %p72, %p73
    %p75 = scmp.ne.s32.totalorder %s61, %s62
    %p76 = scmp.eq.s32.totalorder %s28, 1
    %p77 = por %p75, %p76
    %p79 = scmp.ne.s32.totalorder %s62, %s78
    %p80 = scmp.eq.s32.totalorder %s28, 0
    %p81 = por %p79, %p80
    %s83 = sadd.s32 %s82, 1
    %p86 = scmp.eq.s32.totalorder %s22, 1
    %p87 = scmp.ne.s32.totalorder %s82, %s84
    %p88 = scmp.eq.s32.totalorder %s22, 0
    %p89 = por %p87, %p88
    %p90 = scmp.ne.s32.totalorder %s82, %s84
    %p91 = scmp.eq.s32.totalorder %s27, 1
    %p92 = por %p90, %p91
    %p93 = scmp.ne.s32.totalorder %s84, %s85
    %p94 = scmp.eq.s32.totalorder %s27, 0
    %p95 = por %p93, %p94
    %p96 = scmp.ne.s32.totalorder %s84, %s85
    %p97 = scmp.eq.s32.totalorder %s28, 1
    %p98 = por %p96, %p97
    %p100 = scmp.ne.s32.totalorder %s85, %s99
    %p101 = scmp.eq.s32.totalorder %s28, 0
    %p102 = por %p100, %p101
    %s104 = sadd.s32 %s103, 1
    %p107 = scmp.eq.s32.totalorder %s22, 1
    %p108 = scmp.ne.s32.totalorder %s103, %s105
    %p109 = scmp.eq.s32.totalorder %s22, 0
    %p110 = por %p108, %p109
    %p111 = scmp.ne.s32.totalorder %s103, %s105
    %p112 = scmp.eq.s32.totalorder %s27, 1
    %p113 = por %p111, %p112
    %p114 = scmp.ne.s32.totalorder %s105, %s106
    %p115 = scmp.eq.s32.totalorder %s27, 0
    %p116 = por %p114, %p115
    %p117 = scmp.ne.s32.totalorder %s105, %s106
    %p118 = scmp.eq.s32.totalorder %s28, 1
    %p119 = por %p117, %p118
    %p121 = scmp.ne.s32.totalorder %s106, %s120
    %p122 = scmp.eq.s32.totalorder %s28, 0
    %p123 = por %p121, %p122
    %s125 = sadd.s32 %s124, 1
    %p128 = scmp.eq.s32.totalorder %s22, 1
    %p129 = scmp.ne.s32.totalorder %s124, %s126
    %p130 = scmp.eq.s32.totalorder %s22, 0
    %p131 = por %p129, %p130
    %p132 = scmp.ne.s32.totalorder %s124, %s126
    %p133 = scmp.eq.s32.totalorder %s27, 1
    %p134 = por %p132, %p133
    %p135 = scmp.ne.s32.totalorder %s126, %s127
    %p136 = scmp.eq.s32.totalorder %s27, 0
    %p137 = por %p135, %p136
    %p138 = scmp.ne.s32.totalorder %s126, %s127
    %p139 = scmp.eq.s32.totalorder %s28, 1
    %p140 = por %p138, %p139
    %p142 = scmp.ne.s32.totalorder %s127, %s141
    %p143 = scmp.eq.s32.totalorder %s28, 0
    %p144 = por %p142, %p143
    %s146 = sadd.s32 %s145, 1
    %p149 = scmp.eq.s32.totalorder %s22, 1
    %p150 = scmp.ne.s32.totalorder %s145, %s147
    %p151 = scmp.eq.s32.totalorder %s22, 0
    %p152 = por %p150, %p151
    %p153 = scmp.ne.s32.totalorder %s145, %s147
    %p154 = scmp.eq.s32.totalorder %s27, 1
    %p155 = por %p153, %p154
    %p156 = scmp.ne.s32.totalorder %s147, %s148
    %p157 = scmp.eq.s32.totalorder %s27, 0
    %p158 = por %p156, %p157
    %p159 = scmp.ne.s32.totalorder %s147, %s148
    %p160 = scmp.eq.s32.totalorder %s28, 1
    %p161 = por %p159, %p160
    %p163 = scmp.ne.s32.totalorder %s148, %s162
    %p164 = scmp.eq.s32.totalorder %s28, 0
    %p165 = por %p163, %p164
    %s167 = sadd.s32 %s166, 1
    %p170 = scmp.eq.s32.totalorder %s22, 1
    %p171 = scmp.ne.s32.totalorder %s166, %s168
    %p172 = scmp.eq.s32.totalorder %s22, 0
    %p173 = por %p171, %p172
    %p174 = scmp.ne.s32.totalorder %s166, %s168
    %p175 = scmp.eq.s32.totalorder %s27, 1
    %p176 = por %p174, %p175
    %p177 = scmp.ne.s32.totalorder %s168, %s169
    %p178 = scmp.eq.s32.totalorder %s27, 0
    %p179 = por %p177, %p178
    %p180 = scmp.ne.s32.totalorder %s168, %s169
    %p181 = scmp.eq.s32.totalorder %s28, 1
    %p182 = por %p180, %p181
    %p184 = scmp.ne.s32.totalorder %s169, %s183
    %p185 = scmp.eq.s32.totalorder %s28, 0
    %p186 = por %p184, %p185
    %s188 = sadd.s32 %s187, 1
    %p191 = scmp.eq.s32.totalorder %s22, 1
    %p192 = scmp.ne.s32.totalorder %s187, %s189
    %p193 = scmp.eq.s32.totalorder %s22, 0
    %p194 = por %p192, %p193
    %p195 = scmp.ne.s32.totalorder %s187, %s189
    %p196 = scmp.eq.s32.totalorder %s27, 1
    %p197 = por %p195, %p196
    %p198 = scmp.ne.s32.totalorder %s189, %s190
    %p199 = scmp.eq.s32.totalorder %s27, 0
    %p200 = por %p198, %p199
    %p201 = scmp.ne.s32.totalorder %s189, %s190
    %p202 = scmp.eq.s32.totalorder %s28, 1
    %p203 = por %p201, %p202
    %p205 = scmp.ne.s32.totalorder %s190, %s204
    %p206 = scmp.eq.s32.totalorder %s28, 0
    %p207 = por %p205, %p206
    %s209 = sadd.s32 %s208, 1
    %p212 = scmp.eq.s32.totalorder %s22, 1
    %p213 = scmp.ne.s32.totalorder %s208, %s210
    %p214 = scmp.eq.s32.totalorder %s22, 0
    %p215 = por %p213, %p214
    %p216 = scmp.ne.s32.totalorder %s208, %s210
    %p217 = scmp.eq.s32.totalorder %s27, 1
    %p218 = por %p216, %p217
    %p219 = scmp.ne.s32.totalorder %s210, %s211
    %p220 = scmp.eq.s32.totalorder %s27, 0
    %p221 = por %p219, %p220
    %p222 = scmp.ne.s32.totalorder %s210, %s211
    %p223 = scmp.eq.s32.totalorder %s28, 1
    %p224 = por %p222, %p223
    %p226 = scmp.ne.s32.totalorder %s211, %s225
    %p227 = scmp.eq.s32.totalorder %s28, 0
    %p228 = por %p226, %p227
    %s230 = sadd.s32 %s229, 1
    %p233 = scmp.eq.s32.totalorder %s22, 1
    %p234 = scmp.ne.s32.totalorder %s229, %s231
    %p235 = scmp.eq.s32.totalorder %s22, 0
    %p236 = por %p234, %p235
    %p237 = scmp.ne.s32.totalorder %s229, %s231
    %p238 = scmp.eq.s32.totalorder %s27, 1
    %p239 = por %p237, %p238
    %p240 = scmp.ne.s32.totalorder %s231, %s232
    %p241 = scmp.eq.s32.totalorder %s27, 0
    %p242 = por %p240, %p241
    %p243 = scmp.ne.s32.totalorder %s231, %s232
    %p244 = scmp.eq.s32.totalorder %s28, 1
    %p245 = por %p243, %p244
    %p247 = scmp.ne.s32.totalorder %s232, %s246
    %p248 = scmp.eq.s32.totalorder %s28, 0
    %p249 = por %p247, %p248
    %s251 = sadd.s32 %s250, 1
    %p254 = scmp.eq.s32.totalorder %s22, 1
    %p255 = scmp.ne.s32.totalorder %s250, %s252
    %p256 = scmp.eq.s32.totalorder %s22, 0
    %p257 = por %p255, %p256
    %p258 = scmp.ne.s32.totalorder %s250, %s252
    %p259 = scmp.eq.s32.totalorder %s27, 1
    %p260 = por %p258, %p259
    %p261 = scmp.ne.s32.totalorder %s252, %s253
    %p262 = scmp.eq.s32.totalorder %s27, 0
    %p263 = por %p261, %p262
    %p264 = scmp.ne.s32.totalorder %s252, %s253
    %p265 = scmp.eq.s32.totalorder %s28, 1
    %p266 = por %p264, %p265
    %p268 = scmp.ne.s32.totalorder %s253, %s267
    %p269 = scmp.eq.s32.totalorder %s28, 0
    %p270 = por %p268, %p269
    %s272 = sadd.s32 %s271, 1
    %p275 = scmp.eq.s32.totalorder %s22, 1
    %p276 = scmp.ne.s32.totalorder %s271, %s273
    %p277 = scmp.eq.s32.totalorder %s22, 0
    %p278 = por %p276, %p277
    %p279 = scmp.ne.s32.totalorder %s271, %s273
    %p280 = scmp.eq.s32.totalorder %s27, 1
    %p281 = por %p279, %p280
    %p282 = scmp.ne.s32.totalorder %s273, %s274
    %p283 = scmp.eq.s32.totalorder %s27, 0
    %p284 = por %p282, %p283
    %p285 = scmp.ne.s32.totalorder %s273, %s274
    %p286 = scmp.eq.s32.totalorder %s28, 1
    %p287 = por %p285, %p286
    %p289 = scmp.ne.s32.totalorder %s274, %s288
    %p290 = scmp.eq.s32.totalorder %s28, 0
    %p291 = por %p289, %p290
    %s293 = sadd.s32 %s292, 1
    %p296 = scmp.eq.s32.totalorder %s22, 1
    %p297 = scmp.ne.s32.totalorder %s292, %s294
    %p298 = scmp.eq.s32.totalorder %s22, 0
    %p299 = por %p297, %p298
    %p300 = scmp.ne.s32.totalorder %s292, %s294
    %p301 = scmp.eq.s32.totalorder %s27, 1
    %p302 = por %p300, %p301
    %p303 = scmp.ne.s32.totalorder %s294, %s295
    %p304 = scmp.eq.s32.totalorder %s27, 0
    %p305 = por %p303, %p304
    %p306 = scmp.ne.s32.totalorder %s294, %s295
    %p307 = scmp.eq.s32.totalorder %s28, 1
    %p308 = por %p306, %p307
    %p310 = scmp.ne.s32.totalorder %s295, %s309
    %p311 = scmp.eq.s32.totalorder %s28, 0
    %p312 = por %p310, %p311
    %s314 = sadd.s32 %s313, 1
    %p317 = scmp.eq.s32.totalorder %s22, 1
    %p318 = scmp.ne.s32.totalorder %s313, %s315
    %p319 = scmp.eq.s32.totalorder %s22, 0
    %p320 = por %p318, %p319
    %p321 = scmp.ne.s32.totalorder %s313, %s315
    %p322 = scmp.eq.s32.totalorder %s27, 1
    %p323 = por %p321, %p322
    %p324 = scmp.ne.s32.totalorder %s315, %s316
    %p325 = scmp.eq.s32.totalorder %s27, 0
    %p326 = por %p324, %p325
    %p327 = scmp.ne.s32.totalorder %s315, %s316
    %p328 = scmp.eq.s32.totalorder %s28, 1
    %p329 = por %p327, %p328
    %p331 = scmp.ne.s32.totalorder %s316, %s330
    %p332 = scmp.eq.s32.totalorder %s28, 0
    %p333 = por %p331, %p332
    %s334 = ssub.s32 %s22, %s29
    %p335 = scmp.eq.s32.totalorder %s334, 0
    %s337 = sadd.s32 %s336, 1
    %s338 = scalar_select %p335, %s336, %s337
    %p341 = pneg %p335
    %p342 = scmp.eq.s32.totalorder %s22, 1
    %p343 = por %p341, %p342
    %p344 = scmp.ne.s32.totalorder %s336, %s339
    %p345 = scmp.eq.s32.totalorder %s22, 0
    %p346 = por %p344, %p345
    %p347 = scmp.ne.s32.totalorder %s336, %s339
    %p348 = scmp.eq.s32.totalorder %s27, 1
    %p349 = por %p347, %p348
    %p350 = scmp.ne.s32.totalorder %s339, %s340
    %p351 = scmp.eq.s32.totalorder %s27, 0
    %p352 = por %p350, %p351
    %p353 = scmp.ne.s32.totalorder %s339, %s340
    %p354 = scmp.eq.s32.totalorder %s28, 1
    %p355 = por %p353, %p354
    %p357 = scmp.ne.s32.totalorder %s340, %s356
    %p358 = scmp.eq.s32.totalorder %s28, 0
    %p359 = por %p357, %p358
    %s360 = ssub.s32 %s22, %s29
    %p361 = scmp.eq.s32.totalorder %s360, 0
    %s363 = sadd.s32 %s362, 1
    %s364 = scalar_select %p361, %s362, %s363
    %p367 = pneg %p361
    %p368 = scmp.eq.s32.totalorder %s22, 1
    %p369 = por %p367, %p368
    %p370 = scmp.ne.s32.totalorder %s362, %s365
    %p371 = scmp.eq.s32.totalorder %s22, 0
    %p372 = por %p370, %p371
    %p373 = scmp.ne.s32.totalorder %s362, %s365
    %p374 = scmp.eq.s32.totalorder %s27, 1
    %p375 = por %p373, %p374
    %p376 = scmp.ne.s32.totalorder %s365, %s366
    %p377 = scmp.eq.s32.totalorder %s27, 0
    %p378 = por %p376, %p377
    %p379 = scmp.ne.s32.totalorder %s365, %s366
    %p380 = scmp.eq.s32.totalorder %s28, 1
    %p381 = por %p379, %p380
    %p383 = scmp.ne.s32.totalorder %s366, %s382
    %p384 = scmp.eq.s32.totalorder %s28, 0
    %p385 = por %p383, %p384
    %p386 = scmp.le.s32.totalorder 1, %s22
    %p387 = scmp.lt.s32.totalorder %s22, 3
    %p388 = pnand %p386, %p387
    %p389 = pneg %p388
    // Predicated region
    $region9: #{ae4_forward.1} parent=5 // pred_check
      _
    $region10: #{ae4_forward.1} parent=5 // pred_check_branch
      %391 = sbr.rel (%p388) target = $region12
    $region11: #{ae4_forward.1} parent=5 // pred_region
      %s392 = ssub.s32 %s22, 1
      // Predicated region
      $region13: #{ae4_forward.1} parent=11 // pred_check
        %p393 = pneg %p95
      $region14: #{ae4_forward.1} parent=11 // pred_check_branch
        %395 = sbr.rel (%p393) target = $region16
      $region15: #{ae4_forward.1} parent=11 // pred_region
        _
      $region16: #{ae4_forward.1} parent=11 // pred_fallthru
        _
      // Predicated region
      $region17: #{ae4_forward.1} parent=11 // pred_check
        %p396 = pneg %p116
      $region18: #{ae4_forward.1} parent=11 // pred_check_branch
        %398 = sbr.rel (%p396) target = $region20
      $region19: #{ae4_forward.1} parent=11 // pred_region
        _
      $region20: #{ae4_forward.1} parent=11 // pred_fallthru
        _
      // Predicated region
      $region21: #{ae4_forward.1} parent=11 // pred_check
        %p399 = pneg %p137
      $region22: #{ae4_forward.1} parent=11 // pred_check_branch
        %401 = sbr.rel (%p399) target = $region24
      $region23: #{ae4_forward.1} parent=11 // pred_region
        _
      $region24: #{ae4_forward.1} parent=11 // pred_fallthru
        _
      // Predicated region
      $region25: #{ae4_forward.1} parent=11 // pred_check
        %p402 = pneg %p158
      $region26: #{ae4_forward.1} parent=11 // pred_check_branch
        %404 = sbr.rel (%p402) target = $region28
      $region27: #{ae4_forward.1} parent=11 // pred_region
        _
      $region28: #{ae4_forward.1} parent=11 // pred_fallthru
        _
      // Predicated region
      $region29: #{ae4_forward.1} parent=11 // pred_check
        %p405 = pneg %p179
      $region30: #{ae4_forward.1} parent=11 // pred_check_branch
        %407 = sbr.rel (%p405) target = $region32
      $region31: #{ae4_forward.1} parent=11 // pred_region
        _
      $region32: #{ae4_forward.1} parent=11 // pred_fallthru
        _
      // Predicated region
      $region33: #{ae4_forward.1} parent=11 // pred_check
        %p408 = pneg %p200
      $region34: #{ae4_forward.1} parent=11 // pred_check_branch
        %410 = sbr.rel (%p408) target = $region36
      $region35: #{ae4_forward.1} parent=11 // pred_region
        _
      $region36: #{ae4_forward.1} parent=11 // pred_fallthru
        _
      // Predicated region
      $region37: #{ae4_forward.1} parent=11 // pred_check
        %p411 = pneg %p221
      $region38: #{ae4_forward.1} parent=11 // pred_check_branch
        %413 = sbr.rel (%p411) target = $region40
      $region39: #{ae4_forward.1} parent=11 // pred_region
        _
      $region40: #{ae4_forward.1} parent=11 // pred_fallthru
        _
      // Predicated region
      $region41: #{ae4_forward.1} parent=11 // pred_check
        %p414 = pneg %p242
      $region42: #{ae4_forward.1} parent=11 // pred_check_branch
        %416 = sbr.rel (%p414) target = $region44
      $region43: #{ae4_forward.1} parent=11 // pred_region
        _
      $region44: #{ae4_forward.1} parent=11 // pred_fallthru
        _
      // Predicated region
      $region45: #{ae4_forward.1} parent=11 // pred_check
        %p417 = pneg %p263
      $region46: #{ae4_forward.1} parent=11 // pred_check_branch
        %419 = sbr.rel (%p417) target = $region48
      $region47: #{ae4_forward.1} parent=11 // pred_region
        _
      $region48: #{ae4_forward.1} parent=11 // pred_fallthru
        _
      // Predicated region
      $region49: #{ae4_forward.1} parent=11 // pred_check
        %p420 = pneg %p284
      $region50: #{ae4_forward.1} parent=11 // pred_check_branch
        %422 = sbr.rel (%p420) target = $region52
      $region51: #{ae4_forward.1} parent=11 // pred_region
        _
      $region52: #{ae4_forward.1} parent=11 // pred_fallthru
        _
      // Predicated region
      $region53: #{ae4_forward.1} parent=11 // pred_check
        %p423 = pneg %p305
      $region54: #{ae4_forward.1} parent=11 // pred_check_branch
        %425 = sbr.rel (%p423) target = $region56
      $region55: #{ae4_forward.1} parent=11 // pred_region
        _
      $region56: #{ae4_forward.1} parent=11 // pred_fallthru
        _
      // Predicated region
      $region57: #{ae4_forward.1} parent=11 // pred_check
        %p426 = pneg %p326
      $region58: #{ae4_forward.1} parent=11 // pred_check_branch
        %428 = sbr.rel (%p426) target = $region60
      $region59: #{ae4_forward.1} parent=11 // pred_region
        _
      $region60: #{ae4_forward.1} parent=11 // pred_fallthru
        _
    $region12: #{ae4_forward.1} parent=5 // pred_fallthru
      _
    %p429 = scmp.lt.s32.totalorder %s22, 2
    // Predicated region
    $region61: #{ae4_forward.1} parent=5 // pred_check
      %p430 = pneg %p429
    $region62: #{ae4_forward.1} parent=5 // pred_check_branch
      %432 = sbr.rel (%p430) target = $region64
    $region63: #{ae4_forward.1} parent=5 // pred_region
      // Predicated region
      $region65: #{ae4_forward.1} parent=63 // pred_check
        %p433 = pneg %p42
      $region66: #{ae4_forward.1} parent=63 // pred_check_branch
        %435 = sbr.rel (%p433) target = $region68
      $region67: #{ae4_forward.1} parent=63 // pred_region
        %s436 = smul.u32 32, %s22
        %p437 = scmp.lt.s32.totalorder %s436, 63
        %s438 = scalar_select %p437, %s436, 63
        %s439 = smul.addr %s438, 8
        %s440 = scalar_lea.vmem %s0, %s439
        %s441 = smul.u32 32, %s22
      $region68: #{ae4_forward.1} parent=63 // pred_fallthru
        _
      // Predicated region
      $region69: #{ae4_forward.1} parent=63 // pred_check
        %p442 = pneg %p68
      $region70: #{ae4_forward.1} parent=63 // pred_check_branch
        %444 = sbr.rel (%p442) target = $region72
      $region71: #{ae4_forward.1} parent=63 // pred_region
        %s445 = smul.u32 32, %s22
        %p446 = scmp.lt.s32.totalorder %s445, 63
        %s447 = scalar_select %p446, %s445, 63
        %s448 = smul.addr %s447, 8
        %s449 = scalar_lea.vmem %s1, %s448
        %s450 = smul.u32 32, %s22
      $region72: #{ae4_forward.1} parent=63 // pred_fallthru
        _
    $region64: #{ae4_forward.1} parent=5 // pred_fallthru
      _
    %p451 = scmp.le.s32.totalorder 1, %s22
    %p452 = scmp.lt.s32.totalorder %s22, 3
    %p453 = pnand %p451, %p452
    %p454 = pneg %p453
    // Predicated region
    $region73: #{ae4_forward.1} parent=5 // pred_check
      _
    $region74: #{ae4_forward.1} parent=5 // pred_check_branch
      %456 = sbr.rel (%p453) target = $region76
    $region75: #{ae4_forward.1} parent=5 // pred_region
      %s457 = ssub.s32 %s22, 1
      %s458 = smul.u32 32, %s27
      %p459 = scmp.lt.s32.totalorder %s458, 63
      %s460 = scalar_select %p459, %s458, 63
      %s461 = smul.addr %s460, 8
      %s462 = scalar_lea.vmem %s0, %s461
      %p463 = pneg %p48
      %p464 = pneg %p45
      %s465 = smul.u32 32, %s27
      %p466 = scmp.lt.s32.totalorder %s465, 63
      %s467 = scalar_select %p466, %s465, 63
      %s468 = smul.addr %s467, 8
      %s469 = scalar_lea.vmem %s1, %s468
      %p470 = pneg %p74
      %p471 = pneg %p71
      %p472 = pneg %p95
      %p473 = pneg %p92
      %p474 = pneg %p116
      %p475 = pneg %p113
      %p476 = pneg %p137
      %p477 = pneg %p134
      %p478 = pneg %p158
      %p479 = pneg %p155
      %p480 = pneg %p179
      %p481 = pneg %p176
      %p482 = pneg %p200
      %p483 = pneg %p197
      %p484 = pneg %p221
      %p485 = pneg %p218
      %p486 = pneg %p242
      %p487 = pneg %p239
      %p488 = pneg %p263
      %p489 = pneg %p260
      %p490 = pneg %p284
      %p491 = pneg %p281
      %p492 = pneg %p305
      %p493 = pneg %p302
      %p494 = pneg %p326
      %p495 = pneg %p323
      %p496 = pneg %p352
      %p497 = pneg %p349
      %s498 = smul.u32 32, %s27
      %p499 = scmp.lt.s32.totalorder %s498, 63
      %s500 = scalar_select %p499, %s498, 63
      %s501 = smul.addr %s500, 8
      %s502 = scalar_lea.vmem %s14, %s501
      %p503 = pneg %p378
      %p504 = pneg %p375
      %s505 = smul.u32 32, %s27
      %p506 = scmp.lt.s32.totalorder %s505, 63
      %s507 = scalar_select %p506, %s505, 63
      %s508 = smul.addr %s507, 8
      %s509 = scalar_lea.vmem %s15, %s508
      %s510 = smul.u32 32, %s27
      %p511 = scmp.lt.s32.totalorder %s510, 63
      %s512 = scalar_select %p511, %s510, 63
      %s513 = smul.addr %s512, 8
      %s514 = scalar_lea.vmem %s0, %s513
      %s515 = smul.u32 32, %s27
      %s516 = smul.u32 32, %s27
      %p517 = scmp.lt.s32.totalorder %s516, 63
      %s518 = scalar_select %p517, %s516, 63
      %s519 = smul.addr %s518, 8
      %s520 = scalar_lea.vmem %s1, %s519
      %s521 = smul.u32 32, %s27
      %s522 = smul.u32 32, %s27
      %p523 = scmp.lt.s32.totalorder %s522, 63
      %s524 = scalar_select %p523, %s522, 63
      %s525 = smul.addr %s524, 8
      %s526 = scalar_lea.vmem %s14, %s525
      %s527 = smul.u32 32, %s27
      %s528 = smul.u32 32, %s27
      %p529 = scmp.lt.s32.totalorder %s528, 63
      %s530 = scalar_select %p529, %s528, 63
      %s531 = smul.addr %s530, 8
      %s532 = scalar_lea.vmem %s15, %s531
      %s533 = smul.u32 32, %s27
      %v535 = vld [vmem:[%s514] sm:$0xff]
      %v536 = vld [vmem:[%s514 + $0x8] sm:$0xff]
      %v537 = vld [vmem:[%s514 + $0x10] sm:$0xff]
      %v538 = vld [vmem:[%s514 + $0x18] sm:$0xff]
      %v539 = vld [vmem:[%s514 + $0x20] sm:$0xff]
      %v540 = vld [vmem:[%s514 + $0x28] sm:$0xff]
      %v541 = vld [vmem:[%s514 + $0x30] sm:$0xff]
      %v542 = vld [vmem:[%s514 + $0x38] sm:$0xff]
      %v543 = vld [vmem:[%s514 + $0x40] sm:$0xff]
      %v544 = vld [vmem:[%s514 + $0x48] sm:$0xff]
      %v545 = vld [vmem:[%s514 + $0x50] sm:$0xff]
      %v546 = vld [vmem:[%s514 + $0x58] sm:$0xff]
      %v547 = vld [vmem:[%s514 + $0x60] sm:$0xff]
      %v548 = vld [vmem:[%s514 + $0x68] sm:$0xff]
      %v549 = vld [vmem:[%s514 + $0x70] sm:$0xff]
      %v550 = vld [vmem:[%s514 + $0x78] sm:$0xff]
      %v551 = vld [vmem:[%s514 + $0x80] sm:$0xff]
      %v552 = vld [vmem:[%s514 + $0x88] sm:$0xff]
      %v553 = vld [vmem:[%s514 + $0x90] sm:$0xff]
      %v554 = vld [vmem:[%s514 + $0x98] sm:$0xff]
      %v555 = vld [vmem:[%s514 + $0xa0] sm:$0xff]
      %v556 = vld [vmem:[%s514 + $0xa8] sm:$0xff]
      %v557 = vld [vmem:[%s514 + $0xb0] sm:$0xff]
      %v558 = vld [vmem:[%s514 + $0xb8] sm:$0xff]
      %v559 = vld [vmem:[%s514 + $0xc0] sm:$0xff]
      %v560 = vld [vmem:[%s514 + $0xc8] sm:$0xff]
      %v561 = vld [vmem:[%s514 + $0xd0] sm:$0xff]
      %v562 = vld [vmem:[%s514 + $0xd8] sm:$0xff]
      %v563 = vld [vmem:[%s514 + $0xe0] sm:$0xff]
      %v564 = vld [vmem:[%s514 + $0xe8] sm:$0xff]
      %v565 = vld [vmem:[%s514 + $0xf0] sm:$0xff]
      %v566 = vld [vmem:[%s514 + $0xf8] sm:$0xff]
      %v567 = vld [vmem:[%s520] sm:$0xff]
      %v568 = vld [vmem:[%s520 + $0x8] sm:$0xff]
      %v569 = vld [vmem:[%s520 + $0x10] sm:$0xff]
      %v570 = vld [vmem:[%s520 + $0x18] sm:$0xff]
      %v571 = vld [vmem:[%s520 + $0x20] sm:$0xff]
      %v572 = vld [vmem:[%s520 + $0x28] sm:$0xff]
      %v573 = vld [vmem:[%s520 + $0x30] sm:$0xff]
      %v574 = vld [vmem:[%s520 + $0x38] sm:$0xff]
      %v575 = vld [vmem:[%s520 + $0x40] sm:$0xff]
      %v576 = vld [vmem:[%s520 + $0x48] sm:$0xff]
      %v577 = vld [vmem:[%s520 + $0x50] sm:$0xff]
      %v578 = vld [vmem:[%s520 + $0x58] sm:$0xff]
      %v579 = vld [vmem:[%s520 + $0x60] sm:$0xff]
      %v580 = vld [vmem:[%s520 + $0x68] sm:$0xff]
      %v581 = vld [vmem:[%s520 + $0x70] sm:$0xff]
      %v582 = vld [vmem:[%s520 + $0x78] sm:$0xff]
      %v583 = vld [vmem:[%s520 + $0x80] sm:$0xff]
      %v584 = vld [vmem:[%s520 + $0x88] sm:$0xff]
      %v585 = vld [vmem:[%s520 + $0x90] sm:$0xff]
      %v586 = vld [vmem:[%s520 + $0x98] sm:$0xff]
      %v587 = vld [vmem:[%s520 + $0xa0] sm:$0xff]
      %v588 = vld [vmem:[%s520 + $0xa8] sm:$0xff]
      %v589 = vld [vmem:[%s520 + $0xb0] sm:$0xff]
      %v590 = vld [vmem:[%s520 + $0xb8] sm:$0xff]
      %v591 = vld [vmem:[%s520 + $0xc0] sm:$0xff]
      %v592 = vld [vmem:[%s520 + $0xc8] sm:$0xff]
      %v593 = vld [vmem:[%s520 + $0xd0] sm:$0xff]
      %v594 = vld [vmem:[%s520 + $0xd8] sm:$0xff]
      %v595 = vld [vmem:[%s520 + $0xe0] sm:$0xff]
      %v596 = vld [vmem:[%s520 + $0xe8] sm:$0xff]
      %v597 = vld [vmem:[%s520 + $0xf0] sm:$0xff]
      %v598 = vld [vmem:[%s520 + $0xf8] sm:$0xff]
      %v599 = vpack.c.bf16 %v536, %v535
      %v600 = vpack.c.bf16 %v538, %v537
      %v601 = vpack.c.bf16 %v540, %v539
      %v602 = vpack.c.bf16 %v542, %v541
      %v603 = vpack.c.bf16 %v544, %v543
      %v604 = vpack.c.bf16 %v546, %v545
      %v605 = vpack.c.bf16 %v548, %v547
      %v606 = vpack.c.bf16 %v550, %v549
      %v607 = vpack.c.bf16 %v552, %v551
      %v608 = vpack.c.bf16 %v554, %v553
      %v609 = vpack.c.bf16 %v556, %v555
      %v610 = vpack.c.bf16 %v558, %v557
      %v611 = vpack.c.bf16 %v560, %v559
      %v612 = vpack.c.bf16 %v562, %v561
      %v613 = vpack.c.bf16 %v564, %v563
      %v614 = vpack.c.bf16 %v566, %v565
      %v615 = vld [vmem:[%s2] sm:$0xf]
      %v616 = vld [vmem:[%s2 + $0x4] sm:$0xf]
      %v617 = vld [vmem:[%s3] sm:$0x1]
      %v619 = vlaneseq
      %v620 = vshrl.u32 %v619, 7
      %v621 = vsub.s32 0, %v620
      %v622 = vrot.slane %v617, %v621
      %v626 = vunpack.c.l.b16 %v615
      %v627 = vunpack.c.l.b16 %v616
      %v628 = vpack.c.b16 %v627, %v626
      %vm630 = vcmask 130048
      %v632 = vsel %vm630, %v599, 0
      %v635 = vsel %vm630, %v600, 0
      %v638 = vsel %vm630, %v601, 0
      %v641 = vsel %vm630, %v602, 0
      %v644 = vsel %vm630, %v603, 0
      %v647 = vsel %vm630, %v604, 0
      %v650 = vsel %vm630, %v605, 0
      %v653 = vsel %vm630, %v606, 0
      %v656 = vsel %vm630, %v607, 0
      %v659 = vsel %vm630, %v608, 0
      %v662 = vsel %vm630, %v609, 0
      %v665 = vsel %vm630, %v610, 0
      %v668 = vsel %vm630, %v611, 0
      %v671 = vsel %vm630, %v612, 0
      %v674 = vsel %vm630, %v613, 0
      %v677 = vsel %vm630, %v614, 0
      %679 = vmatprep.subr.bf16.mxu0 0
      %680 = vmatpush1.bf16.msra.mxu0 %v628
      %681 = vmatprep.subr.bf16.mxu0 0
      %682 = vmatpush1.bf16.msra.mxu0 0
      %683 = vmatprep.subr.bf16.mxu0 0
      %684 = vmatpush1.bf16.msra.mxu0 0
      %685 = vmatprep.subr.bf16.mxu0 0
      %686 = vmatpush1.bf16.msra.mxu0 0
      %687 = vmatprep.subr.bf16.mxu0 0
      %688 = vmatpush1.bf16.msra.mxu0 0
      %689 = vmatprep.subr.bf16.mxu0 0
      %690 = vmatpush1.bf16.msra.mxu0 0
      %691 = vmatprep.subr.bf16.mxu0 0
      %692 = vmatpush1.bf16.msra.mxu0 0
      %693 = vmatprep.subr.bf16.mxu0 0
      %694 = vmatpush1.bf16.msra.mxu0 0
      %695 = vmatprep.subr.bf16.mxu0 0
      %696 = vmatpush1.bf16.msra.mxu0 0
      %697 = vmatprep.subr.bf16.mxu0 0
      %698 = vmatpush1.bf16.msra.mxu0 0
      %699 = vmatprep.subr.bf16.mxu0 0
      %700 = vmatpush1.bf16.msra.mxu0 0
      %701 = vmatprep.subr.bf16.mxu0 0
      %702 = vmatpush1.bf16.msra.mxu0 0
      %703 = vmatprep.subr.bf16.mxu0 0
      %704 = vmatpush1.bf16.msra.mxu0 0
      %705 = vmatprep.subr.bf16.mxu0 0
      %706 = vmatpush1.bf16.msra.mxu0 0
      %707 = vmatprep.subr.bf16.mxu0 0
      %708 = vmatpush1.bf16.msra.mxu0 0
      %709 = vmatprep.subr.bf16.mxu0 0
      %710 = vmatpush1.bf16.msra.mxu0 0
      %711 = vmatprep.mubr.bf16.mxu0 0
      %712 = vmatmul.mubr.bf16.gmra.mrb[0].mxu0 %v632
      %v713 = vpop.f32.mrb[0].mxu0
      %v714 = vadd.f32 %v622, %v713
      %v715 = vpop.f32.mrb[0].mxu0
      %v716 = vpop.f32.mrb[0].mxu0
      %v717 = vadd.f32 %v622, %v716
      %v718 = vpop.f32.mrb[0].mxu0
      %719 = vmatprep.mubr.bf16.mxu0 0
      %720 = vmatmul.mubr.bf16.gmra.mrb[0].mxu0 %v635
      %v721 = vpop.f32.mrb[0].mxu0
      %v722 = vadd.f32 %v622, %v721
      %v723 = vpop.f32.mrb[0].mxu0
      %v724 = vpop.f32.mrb[0].mxu0
      %v725 = vadd.f32 %v622, %v724
      %v726 = vpop.f32.mrb[0].mxu0
      %727 = vmatprep.mubr.bf16.mxu0 0
      %728 = vmatmul.mubr.bf16.gmra.mrb[0].mxu0 %v638
      %v729 = vpop.f32.mrb[0].mxu0
      %v730 = vadd.f32 %v622, %v729
      %v731 = vpop.f32.mrb[0].mxu0
      %v732 = vpop.f32.mrb[0].mxu0
      %v733 = vadd.f32 %v622, %v732
      %v734 = vpop.f32.mrb[0].mxu0
      %735 = vmatprep.mubr.bf16.mxu0 0
      %736 = vmatmul.mubr.bf16.gmra.mrb[0].mxu0 %v641
      %v737 = vpop.f32.mrb[0].mxu0
      %v738 = vadd.f32 %v622, %v737
      %v739 = vpop.f32.mrb[0].mxu0
      %v740 = vpop.f32.mrb[0].mxu0
      %v741 = vadd.f32 %v622, %v740
      %v742 = vpop.f32.mrb[0].mxu0
      %743 = vmatprep.mubr.bf16.mxu0 0
      %744 = vmatmul.mubr.bf16.gmra.mrb[0].mxu0 %v644
      %v745 = vpop.f32.mrb[0].mxu0
      %v746 = vadd.f32 %v622, %v745
      %v747 = vpop.f32.mrb[0].mxu0
      %v748 = vpop.f32.mrb[0].mxu0
      %v749 = vadd.f32 %v622, %v748
      %v750 = vpop.f32.mrb[0].mxu0
      %751 = vmatprep.mubr.bf16.mxu0 0
      %752 = vmatmul.mubr.bf16.gmra.mrb[0].mxu0 %v647
      %v753 = vpop.f32.mrb[0].mxu0
      %v754 = vadd.f32 %v622, %v753
      %v755 = vpop.f32.mrb[0].mxu0
      %v756 = vpop.f32.mrb[0].mxu0
      %v757 = vadd.f32 %v622, %v756
      %v758 = vpop.f32.mrb[0].mxu0
      %759 = vmatprep.mubr.bf16.mxu0 0
      %760 = vmatmul.mubr.bf16.gmra.mrb[0].mxu0 %v650
      %v761 = vpop.f32.mrb[0].mxu0
      %v762 = vadd.f32 %v622, %v761
      %v763 = vpop.f32.mrb[0].mxu0
      %v764 = vpop.f32.mrb[0].mxu0
      %v765 = vadd.f32 %v622, %v764
      %v766 = vpop.f32.mrb[0].mxu0
      %767 = vmatprep.mubr.bf16.mxu0 0
      %768 = vmatmul.mubr.bf16.gmra.mrb[0].mxu0 %v653
      %v769 = vpop.f32.mrb[0].mxu0
      %v770 = vadd.f32 %v622, %v769
      %v771 = vpop.f32.mrb[0].mxu0
      %v772 = vpop.f32.mrb[0].mxu0
      %v773 = vadd.f32 %v622, %v772
      %v774 = vpop.f32.mrb[0].mxu0
      %775 = vmatprep.mubr.bf16.mxu0 0
      %776 = vmatmul.mubr.bf16.gmra.mrb[0].mxu0 %v656
      %v777 = vpop.f32.mrb[0].mxu0
      %v778 = vadd.f32 %v622, %v777
      %v779 = vpop.f32.mrb[0].mxu0
      %v780 = vpop.f32.mrb[0].mxu0
      %v781 = vadd.f32 %v622, %v780
      %v782 = vpop.f32.mrb[0].mxu0
      %783 = vmatprep.mubr.bf16.mxu0 0
      %784 = vmatmul.mubr.bf16.gmra.mrb[0].mxu0 %v659
      %v785 = vpop.f32.mrb[0].mxu0
      %v786 = vadd.f32 %v622, %v785
      %v787 = vpop.f32.mrb[0].mxu0
      %v788 = vpop.f32.mrb[0].mxu0
      %v789 = vadd.f32 %v622, %v788
      %v790 = vpop.f32.mrb[0].mxu0
      %791 = vmatprep.mubr.bf16.mxu0 0
      %792 = vmatmul.mubr.bf16.gmra.mrb[0].mxu0 %v662
      %v793 = vpop.f32.mrb[0].mxu0
      %v794 = vadd.f32 %v622, %v793
      %v795 = vpop.f32.mrb[0].mxu0
      %v796 = vpop.f32.mrb[0].mxu0
      %v797 = vadd.f32 %v622, %v796
      %v798 = vpop.f32.mrb[0].mxu0
      %799 = vmatprep.mubr.bf16.mxu0 0
      %800 = vmatmul.mubr.bf16.gmra.mrb[0].mxu0 %v665
      %v801 = vpop.f32.mrb[0].mxu0
      %v802 = vadd.f32 %v622, %v801
      %v803 = vpop.f32.mrb[0].mxu0
      %v804 = vpop.f32.mrb[0].mxu0
      %v805 = vadd.f32 %v622, %v804
      %v806 = vpop.f32.mrb[0].mxu0
      %807 = vmatprep.mubr.bf16.mxu0 0
      %808 = vmatmul.mubr.bf16.gmra.mrb[0].mxu0 %v668
      %v809 = vpop.f32.mrb[0].mxu0
      %v810 = vadd.f32 %v622, %v809
      %v811 = vpop.f32.mrb[0].mxu0
      %v812 = vpop.f32.mrb[0].mxu0
      %v813 = vadd.f32 %v622, %v812
      %v814 = vpop.f32.mrb[0].mxu0
      %815 = vmatprep.mubr.bf16.mxu0 0
      %816 = vmatmul.mubr.bf16.gmra.mrb[0].mxu0 %v671
      %v817 = vpop.f32.mrb[0].mxu0
      %v818 = vadd.f32 %v622, %v817
      %v819 = vpop.f32.mrb[0].mxu0
      %v820 = vpop.f32.mrb[0].mxu0
      %v821 = vadd.f32 %v622, %v820
      %v822 = vpop.f32.mrb[0].mxu0
      %823 = vmatprep.mubr.bf16.mxu0 0
      %824 = vmatmul.mubr.bf16.gmra.mrb[0].mxu0 %v674
      %v825 = vpop.f32.mrb[0].mxu0
      %v826 = vadd.f32 %v622, %v825
      %v827 = vpop.f32.mrb[0].mxu0
      %v828 = vpop.f32.mrb[0].mxu0
      %v829 = vadd.f32 %v622, %v828
      %v830 = vpop.f32.mrb[0].mxu0
      %831 = vmatprep.mubr.bf16.mxu0 0
      %832 = vmatmul.mubr.bf16.gmra.mrb[0].mxu0 %v677
      %v833 = vpop.f32.mrb[0].mxu0
      %v834 = vadd.f32 %v622, %v833
      %v835 = vpop.f32.mrb[0].mxu0
      %v836 = vpop.f32.mrb[0].mxu0
      %v837 = vadd.f32 %v622, %v836
      %v838 = vpop.f32.mrb[0].mxu0
      %839 = vdwg.mxu0
      %v840 = vmax.f32 %v714, 0.0
      %v841 = vmax.f32 %v717, 0.0
      %v842 = vmax.f32 %v722, 0.0
      %v843 = vmax.f32 %v725, 0.0
      %v844 = vmax.f32 %v730, 0.0
      %v845 = vmax.f32 %v733, 0.0
      %v846 = vmax.f32 %v738, 0.0
      %v847 = vmax.f32 %v741, 0.0
      %v848 = vmax.f32 %v746, 0.0
      %v849 = vmax.f32 %v749, 0.0
      %v850 = vmax.f32 %v754, 0.0
      %v851 = vmax.f32 %v757, 0.0
      %v852 = vmax.f32 %v762, 0.0
      %v853 = vmax.f32 %v765, 0.0
      %v854 = vmax.f32 %v770, 0.0
      %v855 = vmax.f32 %v773, 0.0
      %v856 = vmax.f32 %v778, 0.0
      %v857 = vmax.f32 %v781, 0.0
      %v858 = vmax.f32 %v786, 0.0
      %v859 = vmax.f32 %v789, 0.0
      %v860 = vmax.f32 %v794, 0.0
      %v861 = vmax.f32 %v797, 0.0
      %v862 = vmax.f32 %v802, 0.0
      %v863 = vmax.f32 %v805, 0.0
      %v864 = vmax.f32 %v810, 0.0
      %v865 = vmax.f32 %v813, 0.0
      %v866 = vmax.f32 %v818, 0.0
      %v867 = vmax.f32 %v821, 0.0
      %v868 = vmax.f32 %v826, 0.0
      %v869 = vmax.f32 %v829, 0.0
      %v870 = vmax.f32 %v834, 0.0
      %v871 = vmax.f32 %v837, 0.0
      %v872 = vpack.c.bf16 %v841, %v840
      %v873 = vpack.c.bf16 %v843, %v842
      %v874 = vpack.c.bf16 %v845, %v844
      %v875 = vpack.c.bf16 %v847, %v846
      %v876 = vpack.c.bf16 %v849, %v848
      %v877 = vpack.c.bf16 %v851, %v850
      %v878 = vpack.c.bf16 %v853, %v852
      %v879 = vpack.c.bf16 %v855, %v854
      %v880 = vpack.c.bf16 %v857, %v856
      %v881 = vpack.c.bf16 %v859, %v858
      %v882 = vpack.c.bf16 %v861, %v860
      %v883 = vpack.c.bf16 %v863, %v862
      %v884 = vpack.c.bf16 %v865, %v864
      %v885 = vpack.c.bf16 %v867, %v866
      %v886 = vpack.c.bf16 %v869, %v868
      %v887 = vpack.c.bf16 %v871, %v870
      %v888 = vld [vmem:[%s4] sm:$0xf]
      %v889 = vld [vmem:[%s4 + $0x4] sm:$0xf]
      %v890 = vld [vmem:[%s4 + $0x8] sm:$0xf]
      %v891 = vld [vmem:[%s4 + $0xc] sm:$0xf]
      %v892 = vld [vmem:[%s4 + $0x10] sm:$0xf]
      %v893 = vld [vmem:[%s4 + $0x14] sm:$0xf]
      %v894 = vld [vmem:[%s4 + $0x18] sm:$0xf]
      %v895 = vld [vmem:[%s4 + $0x1c] sm:$0xf]
      %v896 = vld [vmem:[%s4 + $0x20] sm:$0xf]
      %v897 = vld [vmem:[%s4 + $0x24] sm:$0xf]
      %v898 = vld [vmem:[%s4 + $0x28] sm:$0xf]
      %v899 = vld [vmem:[%s4 + $0x2c] sm:$0xf]
      %v900 = vld [vmem:[%s4 + $0x30] sm:$0xf]
      %v901 = vld [vmem:[%s4 + $0x34] sm:$0xf]
      %v902 = vld [vmem:[%s4 + $0x38] sm:$0xf]
      %v903 = vld [vmem:[%s4 + $0x3c] sm:$0xf]
      %v904 = vld [vmem:[%s5] sm:$0x1]
      %v906 = vlaneseq
      %v907 = vshrl.u32 %v906, 7
      %v908 = vsub.s32 0, %v907
      %v909 = vrot.slane %v904, %v908
      %v927 = vunpack.c.l.b16 %v888
      %v928 = vunpack.c.l.b16 %v889
      %v929 = vunpack.c.l.b16 %v890
      %v930 = vunpack.c.l.b16 %v891
      %v931 = vunpack.c.l.b16 %v892
      %v932 = vunpack.c.l.b16 %v893
      %v933 = vunpack.c.l.b16 %v894
      %v934 = vunpack.c.l.b16 %v895
      %v935 = vunpack.c.l.b16 %v896
      %v936 = vunpack.c.l.b16 %v897
      %v937 = vunpack.c.l.b16 %v898
      %v938 = vunpack.c.l.b16 %v899
      %v939 = vunpack.c.l.b16 %v900
      %v940 = vunpack.c.l.b16 %v901
      %v941 = vunpack.c.l.b16 %v902
      %v942 = vunpack.c.l.b16 %v903
      %v943 = vpack.c.b16 %v928, %v927
      %v944 = vpack.c.b16 %v930, %v929
      %v945 = vpack.c.b16 %v932, %v931
      %v946 = vpack.c.b16 %v934, %v933
      %v947 = vpack.c.b16 %v936, %v935
      %v948 = vpack.c.b16 %v938, %v937
      %v949 = vpack.c.b16 %v940, %v939
      %v950 = vpack.c.b16 %v942, %v941
      %959 = vmatprep.subr.bf16.mxu0 0
      %960 = vmatpush1.bf16.msra.mxu0 %v943
      %961 = vmatprep.subr.bf16.mxu0 0
      %962 = vmatpush1.bf16.msra.mxu0 %v944
      %963 = vmatprep.subr.bf16.mxu0 0
      %964 = vmatpush1.bf16.msra.mxu0 %v945
      %965 = vmatprep.subr.bf16.mxu0 0
      %966 = vmatpush1.bf16.msra.mxu0 %v946
      %967 = vmatprep.subr.bf16.mxu0 0
      %968 = vmatpush1.bf16.msra.mxu0 %v947
      %969 = vmatprep.subr.bf16.mxu0 0
      %970 = vmatpush1.bf16.msra.mxu0 %v948
      %971 = vmatprep.subr.bf16.mxu0 0
      %972 = vmatpush1.bf16.msra.mxu0 %v949
      %973 = vmatprep.subr.bf16.mxu0 0
      %974 = vmatpush1.bf16.msra.mxu0 %v950
      %975 = vmatprep.subr.bf16.mxu0 0
      %976 = vmatpush1.bf16.msra.mxu0 0
      %977 = vmatprep.subr.bf16.mxu0 0
      %978 = vmatpush1.bf16.msra.mxu0 0
      %979 = vmatprep.subr.bf16.mxu0 0
      %980 = vmatpush1.bf16.msra.mxu0 0
      %981 = vmatprep.subr.bf16.mxu0 0
      %982 = vmatpush1.bf16.msra.mxu0 0
      %983 = vmatprep.subr.bf16.mxu0 0
      %984 = vmatpush1.bf16.msra.mxu0 0
      %985 = vmatprep.subr.bf16.mxu0 0
      %986 = vmatpush1.bf16.msra.mxu0 0
      %987 = vmatprep.subr.bf16.mxu0 0
      %988 = vmatpush1.bf16.msra.mxu0 0
      %989 = vmatprep.subr.bf16.mxu0 0
      %990 = vmatpush1.bf16.msra.mxu0 0
      %991 = vmatprep.mubr.bf16.mxu0 0
      %992 = vmatmul.mubr.bf16.gmra.mrb[0].mxu0 %v872
      %v993 = vpop.f32.mrb[0].mxu0
      %v994 = vadd.f32 %v909, %v993
      %v995 = vpop.f32.mrb[0].mxu0
      %v996 = vpop.f32.mrb[0].mxu0
      %v997 = vadd.f32 %v909, %v996
      %v998 = vpop.f32.mrb[0].mxu0
      %999 = vmatprep.mubr.bf16.mxu0 0
      %1000 = vmatmul.mubr.bf16.gmra.mrb[0].mxu0 %v873
      %v1001 = vpop.f32.mrb[0].mxu0
      %v1002 = vadd.f32 %v909, %v1001
      %v1003 = vpop.f32.mrb[0].mxu0
      %v1004 = vpop.f32.mrb[0].mxu0
      %v1005 = vadd.f32 %v909, %v1004
      %v1006 = vpop.f32.mrb[0].mxu0
      %1007 = vmatprep.mubr.bf16.mxu0 0
      %1008 = vmatmul.mubr.bf16.gmra.mrb[0].mxu0 %v874
      %v1009 = vpop.f32.mrb[0].mxu0
      %v1010 = vadd.f32 %v909, %v1009
      %v1011 = vpop.f32.mrb[0].mxu0
      %v1012 = vpop.f32.mrb[0].mxu0
      %v1013 = vadd.f32 %v909, %v1012
      %v1014 = vpop.f32.mrb[0].mxu0
      %1015 = vmatprep.mubr.bf16.mxu0 0
      %1016 = vmatmul.mubr.bf16.gmra.mrb[0].mxu0 %v875
      %v1017 = vpop.f32.mrb[0].mxu0
      %v1018 = vadd.f32 %v909, %v1017
      %v1019 = vpop.f32.mrb[0].mxu0
      %v1020 = vpop.f32.mrb[0].mxu0
      %v1021 = vadd.f32 %v909, %v1020
      %v1022 = vpop.f32.mrb[0].mxu0
      %1023 = vmatprep.mubr.bf16.mxu0 0
      %1024 = vmatmul.mubr.bf16.gmra.mrb[0].mxu0 %v876
      %v1025 = vpop.f32.mrb[0].mxu0
      %v1026 = vadd.f32 %v909, %v1025
      %v1027 = vpop.f32.mrb[0].mxu0
      %v1028 = vpop.f32.mrb[0].mxu0
      %v1029 = vadd.f32 %v909, %v1028
      %v1030 = vpop.f32.mrb[0].mxu0
      %1031 = vmatprep.mubr.bf16.mxu0 0
      %1032 = vmatmul.mubr.bf16.gmra.mrb[0].mxu0 %v877
      %v1033 = vpop.f32.mrb[0].mxu0
      %v1034 = vadd.f32 %v909, %v1033
      %v1035 = vpop.f32.mrb[0].mxu0
      %v1036 = vpop.f32.mrb[0].mxu0
      %v1037 = vadd.f32 %v909, %v1036
      %v1038 = vpop.f32.mrb[0].mxu0
      %1039 = vmatprep.mubr.bf16.mxu0 0
      %1040 = vmatmul.mubr.bf16.gmra.mrb[0].mxu0 %v878
      %v1041 = vpop.f32.mrb[0].mxu0
      %v1042 = vadd.f32 %v909, %v1041
      %v1043 = vpop.f32.mrb[0].mxu0
      %v1044 = vpop.f32.mrb[0].mxu0
      %v1045 = vadd.f32 %v909, %v1044
      %v1046 = vpop.f32.mrb[0].mxu0
      %1047 = vmatprep.mubr.bf16.mxu0 0
      %1048 = vmatmul.mubr.bf16.gmra.mrb[0].mxu0 %v879
      %v1049 = vpop.f32.mrb[0].mxu0
      %v1050 = vadd.f32 %v909, %v1049
      %v1051 = vpop.f32.mrb[0].mxu0
      %v1052 = vpop.f32.mrb[0].mxu0
      %v1053 = vadd.f32 %v909, %v1052
      %v1054 = vpop.f32.mrb[0].mxu0
      %1055 = vmatprep.mubr.bf16.mxu0 0
      %1056 = vmatmul.mubr.bf16.gmra.mrb[0].mxu0 %v880
      %v1057 = vpop.f32.mrb[0].mxu0
      %v1058 = vadd.f32 %v909, %v1057
      %v1059 = vpop.f32.mrb[0].mxu0
      %v1060 = vpop.f32.mrb[0].mxu0
      %v1061 = vadd.f32 %v909, %v1060
      %v1062 = vpop.f32.mrb[0].mxu0
      %1063 = vmatprep.mubr.bf16.mxu0 0
      %1064 = vmatmul.mubr.bf16.gmra.mrb[0].mxu0 %v881
      %v1065 = vpop.f32.mrb[0].mxu0
      %v1066 = vadd.f32 %v909, %v1065
      %v1067 = vpop.f32.mrb[0].mxu0
      %v1068 = vpop.f32.mrb[0].mxu0
      %v1069 = vadd.f32 %v909, %v1068
      %v1070 = vpop.f32.mrb[0].mxu0
      %1071 = vmatprep.mubr.bf16.mxu0 0
      %1072 = vmatmul.mubr.bf16.gmra.mrb[0].mxu0 %v882
      %v1073 = vpop.f32.mrb[0].mxu0
      %v1074 = vadd.f32 %v909, %v1073
      %v1075 = vpop.f32.mrb[0].mxu0
      %v1076 = vpop.f32.mrb[0].mxu0
      %v1077 = vadd.f32 %v909, %v1076
      %v1078 = vpop.f32.mrb[0].mxu0
      %1079 = vmatprep.mubr.bf16.mxu0 0
      %1080 = vmatmul.mubr.bf16.gmra.mrb[0].mxu0 %v883
      %v1081 = vpop.f32.mrb[0].mxu0
      %v1082 = vadd.f32 %v909, %v1081
      %v1083 = vpop.f32.mrb[0].mxu0
      %v1084 = vpop.f32.mrb[0].mxu0
      %v1085 = vadd.f32 %v909, %v1084
      %v1086 = vpop.f32.mrb[0].mxu0
      %1087 = vmatprep.mubr.bf16.mxu0 0
      %1088 = vmatmul.mubr.bf16.gmra.mrb[0].mxu0 %v884
      %v1089 = vpop.f32.mrb[0].mxu0
      %v1090 = vadd.f32 %v909, %v1089
      %v1091 = vpop.f32.mrb[0].mxu0
      %v1092 = vpop.f32.mrb[0].mxu0
      %v1093 = vadd.f32 %v909, %v1092
      %v1094 = vpop.f32.mrb[0].mxu0
      %1095 = vmatprep.mubr.bf16.mxu0 0
      %1096 = vmatmul.mubr.bf16.gmra.mrb[0].mxu0 %v885
      %v1097 = vpop.f32.mrb[0].mxu0
      %v1098 = vadd.f32 %v909, %v1097
      %v1099 = vpop.f32.mrb[0].mxu0
      %v1100 = vpop.f32.mrb[0].mxu0
      %v1101 = vadd.f32 %v909, %v1100
      %v1102 = vpop.f32.mrb[0].mxu0
      %1103 = vmatprep.mubr.bf16.mxu0 0
      %1104 = vmatmul.mubr.bf16.gmra.mrb[0].mxu0 %v886
      %v1105 = vpop.f32.mrb[0].mxu0
      %v1106 = vadd.f32 %v909, %v1105
      %v1107 = vpop.f32.mrb[0].mxu0
      %v1108 = vpop.f32.mrb[0].mxu0
      %v1109 = vadd.f32 %v909, %v1108
      %v1110 = vpop.f32.mrb[0].mxu0
      %1111 = vmatprep.mubr.bf16.mxu0 0
      %1112 = vmatmul.mubr.bf16.gmra.mrb[0].mxu0 %v887
      %v1113 = vpop.f32.mrb[0].mxu0
      %v1114 = vadd.f32 %v909, %v1113
      %v1115 = vpop.f32.mrb[0].mxu0
      %v1116 = vpop.f32.mrb[0].mxu0
      %v1117 = vadd.f32 %v909, %v1116
      %v1118 = vpop.f32.mrb[0].mxu0
      %1119 = vdwg.mxu0
      %v1120 = vmax.f32 %v994, 0.0
      %v1121 = vmax.f32 %v997, 0.0
      %v1122 = vmax.f32 %v1002, 0.0
      %v1123 = vmax.f32 %v1005, 0.0
      %v1124 = vmax.f32 %v1010, 0.0
      %v1125 = vmax.f32 %v1013, 0.0
      %v1126 = vmax.f32 %v1018, 0.0
      %v1127 = vmax.f32 %v1021, 0.0
      %v1128 = vmax.f32 %v1026, 0.0
      %v1129 = vmax.f32 %v1029, 0.0
      %v1130 = vmax.f32 %v1034, 0.0
      %v1131 = vmax.f32 %v1037, 0.0
      %v1132 = vmax.f32 %v1042, 0.0
      %v1133 = vmax.f32 %v1045, 0.0
      %v1134 = vmax.f32 %v1050, 0.0
      %v1135 = vmax.f32 %v1053, 0.0
      %v1136 = vmax.f32 %v1058, 0.0
      %v1137 = vmax.f32 %v1061, 0.0
      %v1138 = vmax.f32 %v1066, 0.0
      %v1139 = vmax.f32 %v1069, 0.0
      %v1140 = vmax.f32 %v1074, 0.0
      %v1141 = vmax.f32 %v1077, 0.0
      %v1142 = vmax.f32 %v1082, 0.0
      %v1143 = vmax.f32 %v1085, 0.0
      %v1144 = vmax.f32 %v1090, 0.0
      %v1145 = vmax.f32 %v1093, 0.0
      %v1146 = vmax.f32 %v1098, 0.0
      %v1147 = vmax.f32 %v1101, 0.0
      %v1148 = vmax.f32 %v1106, 0.0
      %v1149 = vmax.f32 %v1109, 0.0
      %v1150 = vmax.f32 %v1114, 0.0
      %v1151 = vmax.f32 %v1117, 0.0
      %v1152 = vpack.c.bf16 %v1121, %v1120
      %v1153 = vpack.c.bf16 %v1123, %v1122
      %v1154 = vpack.c.bf16 %v1125, %v1124
      %v1155 = vpack.c.bf16 %v1127, %v1126
      %v1156 = vpack.c.bf16 %v1129, %v1128
      %v1157 = vpack.c.bf16 %v1131, %v1130
      %v1158 = vpack.c.bf16 %v1133, %v1132
      %v1159 = vpack.c.bf16 %v1135, %v1134
      %v1160 = vpack.c.bf16 %v1137, %v1136
      %v1161 = vpack.c.bf16 %v1139, %v1138
      %v1162 = vpack.c.bf16 %v1141, %v1140
      %v1163 = vpack.c.bf16 %v1143, %v1142
      %v1164 = vpack.c.bf16 %v1145, %v1144
      %v1165 = vpack.c.bf16 %v1147, %v1146
      %v1166 = vpack.c.bf16 %v1149, %v1148
      %v1167 = vpack.c.bf16 %v1151, %v1150
      %v1168 = vld [vmem:[%s6] sm:$0xf]
      %v1169 = vld [vmem:[%s6 + $0x4] sm:$0xf]
      %v1170 = vld [vmem:[%s6 + $0x8] sm:$0xf]
      %v1171 = vld [vmem:[%s6 + $0xc] sm:$0xf]
      %v1172 = vld [vmem:[%s6 + $0x10] sm:$0xf]
      %v1173 = vld [vmem:[%s6 + $0x14] sm:$0xf]
      %v1174 = vld [vmem:[%s6 + $0x18] sm:$0xf]
      %v1175 = vld [vmem:[%s6 + $0x1c] sm:$0xf]
      %v1176 = vld [vmem:[%s7] sm:$0x1]
      %v1178 = vlaneseq
      %v1179 = vshrl.u32 %v1178, 7
      %v1180 = vsub.s32 0, %v1179
      %v1181 = vrot.slane %v1176, %v1180
      %v1191 = vunpack.c.l.b16 %v1168
      %v1192 = vunpack.c.l.b16 %v1169
      %v1193 = vunpack.c.l.b16 %v1170
      %v1194 = vunpack.c.l.b16 %v1171
      %v1195 = vunpack.c.l.b16 %v1172
      %v1196 = vunpack.c.l.b16 %v1173
      %v1197 = vunpack.c.l.b16 %v1174
      %v1198 = vunpack.c.l.b16 %v1175
      %v1199 = vpack.c.b16 %v1192, %v1191
      %v1200 = vpack.c.b16 %v1194, %v1193
      %v1201 = vpack.c.b16 %v1196, %v1195
      %v1202 = vpack.c.b16 %v1198, %v1197
      %vm1207 = vcmask 523264
      %v1209 = vsel %vm1207, %v1152, 0
      %v1212 = vsel %vm1207, %v1153, 0
      %v1215 = vsel %vm1207, %v1154, 0
      %v1218 = vsel %vm1207, %v1155, 0
      %v1221 = vsel %vm1207, %v1156, 0
      %v1224 = vsel %vm1207, %v1157, 0
      %v1227 = vsel %vm1207, %v1158, 0
      %v1230 = vsel %vm1207, %v1159, 0
      %v1233 = vsel %vm1207, %v1160, 0
      %v1236 = vsel %vm1207, %v1161, 0
      %v1239 = vsel %vm1207, %v1162, 0
      %v1242 = vsel %vm1207, %v1163, 0
      %v1245 = vsel %vm1207, %v1164, 0
      %v1248 = vsel %vm1207, %v1165, 0
      %v1251 = vsel %vm1207, %v1166, 0
      %v1254 = vsel %vm1207, %v1167, 0
      %1256 = vmatprep.subr.bf16.mxu0 0
      %1257 = vmatpush1.bf16.msra.mxu0 %v1199
      %1258 = vmatprep.subr.bf16.mxu0 0
      %1259 = vmatpush1.bf16.msra.mxu0 %v1200
      %1260 = vmatprep.subr.bf16.mxu0 0
      %1261 = vmatpush1.bf16.msra.mxu0 %v1201
      %1262 = vmatprep.subr.bf16.mxu0 0
      %1263 = vmatpush1.bf16.msra.mxu0 %v1202
      %1264 = vmatprep.subr.bf16.mxu0 0
      %1265 = vmatpush1.bf16.msra.mxu0 0
      %1266 = vmatprep.subr.bf16.mxu0 0
      %1267 = vmatpush1.bf16.msra.mxu0 0
      %1268 = vmatprep.subr.bf16.mxu0 0
      %1269 = vmatpush1.bf16.msra.mxu0 0
      %1270 = vmatprep.subr.bf16.mxu0 0
      %1271 = vmatpush1.bf16.msra.mxu0 0
      %1272 = vmatprep.subr.bf16.mxu0 0
      %1273 = vmatpush1.bf16.msra.mxu0 0
      %1274 = vmatprep.subr.bf16.mxu0 0
      %1275 = vmatpush1.bf16.msra.mxu0 0
      %1276 = vmatprep.subr.bf16.mxu0 0
      %1277 = vmatpush1.bf16.msra.mxu0 0
      %1278 = vmatprep.subr.bf16.mxu0 0
      %1279 = vmatpush1.bf16.msra.mxu0 0
      %1280 = vmatprep.subr.bf16.mxu0 0
      %1281 = vmatpush1.bf16.msra.mxu0 0
      %1282 = vmatprep.subr.bf16.mxu0 0
      %1283 = vmatpush1.bf16.msra.mxu0 0
      %1284 = vmatprep.subr.bf16.mxu0 0
      %1285 = vmatpush1.bf16.msra.mxu0 0
      %1286 = vmatprep.subr.bf16.mxu0 0
      %1287 = vmatpush1.bf16.msra.mxu0 0
      %1288 = vmatprep.mubr.bf16.mxu0 0
      %1289 = vmatmul.mubr.bf16.gmra.mrb[0].mxu0 %v1209
      %v1290 = vpop.f32.mrb[0].mxu0
      %v1291 = vadd.f32 %v1181, %v1290
      %v1292 = vpop.f32.mrb[0].mxu0
      %v1293 = vpop.f32.mrb[0].mxu0
      %v1294 = vadd.f32 %v1181, %v1293
      %v1295 = vpop.f32.mrb[0].mxu0
      %1296 = vmatprep.mubr.bf16.mxu0 0
      %1297 = vmatmul.mubr.bf16.gmra.mrb[0].mxu0 %v1212
      %v1298 = vpop.f32.mrb[0].mxu0
      %v1299 = vadd.f32 %v1181, %v1298
      %v1300 = vpop.f32.mrb[0].mxu0
      %v1301 = vpop.f32.mrb[0].mxu0
      %v1302 = vadd.f32 %v1181, %v1301
      %v1303 = vpop.f32.mrb[0].mxu0
      %1304 = vmatprep.mubr.bf16.mxu0 0
      %1305 = vmatmul.mubr.bf16.gmra.mrb[0].mxu0 %v1215
      %v1306 = vpop.f32.mrb[0].mxu0
      %v1307 = vadd.f32 %v1181, %v1306
      %v1308 = vpop.f32.mrb[0].mxu0
      %v1309 = vpop.f32.mrb[0].mxu0
      %v1310 = vadd.f32 %v1181, %v1309
      %v1311 = vpop.f32.mrb[0].mxu0
      %1312 = vmatprep.mubr.bf16.mxu0 0
      %1313 = vmatmul.mubr.bf16.gmra.mrb[0].mxu0 %v1218
      %v1314 = vpop.f32.mrb[0].mxu0
      %v1315 = vadd.f32 %v1181, %v1314
      %v1316 = vpop.f32.mrb[0].mxu0
      %v1317 = vpop.f32.mrb[0].mxu0
      %v1318 = vadd.f32 %v1181, %v1317
      %v1319 = vpop.f32.mrb[0].mxu0
      %1320 = vmatprep.mubr.bf16.mxu0 0
      %1321 = vmatmul.mubr.bf16.gmra.mrb[0].mxu0 %v1221
      %v1322 = vpop.f32.mrb[0].mxu0
      %v1323 = vadd.f32 %v1181, %v1322
      %v1324 = vpop.f32.mrb[0].mxu0
      %v1325 = vpop.f32.mrb[0].mxu0
      %v1326 = vadd.f32 %v1181, %v1325
      %v1327 = vpop.f32.mrb[0].mxu0
      %1328 = vmatprep.mubr.bf16.mxu0 0
      %1329 = vmatmul.mubr.bf16.gmra.mrb[0].mxu0 %v1224
      %v1330 = vpop.f32.mrb[0].mxu0
      %v1331 = vadd.f32 %v1181, %v1330
      %v1332 = vpop.f32.mrb[0].mxu0
      %v1333 = vpop.f32.mrb[0].mxu0
      %v1334 = vadd.f32 %v1181, %v1333
      %v1335 = vpop.f32.mrb[0].mxu0
      %1336 = vmatprep.mubr.bf16.mxu0 0
      %1337 = vmatmul.mubr.bf16.gmra.mrb[0].mxu0 %v1227
      %v1338 = vpop.f32.mrb[0].mxu0
      %v1339 = vadd.f32 %v1181, %v1338
      %v1340 = vpop.f32.mrb[0].mxu0
      %v1341 = vpop.f32.mrb[0].mxu0
      %v1342 = vadd.f32 %v1181, %v1341
      %v1343 = vpop.f32.mrb[0].mxu0
      %1344 = vmatprep.mubr.bf16.mxu0 0
      %1345 = vmatmul.mubr.bf16.gmra.mrb[0].mxu0 %v1230
      %v1346 = vpop.f32.mrb[0].mxu0
      %v1347 = vadd.f32 %v1181, %v1346
      %v1348 = vpop.f32.mrb[0].mxu0
      %v1349 = vpop.f32.mrb[0].mxu0
      %v1350 = vadd.f32 %v1181, %v1349
      %v1351 = vpop.f32.mrb[0].mxu0
      %1352 = vmatprep.mubr.bf16.mxu0 0
      %1353 = vmatmul.mubr.bf16.gmra.mrb[0].mxu0 %v1233
      %v1354 = vpop.f32.mrb[0].mxu0
      %v1355 = vadd.f32 %v1181, %v1354
      %v1356 = vpop.f32.mrb[0].mxu0
      %v1357 = vpop.f32.mrb[0].mxu0
      %v1358 = vadd.f32 %v1181, %v1357
      %v1359 = vpop.f32.mrb[0].mxu0
      %1360 = vmatprep.mubr.bf16.mxu0 0
      %1361 = vmatmul.mubr.bf16.gmra.mrb[0].mxu0 %v1236
      %v1362 = vpop.f32.mrb[0].mxu0
      %v1363 = vadd.f32 %v1181, %v1362
      %v1364 = vpop.f32.mrb[0].mxu0
      %v1365 = vpop.f32.mrb[0].mxu0
      %v1366 = vadd.f32 %v1181, %v1365
      %v1367 = vpop.f32.mrb[0].mxu0
      %1368 = vmatprep.mubr.bf16.mxu0 0
      %1369 = vmatmul.mubr.bf16.gmra.mrb[0].mxu0 %v1239
      %v1370 = vpop.f32.mrb[0].mxu0
      %v1371 = vadd.f32 %v1181, %v1370
      %v1372 = vpop.f32.mrb[0].mxu0
      %v1373 = vpop.f32.mrb[0].mxu0
      %v1374 = vadd.f32 %v1181, %v1373
      %v1375 = vpop.f32.mrb[0].mxu0
      %1376 = vmatprep.mubr.bf16.mxu0 0
      %1377 = vmatmul.mubr.bf16.gmra.mrb[0].mxu0 %v1242
      %v1378 = vpop.f32.mrb[0].mxu0
      %v1379 = vadd.f32 %v1181, %v1378
      %v1380 = vpop.f32.mrb[0].mxu0
      %v1381 = vpop.f32.mrb[0].mxu0
      %v1382 = vadd.f32 %v1181, %v1381
      %v1383 = vpop.f32.mrb[0].mxu0
      %1384 = vmatprep.mubr.bf16.mxu0 0
      %1385 = vmatmul.mubr.bf16.gmra.mrb[0].mxu0 %v1245
      %v1386 = vpop.f32.mrb[0].mxu0
      %v1387 = vadd.f32 %v1181, %v1386
      %v1388 = vpop.f32.mrb[0].mxu0
      %v1389 = vpop.f32.mrb[0].mxu0
      %v1390 = vadd.f32 %v1181, %v1389
      %v1391 = vpop.f32.mrb[0].mxu0
      %1392 = vmatprep.mubr.bf16.mxu0 0
      %1393 = vmatmul.mubr.bf16.gmra.mrb[0].mxu0 %v1248
      %v1394 = vpop.f32.mrb[0].mxu0
      %v1395 = vadd.f32 %v1181, %v1394
      %v1396 = vpop.f32.mrb[0].mxu0
      %v1397 = vpop.f32.mrb[0].mxu0
      %v1398 = vadd.f32 %v1181, %v1397
      %v1399 = vpop.f32.mrb[0].mxu0
      %1400 = vmatprep.mubr.bf16.mxu0 0
      %1401 = vmatmul.mubr.bf16.gmra.mrb[0].mxu0 %v1251
      %v1402 = vpop.f32.mrb[0].mxu0
      %v1403 = vadd.f32 %v1181, %v1402
      %v1404 = vpop.f32.mrb[0].mxu0
      %v1405 = vpop.f32.mrb[0].mxu0
      %v1406 = vadd.f32 %v1181, %v1405
      %v1407 = vpop.f32.mrb[0].mxu0
      %1408 = vmatprep.mubr.bf16.mxu0 0
      %1409 = vmatmul.mubr.bf16.gmra.mrb[0].mxu0 %v1254
      %v1410 = vpop.f32.mrb[0].mxu0
      %v1411 = vadd.f32 %v1181, %v1410
      %v1412 = vpop.f32.mrb[0].mxu0
      %v1413 = vpop.f32.mrb[0].mxu0
      %v1414 = vadd.f32 %v1181, %v1413
      %v1415 = vpop.f32.mrb[0].mxu0
      %1416 = vdwg.mxu0
      %v1417 = vmax.f32 %v1291, 0.0
      %v1418 = vmax.f32 %v1294, 0.0
      %v1419 = vmax.f32 %v1299, 0.0
      %v1420 = vmax.f32 %v1302, 0.0
      %v1421 = vmax.f32 %v1307, 0.0
      %v1422 = vmax.f32 %v1310, 0.0
      %v1423 = vmax.f32 %v1315, 0.0
      %v1424 = vmax.f32 %v1318, 0.0
      %v1425 = vmax.f32 %v1323, 0.0
      %v1426 = vmax.f32 %v1326, 0.0
      %v1427 = vmax.f32 %v1331, 0.0
      %v1428 = vmax.f32 %v1334, 0.0
      %v1429 = vmax.f32 %v1339, 0.0
      %v1430 = vmax.f32 %v1342, 0.0
      %v1431 = vmax.f32 %v1347, 0.0
      %v1432 = vmax.f32 %v1350, 0.0
      %v1433 = vmax.f32 %v1355, 0.0
      %v1434 = vmax.f32 %v1358, 0.0
      %v1435 = vmax.f32 %v1363, 0.0
      %v1436 = vmax.f32 %v1366, 0.0
      %v1437 = vmax.f32 %v1371, 0.0
      %v1438 = vmax.f32 %v1374, 0.0
      %v1439 = vmax.f32 %v1379, 0.0
      %v1440 = vmax.f32 %v1382, 0.0
      %v1441 = vmax.f32 %v1387, 0.0
      %v1442 = vmax.f32 %v1390, 0.0
      %v1443 = vmax.f32 %v1395, 0.0
      %v1444 = vmax.f32 %v1398, 0.0
      %v1445 = vmax.f32 %v1403, 0.0
      %v1446 = vmax.f32 %v1406, 0.0
      %v1447 = vmax.f32 %v1411, 0.0
      %v1448 = vmax.f32 %v1414, 0.0
      %v1449 = vpack.c.bf16 %v1418, %v1417
      %v1450 = vpack.c.bf16 %v1420, %v1419
      %v1451 = vpack.c.bf16 %v1422, %v1421
      %v1452 = vpack.c.bf16 %v1424, %v1423
      %v1453 = vpack.c.bf16 %v1426, %v1425
      %v1454 = vpack.c.bf16 %v1428, %v1427
      %v1455 = vpack.c.bf16 %v1430, %v1429
      %v1456 = vpack.c.bf16 %v1432, %v1431
      %v1457 = vpack.c.bf16 %v1434, %v1433
      %v1458 = vpack.c.bf16 %v1436, %v1435
      %v1459 = vpack.c.bf16 %v1438, %v1437
      %v1460 = vpack.c.bf16 %v1440, %v1439
      %v1461 = vpack.c.bf16 %v1442, %v1441
      %v1462 = vpack.c.bf16 %v1444, %v1443
      %v1463 = vpack.c.bf16 %v1446, %v1445
      %v1464 = vpack.c.bf16 %v1448, %v1447
      %v1465 = vld [vmem:[%s8] sm:$0xf]
      %v1466 = vld [vmem:[%s8 + $0x4] sm:$0xf]
      %v1467 = vld [vmem:[%s8 + $0x8] sm:$0xf]
      %v1468 = vld [vmem:[%s8 + $0xc] sm:$0xf]
      %v1469 = vld [vmem:[%s9] sm:$0x1]
      %v1471 = vlaneseq
      %v1472 = vshrl.u32 %v1471, 7
      %v1473 = vsub.s32 0, %v1472
      %v1474 = vrot.slane %v1469, %v1473
      %v1480 = vunpack.c.l.b16 %v1465
      %v1481 = vunpack.c.l.b16 %v1466
      %v1482 = vunpack.c.l.b16 %v1467
      %v1483 = vunpack.c.l.b16 %v1468
      %v1484 = vpack.c.b16 %v1481, %v1480
      %v1485 = vpack.c.b16 %v1483, %v1482
      %vm1488 = vcmask 261120
      %v1490 = vsel %vm1488, %v1449, 0
      %v1493 = vsel %vm1488, %v1450, 0
      %v1496 = vsel %vm1488, %v1451, 0
      %v1499 = vsel %vm1488, %v1452, 0
      %v1502 = vsel %vm1488, %v1453, 0
      %v1505 = vsel %vm1488, %v1454, 0
      %v1508 = vsel %vm1488, %v1455, 0
      %v1511 = vsel %vm1488, %v1456, 0
      %v1514 = vsel %vm1488, %v1457, 0
      %v1517 = vsel %vm1488, %v1458, 0
      %v1520 = vsel %vm1488, %v1459, 0
      %v1523 = vsel %vm1488, %v1460, 0
      %v1526 = vsel %vm1488, %v1461, 0
      %v1529 = vsel %vm1488, %v1462, 0
      %v1532 = vsel %vm1488, %v1463, 0
      %v1535 = vsel %vm1488, %v1464, 0
      %1537 = vmatprep.subr.bf16.mxu0 0
      %1538 = vmatpush1.bf16.msra.mxu0 %v1484
      %1539 = vmatprep.subr.bf16.mxu0 0
      %1540 = vmatpush1.bf16.msra.mxu0 %v1485
      %1541 = vmatprep.subr.bf16.mxu0 0
      %1542 = vmatpush1.bf16.msra.mxu0 0
      %1543 = vmatprep.subr.bf16.mxu0 0
      %1544 = vmatpush1.bf16.msra.mxu0 0
      %1545 = vmatprep.subr.bf16.mxu0 0
      %1546 = vmatpush1.bf16.msra.mxu0 0
      %1547 = vmatprep.subr.bf16.mxu0 0
      %1548 = vmatpush1.bf16.msra.mxu0 0
      %1549 = vmatprep.subr.bf16.mxu0 0
      %1550 = vmatpush1.bf16.msra.mxu0 0
      %1551 = vmatprep.subr.bf16.mxu0 0
      %1552 = vmatpush1.bf16.msra.mxu0 0
      %1553 = vmatprep.subr.bf16.mxu0 0
      %1554 = vmatpush1.bf16.msra.mxu0 0
      %1555 = vmatprep.subr.bf16.mxu0 0
      %1556 = vmatpush1.bf16.msra.mxu0 0
      %1557 = vmatprep.subr.bf16.mxu0 0
      %1558 = vmatpush1.bf16.msra.mxu0 0
      %1559 = vmatprep.subr.bf16.mxu0 0
      %1560 = vmatpush1.bf16.msra.mxu0 0
      %1561 = vmatprep.subr.bf16.mxu0 0
      %1562 = vmatpush1.bf16.msra.mxu0 0
      %1563 = vmatprep.subr.bf16.mxu0 0
      %1564 = vmatpush1.bf16.msra.mxu0 0
      %1565 = vmatprep.subr.bf16.mxu0 0
      %1566 = vmatpush1.bf16.msra.mxu0 0
      %1567 = vmatprep.subr.bf16.mxu0 0
      %1568 = vmatpush1.bf16.msra.mxu0 0
      %1569 = vmatprep.mubr.bf16.mxu0 0
      %1570 = vmatmul.mubr.bf16.gmra.mrb[0].mxu0 %v1490
      %v1571 = vpop.f32.mrb[0].mxu0
      %v1572 = vadd.f32 %v1474, %v1571
      %v1573 = vpop.f32.mrb[0].mxu0
      %v1574 = vpop.f32.mrb[0].mxu0
      %v1575 = vadd.f32 %v1474, %v1574
      %v1576 = vpop.f32.mrb[0].mxu0
      %1577 = vmatprep.mubr.bf16.mxu0 0
      %1578 = vmatmul.mubr.bf16.gmra.mrb[0].mxu0 %v1493
      %v1579 = vpop.f32.mrb[0].mxu0
      %v1580 = vadd.f32 %v1474, %v1579
      %v1581 = vpop.f32.mrb[0].mxu0
      %v1582 = vpop.f32.mrb[0].mxu0
      %v1583 = vadd.f32 %v1474, %v1582
      %v1584 = vpop.f32.mrb[0].mxu0
      %1585 = vmatprep.mubr.bf16.mxu0 0
      %1586 = vmatmul.mubr.bf16.gmra.mrb[0].mxu0 %v1496
      %v1587 = vpop.f32.mrb[0].mxu0
      %v1588 = vadd.f32 %v1474, %v1587
      %v1589 = vpop.f32.mrb[0].mxu0
      %v1590 = vpop.f32.mrb[0].mxu0
      %v1591 = vadd.f32 %v1474, %v1590
      %v1592 = vpop.f32.mrb[0].mxu0
      %1593 = vmatprep.mubr.bf16.mxu0 0
      %1594 = vmatmul.mubr.bf16.gmra.mrb[0].mxu0 %v1499
      %v1595 = vpop.f32.mrb[0].mxu0
      %v1596 = vadd.f32 %v1474, %v1595
      %v1597 = vpop.f32.mrb[0].mxu0
      %v1598 = vpop.f32.mrb[0].mxu0
      %v1599 = vadd.f32 %v1474, %v1598
      %v1600 = vpop.f32.mrb[0].mxu0
      %1601 = vmatprep.mubr.bf16.mxu0 0
      %1602 = vmatmul.mubr.bf16.gmra.mrb[0].mxu0 %v1502
      %v1603 = vpop.f32.mrb[0].mxu0
      %v1604 = vadd.f32 %v1474, %v1603
      %v1605 = vpop.f32.mrb[0].mxu0
      %v1606 = vpop.f32.mrb[0].mxu0
      %v1607 = vadd.f32 %v1474, %v1606
      %v1608 = vpop.f32.mrb[0].mxu0
      %1609 = vmatprep.mubr.bf16.mxu0 0
      %1610 = vmatmul.mubr.bf16.gmra.mrb[0].mxu0 %v1505
      %v1611 = vpop.f32.mrb[0].mxu0
      %v1612 = vadd.f32 %v1474, %v1611
      %v1613 = vpop.f32.mrb[0].mxu0
      %v1614 = vpop.f32.mrb[0].mxu0
      %v1615 = vadd.f32 %v1474, %v1614
      %v1616 = vpop.f32.mrb[0].mxu0
      %1617 = vmatprep.mubr.bf16.mxu0 0
      %1618 = vmatmul.mubr.bf16.gmra.mrb[0].mxu0 %v1508
      %v1619 = vpop.f32.mrb[0].mxu0
      %v1620 = vadd.f32 %v1474, %v1619
      %v1621 = vpop.f32.mrb[0].mxu0
      %v1622 = vpop.f32.mrb[0].mxu0
      %v1623 = vadd.f32 %v1474, %v1622
      %v1624 = vpop.f32.mrb[0].mxu0
      %1625 = vmatprep.mubr.bf16.mxu0 0
      %1626 = vmatmul.mubr.bf16.gmra.mrb[0].mxu0 %v1511
      %v1627 = vpop.f32.mrb[0].mxu0
      %v1628 = vadd.f32 %v1474, %v1627
      %v1629 = vpop.f32.mrb[0].mxu0
      %v1630 = vpop.f32.mrb[0].mxu0
      %v1631 = vadd.f32 %v1474, %v1630
      %v1632 = vpop.f32.mrb[0].mxu0
      %1633 = vmatprep.mubr.bf16.mxu0 0
      %1634 = vmatmul.mubr.bf16.gmra.mrb[0].mxu0 %v1514
      %v1635 = vpop.f32.mrb[0].mxu0
      %v1636 = vadd.f32 %v1474, %v1635
      %v1637 = vpop.f32.mrb[0].mxu0
      %v1638 = vpop.f32.mrb[0].mxu0
      %v1639 = vadd.f32 %v1474, %v1638
      %v1640 = vpop.f32.mrb[0].mxu0
      %1641 = vmatprep.mubr.bf16.mxu0 0
      %1642 = vmatmul.mubr.bf16.gmra.mrb[0].mxu0 %v1517
      %v1643 = vpop.f32.mrb[0].mxu0
      %v1644 = vadd.f32 %v1474, %v1643
      %v1645 = vpop.f32.mrb[0].mxu0
      %v1646 = vpop.f32.mrb[0].mxu0
      %v1647 = vadd.f32 %v1474, %v1646
      %v1648 = vpop.f32.mrb[0].mxu0
      %1649 = vmatprep.mubr.bf16.mxu0 0
      %1650 = vmatmul.mubr.bf16.gmra.mrb[0].mxu0 %v1520
      %v1651 = vpop.f32.mrb[0].mxu0
      %v1652 = vadd.f32 %v1474, %v1651
      %v1653 = vpop.f32.mrb[0].mxu0
      %v1654 = vpop.f32.mrb[0].mxu0
      %v1655 = vadd.f32 %v1474, %v1654
      %v1656 = vpop.f32.mrb[0].mxu0
      %1657 = vmatprep.mubr.bf16.mxu0 0
      %1658 = vmatmul.mubr.bf16.gmra.mrb[0].mxu0 %v1523
      %v1659 = vpop.f32.mrb[0].mxu0
      %v1660 = vadd.f32 %v1474, %v1659
      %v1661 = vpop.f32.mrb[0].mxu0
      %v1662 = vpop.f32.mrb[0].mxu0
      %v1663 = vadd.f32 %v1474, %v1662
      %v1664 = vpop.f32.mrb[0].mxu0
      %1665 = vmatprep.mubr.bf16.mxu0 0
      %1666 = vmatmul.mubr.bf16.gmra.mrb[0].mxu0 %v1526
      %v1667 = vpop.f32.mrb[0].mxu0
      %v1668 = vadd.f32 %v1474, %v1667
      %v1669 = vpop.f32.mrb[0].mxu0
      %v1670 = vpop.f32.mrb[0].mxu0
      %v1671 = vadd.f32 %v1474, %v1670
      %v1672 = vpop.f32.mrb[0].mxu0
      %1673 = vmatprep.mubr.bf16.mxu0 0
      %1674 = vmatmul.mubr.bf16.gmra.mrb[0].mxu0 %v1529
      %v1675 = vpop.f32.mrb[0].mxu0
      %v1676 = vadd.f32 %v1474, %v1675
      %v1677 = vpop.f32.mrb[0].mxu0
      %v1678 = vpop.f32.mrb[0].mxu0
      %v1679 = vadd.f32 %v1474, %v1678
      %v1680 = vpop.f32.mrb[0].mxu0
      %1681 = vmatprep.mubr.bf16.mxu0 0
      %1682 = vmatmul.mubr.bf16.gmra.mrb[0].mxu0 %v1532
      %v1683 = vpop.f32.mrb[0].mxu0
      %v1684 = vadd.f32 %v1474, %v1683
      %v1685 = vpop.f32.mrb[0].mxu0
      %v1686 = vpop.f32.mrb[0].mxu0
      %v1687 = vadd.f32 %v1474, %v1686
      %v1688 = vpop.f32.mrb[0].mxu0
      %1689 = vmatprep.mubr.bf16.mxu0 0
      %1690 = vmatmul.mubr.bf16.gmra.mrb[0].mxu0 %v1535
      %v1691 = vpop.f32.mrb[0].mxu0
      %v1692 = vadd.f32 %v1474, %v1691
      %v1693 = vpop.f32.mrb[0].mxu0
      %v1694 = vpop.f32.mrb[0].mxu0
      %v1695 = vadd.f32 %v1474, %v1694
      %v1696 = vpop.f32.mrb[0].mxu0
      %1697 = vdwg.mxu0
      %v1698 = vmax.f32 %v1572, 0.0
      %v1699 = vmax.f32 %v1575, 0.0
      %v1700 = vmax.f32 %v1580, 0.0
      %v1701 = vmax.f32 %v1583, 0.0
      %v1702 = vmax.f32 %v1588, 0.0
      %v1703 = vmax.f32 %v1591, 0.0
      %v1704 = vmax.f32 %v1596, 0.0
      %v1705 = vmax.f32 %v1599, 0.0
      %v1706 = vmax.f32 %v1604, 0.0
      %v1707 = vmax.f32 %v1607, 0.0
      %v1708 = vmax.f32 %v1612, 0.0
      %v1709 = vmax.f32 %v1615, 0.0
      %v1710 = vmax.f32 %v1620, 0.0
      %v1711 = vmax.f32 %v1623, 0.0
      %v1712 = vmax.f32 %v1628, 0.0
      %v1713 = vmax.f32 %v1631, 0.0
      %v1714 = vmax.f32 %v1636, 0.0
      %v1715 = vmax.f32 %v1639, 0.0
      %v1716 = vmax.f32 %v1644, 0.0
      %v1717 = vmax.f32 %v1647, 0.0
      %v1718 = vmax.f32 %v1652, 0.0
      %v1719 = vmax.f32 %v1655, 0.0
      %v1720 = vmax.f32 %v1660, 0.0
      %v1721 = vmax.f32 %v1663, 0.0
      %v1722 = vmax.f32 %v1668, 0.0
      %v1723 = vmax.f32 %v1671, 0.0
      %v1724 = vmax.f32 %v1676, 0.0
      %v1725 = vmax.f32 %v1679, 0.0
      %v1726 = vmax.f32 %v1684, 0.0
      %v1727 = vmax.f32 %v1687, 0.0
      %v1728 = vmax.f32 %v1692, 0.0
      %v1729 = vmax.f32 %v1695, 0.0
      %v1730 = vpack.c.bf16 %v1699, %v1698
      %v1731 = vpack.c.bf16 %v1701, %v1700
      %v1732 = vpack.c.bf16 %v1703, %v1702
      %v1733 = vpack.c.bf16 %v1705, %v1704
      %v1734 = vpack.c.bf16 %v1707, %v1706
      %v1735 = vpack.c.bf16 %v1709, %v1708
      %v1736 = vpack.c.bf16 %v1711, %v1710
      %v1737 = vpack.c.bf16 %v1713, %v1712
      %v1738 = vpack.c.bf16 %v1715, %v1714
      %v1739 = vpack.c.bf16 %v1717, %v1716
      %v1740 = vpack.c.bf16 %v1719, %v1718
      %v1741 = vpack.c.bf16 %v1721, %v1720
      %v1742 = vpack.c.bf16 %v1723, %v1722
      %v1743 = vpack.c.bf16 %v1725, %v1724
      %v1744 = vpack.c.bf16 %v1727, %v1726
      %v1745 = vpack.c.bf16 %v1729, %v1728
      %v1746 = vld [vmem:[%s10] sm:$0xf]
      %v1747 = vld [vmem:[%s10 + $0x4] sm:$0xf]
      %v1748 = vld [vmem:[%s10 + $0x8] sm:$0xf]
      %v1749 = vld [vmem:[%s10 + $0xc] sm:$0xf]
      %v1750 = vld [vmem:[%s10 + $0x10] sm:$0xf]
      %v1751 = vld [vmem:[%s10 + $0x14] sm:$0xf]
      %v1752 = vld [vmem:[%s10 + $0x18] sm:$0xf]
      %v1753 = vld [vmem:[%s10 + $0x1c] sm:$0xf]
      %v1754 = vld [vmem:[%s11] sm:$0x1]
      %v1756 = vlaneseq
      %v1757 = vshrl.u32 %v1756, 7
      %v1758 = vsub.s32 0, %v1757
      %v1759 = vrot.slane %v1754, %v1758
      %v1769 = vunpack.c.l.b16 %v1746
      %v1770 = vunpack.c.l.b16 %v1747
      %v1771 = vunpack.c.l.b16 %v1748
      %v1772 = vunpack.c.l.b16 %v1749
      %v1773 = vunpack.c.l.b16 %v1750
      %v1774 = vunpack.c.l.b16 %v1751
      %v1775 = vunpack.c.l.b16 %v1752
      %v1776 = vunpack.c.l.b16 %v1753
      %v1777 = vpack.c.b16 %v1770, %v1769
      %v1778 = vpack.c.b16 %v1772, %v1771
      %v1779 = vpack.c.b16 %v1774, %v1773
      %v1780 = vpack.c.b16 %v1776, %v1775
      %v1786 = vsel %vm1207, %v1730, 0
      %v1789 = vsel %vm1207, %v1731, 0
      %v1792 = vsel %vm1207, %v1732, 0
      %v1795 = vsel %vm1207, %v1733, 0
      %v1798 = vsel %vm1207, %v1734, 0
      %v1801 = vsel %vm1207, %v1735, 0
      %v1804 = vsel %vm1207, %v1736, 0
      %v1807 = vsel %vm1207, %v1737, 0
      %v1810 = vsel %vm1207, %v1738, 0
      %v1813 = vsel %vm1207, %v1739, 0
      %v1816 = vsel %vm1207, %v1740, 0
      %v1819 = vsel %vm1207, %v1741, 0
      %v1822 = vsel %vm1207, %v1742, 0
      %v1825 = vsel %vm1207, %v1743, 0
      %v1828 = vsel %vm1207, %v1744, 0
      %v1831 = vsel %vm1207, %v1745, 0
      %1833 = vmatprep.subr.bf16.mxu0 0
      %1834 = vmatpush1.bf16.msra.mxu0 %v1777
      %1835 = vmatprep.subr.bf16.mxu0 0
      %1836 = vmatpush1.bf16.msra.mxu0 %v1778
      %1837 = vmatprep.subr.bf16.mxu0 0
      %1838 = vmatpush1.bf16.msra.mxu0 %v1779
      %1839 = vmatprep.subr.bf16.mxu0 0
      %1840 = vmatpush1.bf16.msra.mxu0 %v1780
      %1841 = vmatprep.subr.bf16.mxu0 0
      %1842 = vmatpush1.bf16.msra.mxu0 0
      %1843 = vmatprep.subr.bf16.mxu0 0
      %1844 = vmatpush1.bf16.msra.mxu0 0
      %1845 = vmatprep.subr.bf16.mxu0 0
      %1846 = vmatpush1.bf16.msra.mxu0 0
      %1847 = vmatprep.subr.bf16.mxu0 0
      %1848 = vmatpush1.bf16.msra.mxu0 0
      %1849 = vmatprep.subr.bf16.mxu0 0
      %1850 = vmatpush1.bf16.msra.mxu0 0
      %1851 = vmatprep.subr.bf16.mxu0 0
      %1852 = vmatpush1.bf16.msra.mxu0 0
      %1853 = vmatprep.subr.bf16.mxu0 0
      %1854 = vmatpush1.bf16.msra.mxu0 0
      %1855 = vmatprep.subr.bf16.mxu0 0
      %1856 = vmatpush1.bf16.msra.mxu0 0
      %1857 = vmatprep.subr.bf16.mxu0 0
      %1858 = vmatpush1.bf16.msra.mxu0 0
      %1859 = vmatprep.subr.bf16.mxu0 0
      %1860 = vmatpush1.bf16.msra.mxu0 0
      %1861 = vmatprep.subr.bf16.mxu0 0
      %1862 = vmatpush1.bf16.msra.mxu0 0
      %1863 = vmatprep.subr.bf16.mxu0 0
      %1864 = vmatpush1.bf16.msra.mxu0 0
      %1865 = vmatprep.mubr.bf16.mxu0 0
      %1866 = vmatmul.mubr.bf16.gmra.mrb[0].mxu0 %v1786
      %v1867 = vpop.f32.mrb[0].mxu0
      %v1868 = vadd.f32 %v1759, %v1867
      %v1869 = vpop.f32.mrb[0].mxu0
      %v1870 = vpop.f32.mrb[0].mxu0
      %v1871 = vadd.f32 %v1759, %v1870
      %v1872 = vpop.f32.mrb[0].mxu0
      %1873 = vmatprep.mubr.bf16.mxu0 0
      %1874 = vmatmul.mubr.bf16.gmra.mrb[0].mxu0 %v1789
      %v1875 = vpop.f32.mrb[0].mxu0
      %v1876 = vadd.f32 %v1759, %v1875
      %v1877 = vpop.f32.mrb[0].mxu0
      %v1878 = vpop.f32.mrb[0].mxu0
      %v1879 = vadd.f32 %v1759, %v1878
      %v1880 = vpop.f32.mrb[0].mxu0
      %1881 = vmatprep.mubr.bf16.mxu0 0
      %1882 = vmatmul.mubr.bf16.gmra.mrb[0].mxu0 %v1792
      %v1883 = vpop.f32.mrb[0].mxu0
      %v1884 = vadd.f32 %v1759, %v1883
      %v1885 = vpop.f32.mrb[0].mxu0
      %v1886 = vpop.f32.mrb[0].mxu0
      %v1887 = vadd.f32 %v1759, %v1886
      %v1888 = vpop.f32.mrb[0].mxu0
      %1889 = vmatprep.mubr.bf16.mxu0 0
      %1890 = vmatmul.mubr.bf16.gmra.mrb[0].mxu0 %v1795
      %v1891 = vpop.f32.mrb[0].mxu0
      %v1892 = vadd.f32 %v1759, %v1891
      %v1893 = vpop.f32.mrb[0].mxu0
      %v1894 = vpop.f32.mrb[0].mxu0
      %v1895 = vadd.f32 %v1759, %v1894
      %v1896 = vpop.f32.mrb[0].mxu0
      %1897 = vmatprep.mubr.bf16.mxu0 0
      %1898 = vmatmul.mubr.bf16.gmra.mrb[0].mxu0 %v1798
      %v1899 = vpop.f32.mrb[0].mxu0
      %v1900 = vadd.f32 %v1759, %v1899
      %v1901 = vpop.f32.mrb[0].mxu0
      %v1902 = vpop.f32.mrb[0].mxu0
      %v1903 = vadd.f32 %v1759, %v1902
      %v1904 = vpop.f32.mrb[0].mxu0
      %1905 = vmatprep.mubr.bf16.mxu0 0
      %1906 = vmatmul.mubr.bf16.gmra.mrb[0].mxu0 %v1801
      %v1907 = vpop.f32.mrb[0].mxu0
      %v1908 = vadd.f32 %v1759, %v1907
      %v1909 = vpop.f32.mrb[0].mxu0
      %v1910 = vpop.f32.mrb[0].mxu0
      %v1911 = vadd.f32 %v1759, %v1910
      %v1912 = vpop.f32.mrb[0].mxu0
      %1913 = vmatprep.mubr.bf16.mxu0 0
      %1914 = vmatmul.mubr.bf16.gmra.mrb[0].mxu0 %v1804
      %v1915 = vpop.f32.mrb[0].mxu0
      %v1916 = vadd.f32 %v1759, %v1915
      %v1917 = vpop.f32.mrb[0].mxu0
      %v1918 = vpop.f32.mrb[0].mxu0
      %v1919 = vadd.f32 %v1759, %v1918
      %v1920 = vpop.f32.mrb[0].mxu0
      %1921 = vmatprep.mubr.bf16.mxu0 0
      %1922 = vmatmul.mubr.bf16.gmra.mrb[0].mxu0 %v1807
      %v1923 = vpop.f32.mrb[0].mxu0
      %v1924 = vadd.f32 %v1759, %v1923
      %v1925 = vpop.f32.mrb[0].mxu0
      %v1926 = vpop.f32.mrb[0].mxu0
      %v1927 = vadd.f32 %v1759, %v1926
      %v1928 = vpop.f32.mrb[0].mxu0
      %1929 = vmatprep.mubr.bf16.mxu0 0
      %1930 = vmatmul.mubr.bf16.gmra.mrb[0].mxu0 %v1810
      %v1931 = vpop.f32.mrb[0].mxu0
      %v1932 = vadd.f32 %v1759, %v1931
      %v1933 = vpop.f32.mrb[0].mxu0
      %v1934 = vpop.f32.mrb[0].mxu0
      %v1935 = vadd.f32 %v1759, %v1934
      %v1936 = vpop.f32.mrb[0].mxu0
      %1937 = vmatprep.mubr.bf16.mxu0 0
      %1938 = vmatmul.mubr.bf16.gmra.mrb[0].mxu0 %v1813
      %v1939 = vpop.f32.mrb[0].mxu0
      %v1940 = vadd.f32 %v1759, %v1939
      %v1941 = vpop.f32.mrb[0].mxu0
      %v1942 = vpop.f32.mrb[0].mxu0
      %v1943 = vadd.f32 %v1759, %v1942
      %v1944 = vpop.f32.mrb[0].mxu0
      %1945 = vmatprep.mubr.bf16.mxu0 0
      %1946 = vmatmul.mubr.bf16.gmra.mrb[0].mxu0 %v1816
      %v1947 = vpop.f32.mrb[0].mxu0
      %v1948 = vadd.f32 %v1759, %v1947
      %v1949 = vpop.f32.mrb[0].mxu0
      %v1950 = vpop.f32.mrb[0].mxu0
      %v1951 = vadd.f32 %v1759, %v1950
      %v1952 = vpop.f32.mrb[0].mxu0
      %1953 = vmatprep.mubr.bf16.mxu0 0
      %1954 = vmatmul.mubr.bf16.gmra.mrb[0].mxu0 %v1819
      %v1955 = vpop.f32.mrb[0].mxu0
      %v1956 = vadd.f32 %v1759, %v1955
      %v1957 = vpop.f32.mrb[0].mxu0
      %v1958 = vpop.f32.mrb[0].mxu0
      %v1959 = vadd.f32 %v1759, %v1958
      %v1960 = vpop.f32.mrb[0].mxu0
      %1961 = vmatprep.mubr.bf16.mxu0 0
      %1962 = vmatmul.mubr.bf16.gmra.mrb[0].mxu0 %v1822
      %v1963 = vpop.f32.mrb[0].mxu0
      %v1964 = vadd.f32 %v1759, %v1963
      %v1965 = vpop.f32.mrb[0].mxu0
      %v1966 = vpop.f32.mrb[0].mxu0
      %v1967 = vadd.f32 %v1759, %v1966
      %v1968 = vpop.f32.mrb[0].mxu0
      %1969 = vmatprep.mubr.bf16.mxu0 0
      %1970 = vmatmul.mubr.bf16.gmra.mrb[0].mxu0 %v1825
      %v1971 = vpop.f32.mrb[0].mxu0
      %v1972 = vadd.f32 %v1759, %v1971
      %v1973 = vpop.f32.mrb[0].mxu0
      %v1974 = vpop.f32.mrb[0].mxu0
      %v1975 = vadd.f32 %v1759, %v1974
      %v1976 = vpop.f32.mrb[0].mxu0
      %1977 = vmatprep.mubr.bf16.mxu0 0
      %1978 = vmatmul.mubr.bf16.gmra.mrb[0].mxu0 %v1828
      %v1979 = vpop.f32.mrb[0].mxu0
      %v1980 = vadd.f32 %v1759, %v1979
      %v1981 = vpop.f32.mrb[0].mxu0
      %v1982 = vpop.f32.mrb[0].mxu0
      %v1983 = vadd.f32 %v1759, %v1982
      %v1984 = vpop.f32.mrb[0].mxu0
      %1985 = vmatprep.mubr.bf16.mxu0 0
      %1986 = vmatmul.mubr.bf16.gmra.mrb[0].mxu0 %v1831
      %v1987 = vpop.f32.mrb[0].mxu0
      %v1988 = vadd.f32 %v1759, %v1987
      %v1989 = vpop.f32.mrb[0].mxu0
      %v1990 = vpop.f32.mrb[0].mxu0
      %v1991 = vadd.f32 %v1759, %v1990
      %v1992 = vpop.f32.mrb[0].mxu0
      %1993 = vdwg.mxu0
      %v1994 = vmax.f32 %v1868, 0.0
      %v1995 = vmax.f32 %v1871, 0.0
      %v1996 = vmax.f32 %v1876, 0.0
      %v1997 = vmax.f32 %v1879, 0.0
      %v1998 = vmax.f32 %v1884, 0.0
      %v1999 = vmax.f32 %v1887, 0.0
      %v2000 = vmax.f32 %v1892, 0.0
      %v2001 = vmax.f32 %v1895, 0.0
      %v2002 = vmax.f32 %v1900, 0.0
      %v2003 = vmax.f32 %v1903, 0.0
      %v2004 = vmax.f32 %v1908, 0.0
      %v2005 = vmax.f32 %v1911, 0.0
      %v2006 = vmax.f32 %v1916, 0.0
      %v2007 = vmax.f32 %v1919, 0.0
      %v2008 = vmax.f32 %v1924, 0.0
      %v2009 = vmax.f32 %v1927, 0.0
      %v2010 = vmax.f32 %v1932, 0.0
      %v2011 = vmax.f32 %v1935, 0.0
      %v2012 = vmax.f32 %v1940, 0.0
      %v2013 = vmax.f32 %v1943, 0.0
      %v2014 = vmax.f32 %v1948, 0.0
      %v2015 = vmax.f32 %v1951, 0.0
      %v2016 = vmax.f32 %v1956, 0.0
      %v2017 = vmax.f32 %v1959, 0.0
      %v2018 = vmax.f32 %v1964, 0.0
      %v2019 = vmax.f32 %v1967, 0.0
      %v2020 = vmax.f32 %v1972, 0.0
      %v2021 = vmax.f32 %v1975, 0.0
      %v2022 = vmax.f32 %v1980, 0.0
      %v2023 = vmax.f32 %v1983, 0.0
      %v2024 = vmax.f32 %v1988, 0.0
      %v2025 = vmax.f32 %v1991, 0.0
      %v2026 = vpack.c.bf16 %v1995, %v1994
      %v2027 = vpack.c.bf16 %v1997, %v1996
      %v2028 = vpack.c.bf16 %v1999, %v1998
      %v2029 = vpack.c.bf16 %v2001, %v2000
      %v2030 = vpack.c.bf16 %v2003, %v2002
      %v2031 = vpack.c.bf16 %v2005, %v2004
      %v2032 = vpack.c.bf16 %v2007, %v2006
      %v2033 = vpack.c.bf16 %v2009, %v2008
      %v2034 = vpack.c.bf16 %v2011, %v2010
      %v2035 = vpack.c.bf16 %v2013, %v2012
      %v2036 = vpack.c.bf16 %v2015, %v2014
      %v2037 = vpack.c.bf16 %v2017, %v2016
      %v2038 = vpack.c.bf16 %v2019, %v2018
      %v2039 = vpack.c.bf16 %v2021, %v2020
      %v2040 = vpack.c.bf16 %v2023, %v2022
      %v2041 = vpack.c.bf16 %v2025, %v2024
      %v2042 = vld [vmem:[%s12] sm:$0xf]
      %v2043 = vld [vmem:[%s12 + $0x4] sm:$0xf]
      %v2044 = vld [vmem:[%s12 + $0x8] sm:$0xf]
      %v2045 = vld [vmem:[%s12 + $0xc] sm:$0xf]
      %v2046 = vld [vmem:[%s12 + $0x10] sm:$0xf]
      %v2047 = vld [vmem:[%s12 + $0x14] sm:$0xf]
      %v2048 = vld [vmem:[%s12 + $0x18] sm:$0xf]
      %v2049 = vld [vmem:[%s12 + $0x1c] sm:$0xf]
      %v2050 = vld [vmem:[%s12 + $0x20] sm:$0xf]
      %v2051 = vld [vmem:[%s12 + $0x24] sm:$0xf]
      %v2052 = vld [vmem:[%s12 + $0x28] sm:$0xf]
      %v2053 = vld [vmem:[%s12 + $0x2c] sm:$0xf]
      %v2054 = vld [vmem:[%s12 + $0x30] sm:$0xf]
      %v2055 = vld [vmem:[%s12 + $0x34] sm:$0xf]
      %v2056 = vld [vmem:[%s12 + $0x38] sm:$0xf]
      %v2057 = vld [vmem:[%s12 + $0x3c] sm:$0xf]
      %v2058 = vld [vmem:[%s13] sm:$0x1]
      %v2060 = vlaneseq
      %v2061 = vshrl.u32 %v2060, 7
      %v2062 = vsub.s32 0, %v2061
      %v2063 = vrot.slane %v2058, %v2062
      %v2081 = vunpack.c.l.b16 %v2042
      %v2082 = vunpack.c.l.b16 %v2043
      %v2083 = vunpack.c.l.b16 %v2044
      %v2084 = vunpack.c.l.b16 %v2045
      %v2085 = vunpack.c.l.b16 %v2046
      %v2086 = vunpack.c.l.b16 %v2047
      %v2087 = vunpack.c.l.b16 %v2048
      %v2088 = vunpack.c.l.b16 %v2049
      %v2089 = vunpack.c.l.b16 %v2050
      %v2090 = vunpack.c.l.b16 %v2051
      %v2091 = vunpack.c.l.b16 %v2052
      %v2092 = vunpack.c.l.b16 %v2053
      %v2093 = vunpack.c.l.b16 %v2054
      %v2094 = vunpack.c.l.b16 %v2055
      %v2095 = vunpack.c.l.b16 %v2056
      %v2096 = vunpack.c.l.b16 %v2057
      %v2097 = vpack.c.b16 %v2082, %v2081
      %v2098 = vpack.c.b16 %v2084, %v2083
      %v2099 = vpack.c.b16 %v2086, %v2085
      %v2100 = vpack.c.b16 %v2088, %v2087
      %v2101 = vpack.c.b16 %v2090, %v2089
      %v2102 = vpack.c.b16 %v2092, %v2091
      %v2103 = vpack.c.b16 %v2094, %v2093
      %v2104 = vpack.c.b16 %v2096, %v2095
      %2113 = vmatprep.subr.bf16.mxu0 0
      %2114 = vmatpush1.bf16.msra.mxu0 %v2097
      %2115 = vmatprep.subr.bf16.mxu0 0
      %2116 = vmatpush1.bf16.msra.mxu0 %v2098
      %2117 = vmatprep.subr.bf16.mxu0 0
      %2118 = vmatpush1.bf16.msra.mxu0 %v2099
      %2119 = vmatprep.subr.bf16.mxu0 0
      %2120 = vmatpush1.bf16.msra.mxu0 %v2100
      %2121 = vmatprep.subr.bf16.mxu0 0
      %2122 = vmatpush1.bf16.msra.mxu0 %v2101
      %2123 = vmatprep.subr.bf16.mxu0 0
      %2124 = vmatpush1.bf16.msra.mxu0 %v2102
      %2125 = vmatprep.subr.bf16.mxu0 0
      %2126 = vmatpush1.bf16.msra.mxu0 %v2103
      %2127 = vmatprep.subr.bf16.mxu0 0
      %2128 = vmatpush1.bf16.msra.mxu0 %v2104
      %2129 = vmatprep.subr.bf16.mxu0 0
      %2130 = vmatpush1.bf16.msra.mxu0 0
      %2131 = vmatprep.subr.bf16.mxu0 0
      %2132 = vmatpush1.bf16.msra.mxu0 0
      %2133 = vmatprep.subr.bf16.mxu0 0
      %2134 = vmatpush1.bf16.msra.mxu0 0
      %2135 = vmatprep.subr.bf16.mxu0 0
      %2136 = vmatpush1.bf16.msra.mxu0 0
      %2137 = vmatprep.subr.bf16.mxu0 0
      %2138 = vmatpush1.bf16.msra.mxu0 0
      %2139 = vmatprep.subr.bf16.mxu0 0
      %2140 = vmatpush1.bf16.msra.mxu0 0
      %2141 = vmatprep.subr.bf16.mxu0 0
      %2142 = vmatpush1.bf16.msra.mxu0 0
      %2143 = vmatprep.subr.bf16.mxu0 0
      %2144 = vmatpush1.bf16.msra.mxu0 0
      %2145 = vmatprep.mubr.bf16.mxu0 0
      %2146 = vmatmul.mubr.bf16.gmra.mrb[0].mxu0 %v2026
      %v2147 = vpop.f32.mrb[0].mxu0
      %v2148 = vadd.f32 %v2063, %v2147
      %v2149 = vpop.f32.mrb[0].mxu0
      %v2150 = vpop.f32.mrb[0].mxu0
      %v2151 = vadd.f32 %v2063, %v2150
      %v2152 = vpop.f32.mrb[0].mxu0
      %2153 = vmatprep.mubr.bf16.mxu0 0
      %2154 = vmatmul.mubr.bf16.gmra.mrb[0].mxu0 %v2027
      %v2155 = vpop.f32.mrb[0].mxu0
      %v2156 = vadd.f32 %v2063, %v2155
      %v2157 = vpop.f32.mrb[0].mxu0
      %v2158 = vpop.f32.mrb[0].mxu0
      %v2159 = vadd.f32 %v2063, %v2158
      %v2160 = vpop.f32.mrb[0].mxu0
      %2161 = vmatprep.mubr.bf16.mxu0 0
      %2162 = vmatmul.mubr.bf16.gmra.mrb[0].mxu0 %v2028
      %v2163 = vpop.f32.mrb[0].mxu0
      %v2164 = vadd.f32 %v2063, %v2163
      %v2165 = vpop.f32.mrb[0].mxu0
      %v2166 = vpop.f32.mrb[0].mxu0
      %v2167 = vadd.f32 %v2063, %v2166
      %v2168 = vpop.f32.mrb[0].mxu0
      %2169 = vmatprep.mubr.bf16.mxu0 0
      %2170 = vmatmul.mubr.bf16.gmra.mrb[0].mxu0 %v2029
      %v2171 = vpop.f32.mrb[0].mxu0
      %v2172 = vadd.f32 %v2063, %v2171
      %v2173 = vpop.f32.mrb[0].mxu0
      %v2174 = vpop.f32.mrb[0].mxu0
      %v2175 = vadd.f32 %v2063, %v2174
      %v2176 = vpop.f32.mrb[0].mxu0
      %2177 = vmatprep.mubr.bf16.mxu0 0
      %2178 = vmatmul.mubr.bf16.gmra.mrb[0].mxu0 %v2030
      %v2179 = vpop.f32.mrb[0].mxu0
      %v2180 = vadd.f32 %v2063, %v2179
      %v2181 = vpop.f32.mrb[0].mxu0
      %v2182 = vpop.f32.mrb[0].mxu0
      %v2183 = vadd.f32 %v2063, %v2182
      %v2184 = vpop.f32.mrb[0].mxu0
      %2185 = vmatprep.mubr.bf16.mxu0 0
      %2186 = vmatmul.mubr.bf16.gmra.mrb[0].mxu0 %v2031
      %v2187 = vpop.f32.mrb[0].mxu0
      %v2188 = vadd.f32 %v2063, %v2187
      %v2189 = vpop.f32.mrb[0].mxu0
      %v2190 = vpop.f32.mrb[0].mxu0
      %v2191 = vadd.f32 %v2063, %v2190
      %v2192 = vpop.f32.mrb[0].mxu0
      %2193 = vmatprep.mubr.bf16.mxu0 0
      %2194 = vmatmul.mubr.bf16.gmra.mrb[0].mxu0 %v2032
      %v2195 = vpop.f32.mrb[0].mxu0
      %v2196 = vadd.f32 %v2063, %v2195
      %v2197 = vpop.f32.mrb[0].mxu0
      %v2198 = vpop.f32.mrb[0].mxu0
      %v2199 = vadd.f32 %v2063, %v2198
      %v2200 = vpop.f32.mrb[0].mxu0
      %2201 = vmatprep.mubr.bf16.mxu0 0
      %2202 = vmatmul.mubr.bf16.gmra.mrb[0].mxu0 %v2033
      %v2203 = vpop.f32.mrb[0].mxu0
      %v2204 = vadd.f32 %v2063, %v2203
      %v2205 = vpop.f32.mrb[0].mxu0
      %v2206 = vpop.f32.mrb[0].mxu0
      %v2207 = vadd.f32 %v2063, %v2206
      %v2208 = vpop.f32.mrb[0].mxu0
      %2209 = vmatprep.mubr.bf16.mxu0 0
      %2210 = vmatmul.mubr.bf16.gmra.mrb[0].mxu0 %v2034
      %v2211 = vpop.f32.mrb[0].mxu0
      %v2212 = vadd.f32 %v2063, %v2211
      %v2213 = vpop.f32.mrb[0].mxu0
      %v2214 = vpop.f32.mrb[0].mxu0
      %v2215 = vadd.f32 %v2063, %v2214
      %v2216 = vpop.f32.mrb[0].mxu0
      %2217 = vmatprep.mubr.bf16.mxu0 0
      %2218 = vmatmul.mubr.bf16.gmra.mrb[0].mxu0 %v2035
      %v2219 = vpop.f32.mrb[0].mxu0
      %v2220 = vadd.f32 %v2063, %v2219
      %v2221 = vpop.f32.mrb[0].mxu0
      %v2222 = vpop.f32.mrb[0].mxu0
      %v2223 = vadd.f32 %v2063, %v2222
      %v2224 = vpop.f32.mrb[0].mxu0
      %2225 = vmatprep.mubr.bf16.mxu0 0
      %2226 = vmatmul.mubr.bf16.gmra.mrb[0].mxu0 %v2036
      %v2227 = vpop.f32.mrb[0].mxu0
      %v2228 = vadd.f32 %v2063, %v2227
      %v2229 = vpop.f32.mrb[0].mxu0
      %v2230 = vpop.f32.mrb[0].mxu0
      %v2231 = vadd.f32 %v2063, %v2230
      %v2232 = vpop.f32.mrb[0].mxu0
      %2233 = vmatprep.mubr.bf16.mxu0 0
      %2234 = vmatmul.mubr.bf16.gmra.mrb[0].mxu0 %v2037
      %v2235 = vpop.f32.mrb[0].mxu0
      %v2236 = vadd.f32 %v2063, %v2235
      %v2237 = vpop.f32.mrb[0].mxu0
      %v2238 = vpop.f32.mrb[0].mxu0
      %v2239 = vadd.f32 %v2063, %v2238
      %v2240 = vpop.f32.mrb[0].mxu0
      %2241 = vmatprep.mubr.bf16.mxu0 0
      %2242 = vmatmul.mubr.bf16.gmra.mrb[0].mxu0 %v2038
      %v2243 = vpop.f32.mrb[0].mxu0
      %v2244 = vadd.f32 %v2063, %v2243
      %v2245 = vpop.f32.mrb[0].mxu0
      %v2246 = vpop.f32.mrb[0].mxu0
      %v2247 = vadd.f32 %v2063, %v2246
      %v2248 = vpop.f32.mrb[0].mxu0
      %2249 = vmatprep.mubr.bf16.mxu0 0
      %2250 = vmatmul.mubr.bf16.gmra.mrb[0].mxu0 %v2039
      %v2251 = vpop.f32.mrb[0].mxu0
      %v2252 = vadd.f32 %v2063, %v2251
      %v2253 = vpop.f32.mrb[0].mxu0
      %v2254 = vpop.f32.mrb[0].mxu0
      %v2255 = vadd.f32 %v2063, %v2254
      %v2256 = vpop.f32.mrb[0].mxu0
      %2257 = vmatprep.mubr.bf16.mxu0 0
      %2258 = vmatmul.mubr.bf16.gmra.mrb[0].mxu0 %v2040
      %v2259 = vpop.f32.mrb[0].mxu0
      %v2260 = vadd.f32 %v2063, %v2259
      %v2261 = vpop.f32.mrb[0].mxu0
      %v2262 = vpop.f32.mrb[0].mxu0
      %v2263 = vadd.f32 %v2063, %v2262
      %v2264 = vpop.f32.mrb[0].mxu0
      %2265 = vmatprep.mubr.bf16.mxu0 0
      %2266 = vmatmul.mubr.bf16.gmra.mrb[0].mxu0 %v2041
      %v2267 = vpop.f32.mrb[0].mxu0
      %v2268 = vadd.f32 %v2063, %v2267
      %v2269 = vpop.f32.mrb[0].mxu0
      %v2270 = vpop.f32.mrb[0].mxu0
      %v2271 = vadd.f32 %v2063, %v2270
      %v2272 = vpop.f32.mrb[0].mxu0
      %2273 = vdwg.mxu0
      %v2274 = vand.u32 2147483647, %v2148
      %v2275 = vand.u32 2147483647, %v2151
      %v2276 = vand.u32 2147483647, %v2156
      %v2277 = vand.u32 2147483647, %v2159
      %v2278 = vand.u32 2147483647, %v2164
      %v2279 = vand.u32 2147483647, %v2167
      %v2280 = vand.u32 2147483647, %v2172
      %v2281 = vand.u32 2147483647, %v2175
      %v2282 = vand.u32 2147483647, %v2180
      %v2283 = vand.u32 2147483647, %v2183
      %v2284 = vand.u32 2147483647, %v2188
      %v2285 = vand.u32 2147483647, %v2191
      %v2286 = vand.u32 2147483647, %v2196
      %v2287 = vand.u32 2147483647, %v2199
      %v2288 = vand.u32 2147483647, %v2204
      %v2289 = vand.u32 2147483647, %v2207
      %v2290 = vand.u32 2147483647, %v2212
      %v2291 = vand.u32 2147483647, %v2215
      %v2292 = vand.u32 2147483647, %v2220
      %v2293 = vand.u32 2147483647, %v2223
      %v2294 = vand.u32 2147483647, %v2228
      %v2295 = vand.u32 2147483647, %v2231
      %v2296 = vand.u32 2147483647, %v2236
      %v2297 = vand.u32 2147483647, %v2239
      %v2298 = vand.u32 2147483647, %v2244
      %v2299 = vand.u32 2147483647, %v2247
      %v2300 = vand.u32 2147483647, %v2252
      %v2301 = vand.u32 2147483647, %v2255
      %v2302 = vand.u32 2147483647, %v2260
      %v2303 = vand.u32 2147483647, %v2263
      %v2304 = vand.u32 2147483647, %v2268
      %v2305 = vand.u32 2147483647, %v2271
      %v2306 = vsub.f32 0.0, %v2274
      %v2307 = vsub.f32 0.0, %v2275
      %v2308 = vsub.f32 0.0, %v2276
      %v2309 = vsub.f32 0.0, %v2277
      %v2310 = vsub.f32 0.0, %v2278
      %v2311 = vsub.f32 0.0, %v2279
      %v2312 = vsub.f32 0.0, %v2280
      %v2313 = vsub.f32 0.0, %v2281
      %v2314 = vsub.f32 0.0, %v2282
      %v2315 = vsub.f32 0.0, %v2283
      %v2316 = vsub.f32 0.0, %v2284
      %v2317 = vsub.f32 0.0, %v2285
      %v2318 = vsub.f32 0.0, %v2286
      %v2319 = vsub.f32 0.0, %v2287
      %v2320 = vsub.f32 0.0, %v2288
      %v2321 = vsub.f32 0.0, %v2289
      %v2322 = vsub.f32 0.0, %v2290
      %v2323 = vsub.f32 0.0, %v2291
      %v2324 = vsub.f32 0.0, %v2292
      %v2325 = vsub.f32 0.0, %v2293
      %v2326 = vsub.f32 0.0, %v2294
      %v2327 = vsub.f32 0.0, %v2295
      %v2328 = vsub.f32 0.0, %v2296
      %v2329 = vsub.f32 0.0, %v2297
      %v2330 = vsub.f32 0.0, %v2298
      %v2331 = vsub.f32 0.0, %v2299
      %v2332 = vsub.f32 0.0, %v2300
      %v2333 = vsub.f32 0.0, %v2301
      %v2334 = vsub.f32 0.0, %v2302
      %v2335 = vsub.f32 0.0, %v2303
      %v2336 = vsub.f32 0.0, %v2304
      %v2337 = vsub.f32 0.0, %v2305
      %v2338 = vmul.f32 %v2306, 1.442695
      %v2339 = vpow.pop %v2338
      %v2340 = vmul.f32 %v2307, 1.442695
      %v2341 = vpow.pop %v2340
      %v2342 = vmul.f32 %v2308, 1.442695
      %v2343 = vpow.pop %v2342
      %v2344 = vmul.f32 %v2309, 1.442695
      %v2345 = vpow.pop %v2344
      %v2346 = vmul.f32 %v2310, 1.442695
      %v2347 = vpow.pop %v2346
      %v2348 = vmul.f32 %v2311, 1.442695
      %v2349 = vpow.pop %v2348
      %v2350 = vmul.f32 %v2312, 1.442695
      %v2351 = vpow.pop %v2350
      %v2352 = vmul.f32 %v2313, 1.442695
      %v2353 = vpow.pop %v2352
      %v2354 = vmul.f32 %v2314, 1.442695
      %v2355 = vpow.pop %v2354
      %v2356 = vmul.f32 %v2315, 1.442695
      %v2357 = vpow.pop %v2356
      %v2358 = vmul.f32 %v2316, 1.442695
      %v2359 = vpow.pop %v2358
      %v2360 = vmul.f32 %v2317, 1.442695
      %v2361 = vpow.pop %v2360
      %v2362 = vmul.f32 %v2318, 1.442695
      %v2363 = vpow.pop %v2362
      %v2364 = vmul.f32 %v2319, 1.442695
      %v2365 = vpow.pop %v2364
      %v2366 = vmul.f32 %v2320, 1.442695
      %v2367 = vpow.pop %v2366
      %v2368 = vmul.f32 %v2321, 1.442695
      %v2369 = vpow.pop %v2368
      %v2370 = vmul.f32 %v2322, 1.442695
      %v2371 = vpow.pop %v2370
      %v2372 = vmul.f32 %v2323, 1.442695
      %v2373 = vpow.pop %v2372
      %v2374 = vmul.f32 %v2324, 1.442695
      %v2375 = vpow.pop %v2374
      %v2376 = vmul.f32 %v2325, 1.442695
      %v2377 = vpow.pop %v2376
      %v2378 = vmul.f32 %v2326, 1.442695
      %v2379 = vpow.pop %v2378
      %v2380 = vmul.f32 %v2327, 1.442695
      %v2381 = vpow.pop %v2380
      %v2382 = vmul.f32 %v2328, 1.442695
      %v2383 = vpow.pop %v2382
      %v2384 = vmul.f32 %v2329, 1.442695
      %v2385 = vpow.pop %v2384
      %v2386 = vmul.f32 %v2330, 1.442695
      %v2387 = vpow.pop %v2386
      %v2388 = vmul.f32 %v2331, 1.442695
      %v2389 = vpow.pop %v2388
      %v2390 = vmul.f32 %v2332, 1.442695
      %v2391 = vpow.pop %v2390
      %v2392 = vmul.f32 %v2333, 1.442695
      %v2393 = vpow.pop %v2392
      %v2394 = vmul.f32 %v2334, 1.442695
      %v2395 = vpow.pop %v2394
      %v2396 = vmul.f32 %v2335, 1.442695
      %v2397 = vpow.pop %v2396
      %v2398 = vmul.f32 %v2336, 1.442695
      %v2399 = vpow.pop %v2398
      %v2400 = vmul.f32 %v2337, 1.442695
      %v2401 = vpow.pop %v2400
      %v2402 = vadd.f32 %v2339, 1.0
      %v2403 = vadd.f32 %v2341, 1.0
      %v2404 = vadd.f32 %v2343, 1.0
      %v2405 = vadd.f32 %v2345, 1.0
      %v2406 = vadd.f32 %v2347, 1.0
      %v2407 = vadd.f32 %v2349, 1.0
      %v2408 = vadd.f32 %v2351, 1.0
      %v2409 = vadd.f32 %v2353, 1.0
      %v2410 = vadd.f32 %v2355, 1.0
      %v2411 = vadd.f32 %v2357, 1.0
      %v2412 = vadd.f32 %v2359, 1.0
      %v2413 = vadd.f32 %v2361, 1.0
      %v2414 = vadd.f32 %v2363, 1.0
      %v2415 = vadd.f32 %v2365, 1.0
      %v2416 = vadd.f32 %v2367, 1.0
      %v2417 = vadd.f32 %v2369, 1.0
      %v2418 = vadd.f32 %v2371, 1.0
      %v2419 = vadd.f32 %v2373, 1.0
      %v2420 = vadd.f32 %v2375, 1.0
      %v2421 = vadd.f32 %v2377, 1.0
      %v2422 = vadd.f32 %v2379, 1.0
      %v2423 = vadd.f32 %v2381, 1.0
      %v2424 = vadd.f32 %v2383, 1.0
      %v2425 = vadd.f32 %v2385, 1.0
      %v2426 = vadd.f32 %v2387, 1.0
      %v2427 = vadd.f32 %v2389, 1.0
      %v2428 = vadd.f32 %v2391, 1.0
      %v2429 = vadd.f32 %v2393, 1.0
      %v2430 = vadd.f32 %v2395, 1.0
      %v2431 = vadd.f32 %v2397, 1.0
      %v2432 = vadd.f32 %v2399, 1.0
      %v2433 = vadd.f32 %v2401, 1.0
      %v2434 = vrcp.pop %v2402
      %v2435 = vrcp.pop %v2403
      %v2436 = vrcp.pop %v2404
      %v2437 = vrcp.pop %v2405
      %v2438 = vrcp.pop %v2406
      %v2439 = vrcp.pop %v2407
      %v2440 = vrcp.pop %v2408
      %v2441 = vrcp.pop %v2409
      %v2442 = vrcp.pop %v2410
      %v2443 = vrcp.pop %v2411
      %v2444 = vrcp.pop %v2412
      %v2445 = vrcp.pop %v2413
      %v2446 = vrcp.pop %v2414
      %v2447 = vrcp.pop %v2415
      %v2448 = vrcp.pop %v2416
      %v2449 = vrcp.pop %v2417
      %v2450 = vrcp.pop %v2418
      %v2451 = vrcp.pop %v2419
      %v2452 = vrcp.pop %v2420
      %v2453 = vrcp.pop %v2421
      %v2454 = vrcp.pop %v2422
      %v2455 = vrcp.pop %v2423
      %v2456 = vrcp.pop %v2424
      %v2457 = vrcp.pop %v2425
      %v2458 = vrcp.pop %v2426
      %v2459 = vrcp.pop %v2427
      %v2460 = vrcp.pop %v2428
      %v2461 = vrcp.pop %v2429
      %v2462 = vrcp.pop %v2430
      %v2463 = vrcp.pop %v2431
      %v2464 = vrcp.pop %v2432
      %v2465 = vrcp.pop %v2433
      %vm2466 = vcmp.ge.f32.partialorder %v2148, 0.0
      %vm2467 = vcmp.ge.f32.partialorder %v2151, 0.0
      %vm2468 = vcmp.ge.f32.partialorder %v2156, 0.0
      %vm2469 = vcmp.ge.f32.partialorder %v2159, 0.0
      %vm2470 = vcmp.ge.f32.partialorder %v2164, 0.0
      %vm2471 = vcmp.ge.f32.partialorder %v2167, 0.0
      %vm2472 = vcmp.ge.f32.partialorder %v2172, 0.0
      %vm2473 = vcmp.ge.f32.partialorder %v2175, 0.0
      %vm2474 = vcmp.ge.f32.partialorder %v2180, 0.0
      %vm2475 = vcmp.ge.f32.partialorder %v2183, 0.0
      %vm2476 = vcmp.ge.f32.partialorder %v2188, 0.0
      %vm2477 = vcmp.ge.f32.partialorder %v2191, 0.0
      %vm2478 = vcmp.ge.f32.partialorder %v2196, 0.0
      %vm2479 = vcmp.ge.f32.partialorder %v2199, 0.0
      %vm2480 = vcmp.ge.f32.partialorder %v2204, 0.0
      %vm2481 = vcmp.ge.f32.partialorder %v2207, 0.0
      %vm2482 = vcmp.ge.f32.partialorder %v2212, 0.0
      %vm2483 = vcmp.ge.f32.partialorder %v2215, 0.0
      %vm2484 = vcmp.ge.f32.partialorder %v2220, 0.0
      %vm2485 = vcmp.ge.f32.partialorder %v2223, 0.0
      %vm2486 = vcmp.ge.f32.partialorder %v2228, 0.0
      %vm2487 = vcmp.ge.f32.partialorder %v2231, 0.0
      %vm2488 = vcmp.ge.f32.partialorder %v2236, 0.0
      %vm2489 = vcmp.ge.f32.partialorder %v2239, 0.0
      %vm2490 = vcmp.ge.f32.partialorder %v2244, 0.0
      %vm2491 = vcmp.ge.f32.partialorder %v2247, 0.0
      %vm2492 = vcmp.ge.f32.partialorder %v2252, 0.0
      %vm2493 = vcmp.ge.f32.partialorder %v2255, 0.0
      %vm2494 = vcmp.ge.f32.partialorder %v2260, 0.0
      %vm2495 = vcmp.ge.f32.partialorder %v2263, 0.0
      %vm2496 = vcmp.ge.f32.partialorder %v2268, 0.0
      %vm2497 = vcmp.ge.f32.partialorder %v2271, 0.0
      %v2498 = vmul.f32 %v2339, %v2434
      %v2499 = vmul.f32 %v2341, %v2435
      %v2500 = vmul.f32 %v2343, %v2436
      %v2501 = vmul.f32 %v2345, %v2437
      %v2502 = vmul.f32 %v2347, %v2438
      %v2503 = vmul.f32 %v2349, %v2439
      %v2504 = vmul.f32 %v2351, %v2440
      %v2505 = vmul.f32 %v2353, %v2441
      %v2506 = vmul.f32 %v2355, %v2442
      %v2507 = vmul.f32 %v2357, %v2443
      %v2508 = vmul.f32 %v2359, %v2444
      %v2509 = vmul.f32 %v2361, %v2445
      %v2510 = vmul.f32 %v2363, %v2446
      %v2511 = vmul.f32 %v2365, %v2447
      %v2512 = vmul.f32 %v2367, %v2448
      %v2513 = vmul.f32 %v2369, %v2449
      %v2514 = vmul.f32 %v2371, %v2450
      %v2515 = vmul.f32 %v2373, %v2451
      %v2516 = vmul.f32 %v2375, %v2452
      %v2517 = vmul.f32 %v2377, %v2453
      %v2518 = vmul.f32 %v2379, %v2454
      %v2519 = vmul.f32 %v2381, %v2455
      %v2520 = vmul.f32 %v2383, %v2456
      %v2521 = vmul.f32 %v2385, %v2457
      %v2522 = vmul.f32 %v2387, %v2458
      %v2523 = vmul.f32 %v2389, %v2459
      %v2524 = vmul.f32 %v2391, %v2460
      %v2525 = vmul.f32 %v2393, %v2461
      %v2526 = vmul.f32 %v2395, %v2462
      %v2527 = vmul.f32 %v2397, %v2463
      %v2528 = vmul.f32 %v2399, %v2464
      %v2529 = vmul.f32 %v2401, %v2465
      %v2530 = vsel %vm2466, %v2434, %v2498
      %v2531 = vsel %vm2467, %v2435, %v2499
      %v2532 = vsel %vm2468, %v2436, %v2500
      %v2533 = vsel %vm2469, %v2437, %v2501
      %v2534 = vsel %vm2470, %v2438, %v2502
      %v2535 = vsel %vm2471, %v2439, %v2503
      %v2536 = vsel %vm2472, %v2440, %v2504
      %v2537 = vsel %vm2473, %v2441, %v2505
      %v2538 = vsel %vm2474, %v2442, %v2506
      %v2539 = vsel %vm2475, %v2443, %v2507
      %v2540 = vsel %vm2476, %v2444, %v2508
      %v2541 = vsel %vm2477, %v2445, %v2509
      %v2542 = vsel %vm2478, %v2446, %v2510
      %v2543 = vsel %vm2479, %v2447, %v2511
      %v2544 = vsel %vm2480, %v2448, %v2512
      %v2545 = vsel %vm2481, %v2449, %v2513
      %v2546 = vsel %vm2482, %v2450, %v2514
      %v2547 = vsel %vm2483, %v2451, %v2515
      %v2548 = vsel %vm2484, %v2452, %v2516
      %v2549 = vsel %vm2485, %v2453, %v2517
      %v2550 = vsel %vm2486, %v2454, %v2518
      %v2551 = vsel %vm2487, %v2455, %v2519
      %v2552 = vsel %vm2488, %v2456, %v2520
      %v2553 = vsel %vm2489, %v2457, %v2521
      %v2554 = vsel %vm2490, %v2458, %v2522
      %v2555 = vsel %vm2491, %v2459, %v2523
      %v2556 = vsel %vm2492, %v2460, %v2524
      %v2557 = vsel %vm2493, %v2461, %v2525
      %v2558 = vsel %vm2494, %v2462, %v2526
      %v2559 = vsel %vm2495, %v2463, %v2527
      %v2560 = vsel %vm2496, %v2464, %v2528
      %v2561 = vsel %vm2497, %v2465, %v2529
      %2562 = vst.msk [vmem:[%s526] sm:$0xff] %vm630, %v2530
      %2563 = vst.msk [vmem:[%s526 + $0x8] sm:$0xff] %vm630, %v2531
      %2564 = vst.msk [vmem:[%s526 + $0x10] sm:$0xff] %vm630, %v2532
      %2565 = vst.msk [vmem:[%s526 + $0x18] sm:$0xff] %vm630, %v2533
      %2566 = vst.msk [vmem:[%s526 + $0x20] sm:$0xff] %vm630, %v2534
      %2567 = vst.msk [vmem:[%s526 + $0x28] sm:$0xff] %vm630, %v2535
      %2568 = vst.msk [vmem:[%s526 + $0x30] sm:$0xff] %vm630, %v2536
      %2569 = vst.msk [vmem:[%s526 + $0x38] sm:$0xff] %vm630, %v2537
      %2570 = vst.msk [vmem:[%s526 + $0x40] sm:$0xff] %vm630, %v2538
      %2571 = vst.msk [vmem:[%s526 + $0x48] sm:$0xff] %vm630, %v2539
      %2572 = vst.msk [vmem:[%s526 + $0x50] sm:$0xff] %vm630, %v2540
      %2573 = vst.msk [vmem:[%s526 + $0x58] sm:$0xff] %vm630, %v2541
      %2574 = vst.msk [vmem:[%s526 + $0x60] sm:$0xff] %vm630, %v2542
      %2575 = vst.msk [vmem:[%s526 + $0x68] sm:$0xff] %vm630, %v2543
      %2576 = vst.msk [vmem:[%s526 + $0x70] sm:$0xff] %vm630, %v2544
      %2577 = vst.msk [vmem:[%s526 + $0x78] sm:$0xff] %vm630, %v2545
      %2578 = vst.msk [vmem:[%s526 + $0x80] sm:$0xff] %vm630, %v2546
      %2579 = vst.msk [vmem:[%s526 + $0x88] sm:$0xff] %vm630, %v2547
      %2580 = vst.msk [vmem:[%s526 + $0x90] sm:$0xff] %vm630, %v2548
      %2581 = vst.msk [vmem:[%s526 + $0x98] sm:$0xff] %vm630, %v2549
      %2582 = vst.msk [vmem:[%s526 + $0xa0] sm:$0xff] %vm630, %v2550
      %2583 = vst.msk [vmem:[%s526 + $0xa8] sm:$0xff] %vm630, %v2551
      %2584 = vst.msk [vmem:[%s526 + $0xb0] sm:$0xff] %vm630, %v2552
      %2585 = vst.msk [vmem:[%s526 + $0xb8] sm:$0xff] %vm630, %v2553
      %2586 = vst.msk [vmem:[%s526 + $0xc0] sm:$0xff] %vm630, %v2554
      %2587 = vst.msk [vmem:[%s526 + $0xc8] sm:$0xff] %vm630, %v2555
      %2588 = vst.msk [vmem:[%s526 + $0xd0] sm:$0xff] %vm630, %v2556
      %2589 = vst.msk [vmem:[%s526 + $0xd8] sm:$0xff] %vm630, %v2557
      %2590 = vst.msk [vmem:[%s526 + $0xe0] sm:$0xff] %vm630, %v2558
      %2591 = vst.msk [vmem:[%s526 + $0xe8] sm:$0xff] %vm630, %v2559
      %2592 = vst.msk [vmem:[%s526 + $0xf0] sm:$0xff] %vm630, %v2560
      %2593 = vst.msk [vmem:[%s526 + $0xf8] sm:$0xff] %vm630, %v2561
      %v2594 = vlog2.pop %v2402
      %v2595 = vmul.f32 %v2594, 0.6931472
      %v2596 = vlog2.pop %v2403
      %v2597 = vmul.f32 %v2596, 0.6931472
      %v2598 = vlog2.pop %v2404
      %v2599 = vmul.f32 %v2598, 0.6931472
      %v2600 = vlog2.pop %v2405
      %v2601 = vmul.f32 %v2600, 0.6931472
      %v2602 = vlog2.pop %v2406
      %v2603 = vmul.f32 %v2602, 0.6931472
      %v2604 = vlog2.pop %v2407
      %v2605 = vmul.f32 %v2604, 0.6931472
      %v2606 = vlog2.pop %v2408
      %v2607 = vmul.f32 %v2606, 0.6931472
      %v2608 = vlog2.pop %v2409
      %v2609 = vmul.f32 %v2608, 0.6931472
      %v2610 = vlog2.pop %v2410
      %v2611 = vmul.f32 %v2610, 0.6931472
      %v2612 = vlog2.pop %v2411
      %v2613 = vmul.f32 %v2612, 0.6931472
      %v2614 = vlog2.pop %v2412
      %v2615 = vmul.f32 %v2614, 0.6931472
      %v2616 = vlog2.pop %v2413
      %v2617 = vmul.f32 %v2616, 0.6931472
      %v2618 = vlog2.pop %v2414
      %v2619 = vmul.f32 %v2618, 0.6931472
      %v2620 = vlog2.pop %v2415
      %v2621 = vmul.f32 %v2620, 0.6931472
      %v2622 = vlog2.pop %v2416
      %v2623 = vmul.f32 %v2622, 0.6931472
      %v2624 = vlog2.pop %v2417
      %v2625 = vmul.f32 %v2624, 0.6931472
      %v2626 = vlog2.pop %v2418
      %v2627 = vmul.f32 %v2626, 0.6931472
      %v2628 = vlog2.pop %v2419
      %v2629 = vmul.f32 %v2628, 0.6931472
      %v2630 = vlog2.pop %v2420
      %v2631 = vmul.f32 %v2630, 0.6931472
      %v2632 = vlog2.pop %v2421
      %v2633 = vmul.f32 %v2632, 0.6931472
      %v2634 = vlog2.pop %v2422
      %v2635 = vmul.f32 %v2634, 0.6931472
      %v2636 = vlog2.pop %v2423
      %v2637 = vmul.f32 %v2636, 0.6931472
      %v2638 = vlog2.pop %v2424
      %v2639 = vmul.f32 %v2638, 0.6931472
      %v2640 = vlog2.pop %v2425
      %v2641 = vmul.f32 %v2640, 0.6931472
      %v2642 = vlog2.pop %v2426
      %v2643 = vmul.f32 %v2642, 0.6931472
      %v2644 = vlog2.pop %v2427
      %v2645 = vmul.f32 %v2644, 0.6931472
      %v2646 = vlog2.pop %v2428
      %v2647 = vmul.f32 %v2646, 0.6931472
      %v2648 = vlog2.pop %v2429
      %v2649 = vmul.f32 %v2648, 0.6931472
      %v2650 = vlog2.pop %v2430
      %v2651 = vmul.f32 %v2650, 0.6931472
      %v2652 = vlog2.pop %v2431
      %v2653 = vmul.f32 %v2652, 0.6931472
      %v2654 = vlog2.pop %v2432
      %v2655 = vmul.f32 %v2654, 0.6931472
      %v2656 = vlog2.pop %v2433
      %v2657 = vmul.f32 %v2656, 0.6931472
      %v2658 = vmin.f32 %v2148, 0.0
      %v2659 = vmin.f32 %v2151, 0.0
      %v2660 = vmin.f32 %v2156, 0.0
      %v2661 = vmin.f32 %v2159, 0.0
      %v2662 = vmin.f32 %v2164, 0.0
      %v2663 = vmin.f32 %v2167, 0.0
      %v2664 = vmin.f32 %v2172, 0.0
      %v2665 = vmin.f32 %v2175, 0.0
      %v2666 = vmin.f32 %v2180, 0.0
      %v2667 = vmin.f32 %v2183, 0.0
      %v2668 = vmin.f32 %v2188, 0.0
      %v2669 = vmin.f32 %v2191, 0.0
      %v2670 = vmin.f32 %v2196, 0.0
      %v2671 = vmin.f32 %v2199, 0.0
      %v2672 = vmin.f32 %v2204, 0.0
      %v2673 = vmin.f32 %v2207, 0.0
      %v2674 = vmin.f32 %v2212, 0.0
      %v2675 = vmin.f32 %v2215, 0.0
      %v2676 = vmin.f32 %v2220, 0.0
      %v2677 = vmin.f32 %v2223, 0.0
      %v2678 = vmin.f32 %v2228, 0.0
      %v2679 = vmin.f32 %v2231, 0.0
      %v2680 = vmin.f32 %v2236, 0.0
      %v2681 = vmin.f32 %v2239, 0.0
      %v2682 = vmin.f32 %v2244, 0.0
      %v2683 = vmin.f32 %v2247, 0.0
      %v2684 = vmin.f32 %v2252, 0.0
      %v2685 = vmin.f32 %v2255, 0.0
      %v2686 = vmin.f32 %v2260, 0.0
      %v2687 = vmin.f32 %v2263, 0.0
      %v2688 = vmin.f32 %v2268, 0.0
      %v2689 = vmin.f32 %v2271, 0.0
      %v2690 = vsub.f32 %v2658, %v2595
      %v2691 = vsub.f32 %v2659, %v2597
      %v2692 = vsub.f32 %v2660, %v2599
      %v2693 = vsub.f32 %v2661, %v2601
      %v2694 = vsub.f32 %v2662, %v2603
      %v2695 = vsub.f32 %v2663, %v2605
      %v2696 = vsub.f32 %v2664, %v2607
      %v2697 = vsub.f32 %v2665, %v2609
      %v2698 = vsub.f32 %v2666, %v2611
      %v2699 = vsub.f32 %v2667, %v2613
      %v2700 = vsub.f32 %v2668, %v2615
      %v2701 = vsub.f32 %v2669, %v2617
      %v2702 = vsub.f32 %v2670, %v2619
      %v2703 = vsub.f32 %v2671, %v2621
      %v2704 = vsub.f32 %v2672, %v2623
      %v2705 = vsub.f32 %v2673, %v2625
      %v2706 = vsub.f32 %v2674, %v2627
      %v2707 = vsub.f32 %v2675, %v2629
      %v2708 = vsub.f32 %v2676, %v2631
      %v2709 = vsub.f32 %v2677, %v2633
      %v2710 = vsub.f32 %v2678, %v2635
      %v2711 = vsub.f32 %v2679, %v2637
      %v2712 = vsub.f32 %v2680, %v2639
      %v2713 = vsub.f32 %v2681, %v2641
      %v2714 = vsub.f32 %v2682, %v2643
      %v2715 = vsub.f32 %v2683, %v2645
      %v2716 = vsub.f32 %v2684, %v2647
      %v2717 = vsub.f32 %v2685, %v2649
      %v2718 = vsub.f32 %v2686, %v2651
      %v2719 = vsub.f32 %v2687, %v2653
      %v2720 = vsub.f32 %v2688, %v2655
      %v2721 = vsub.f32 %v2689, %v2657
      %v2722 = vmax.f32 %v2690, -100.0
      %v2723 = vmax.f32 %v2691, -100.0
      %v2724 = vmax.f32 %v2692, -100.0
      %v2725 = vmax.f32 %v2693, -100.0
      %v2726 = vmax.f32 %v2694, -100.0
      %v2727 = vmax.f32 %v2695, -100.0
      %v2728 = vmax.f32 %v2696, -100.0
      %v2729 = vmax.f32 %v2697, -100.0
      %v2730 = vmax.f32 %v2698, -100.0
      %v2731 = vmax.f32 %v2699, -100.0
      %v2732 = vmax.f32 %v2700, -100.0
      %v2733 = vmax.f32 %v2701, -100.0
      %v2734 = vmax.f32 %v2702, -100.0
      %v2735 = vmax.f32 %v2703, -100.0
      %v2736 = vmax.f32 %v2704, -100.0
      %v2737 = vmax.f32 %v2705, -100.0
      %v2738 = vmax.f32 %v2706, -100.0
      %v2739 = vmax.f32 %v2707, -100.0
      %v2740 = vmax.f32 %v2708, -100.0
      %v2741 = vmax.f32 %v2709, -100.0
      %v2742 = vmax.f32 %v2710, -100.0
      %v2743 = vmax.f32 %v2711, -100.0
      %v2744 = vmax.f32 %v2712, -100.0
      %v2745 = vmax.f32 %v2713, -100.0
      %v2746 = vmax.f32 %v2714, -100.0
      %v2747 = vmax.f32 %v2715, -100.0
      %v2748 = vmax.f32 %v2716, -100.0
      %v2749 = vmax.f32 %v2717, -100.0
      %v2750 = vmax.f32 %v2718, -100.0
      %v2751 = vmax.f32 %v2719, -100.0
      %v2752 = vmax.f32 %v2720, -100.0
      %v2753 = vmax.f32 %v2721, -100.0
      %v2754 = vmax.f32 %v2148, 0.0
      %v2755 = vmax.f32 %v2151, 0.0
      %v2756 = vmax.f32 %v2156, 0.0
      %v2757 = vmax.f32 %v2159, 0.0
      %v2758 = vmax.f32 %v2164, 0.0
      %v2759 = vmax.f32 %v2167, 0.0
      %v2760 = vmax.f32 %v2172, 0.0
      %v2761 = vmax.f32 %v2175, 0.0
      %v2762 = vmax.f32 %v2180, 0.0
      %v2763 = vmax.f32 %v2183, 0.0
      %v2764 = vmax.f32 %v2188, 0.0
      %v2765 = vmax.f32 %v2191, 0.0
      %v2766 = vmax.f32 %v2196, 0.0
      %v2767 = vmax.f32 %v2199, 0.0
      %v2768 = vmax.f32 %v2204, 0.0
      %v2769 = vmax.f32 %v2207, 0.0
      %v2770 = vmax.f32 %v2212, 0.0
      %v2771 = vmax.f32 %v2215, 0.0
      %v2772 = vmax.f32 %v2220, 0.0
      %v2773 = vmax.f32 %v2223, 0.0
      %v2774 = vmax.f32 %v2228, 0.0
      %v2775 = vmax.f32 %v2231, 0.0
      %v2776 = vmax.f32 %v2236, 0.0
      %v2777 = vmax.f32 %v2239, 0.0
      %v2778 = vmax.f32 %v2244, 0.0
      %v2779 = vmax.f32 %v2247, 0.0
      %v2780 = vmax.f32 %v2252, 0.0
      %v2781 = vmax.f32 %v2255, 0.0
      %v2782 = vmax.f32 %v2260, 0.0
      %v2783 = vmax.f32 %v2263, 0.0
      %v2784 = vmax.f32 %v2268, 0.0
      %v2785 = vmax.f32 %v2271, 0.0
      %v2786 = vsub.f32 0.0, %v2754
      %v2787 = vsub.f32 0.0, %v2755
      %v2788 = vsub.f32 0.0, %v2756
      %v2789 = vsub.f32 0.0, %v2757
      %v2790 = vsub.f32 0.0, %v2758
      %v2791 = vsub.f32 0.0, %v2759
      %v2792 = vsub.f32 0.0, %v2760
      %v2793 = vsub.f32 0.0, %v2761
      %v2794 = vsub.f32 0.0, %v2762
      %v2795 = vsub.f32 0.0, %v2763
      %v2796 = vsub.f32 0.0, %v2764
      %v2797 = vsub.f32 0.0, %v2765
      %v2798 = vsub.f32 0.0, %v2766
      %v2799 = vsub.f32 0.0, %v2767
      %v2800 = vsub.f32 0.0, %v2768
      %v2801 = vsub.f32 0.0, %v2769
      %v2802 = vsub.f32 0.0, %v2770
      %v2803 = vsub.f32 0.0, %v2771
      %v2804 = vsub.f32 0.0, %v2772
      %v2805 = vsub.f32 0.0, %v2773
      %v2806 = vsub.f32 0.0, %v2774
      %v2807 = vsub.f32 0.0, %v2775
      %v2808 = vsub.f32 0.0, %v2776
      %v2809 = vsub.f32 0.0, %v2777
      %v2810 = vsub.f32 0.0, %v2778
      %v2811 = vsub.f32 0.0, %v2779
      %v2812 = vsub.f32 0.0, %v2780
      %v2813 = vsub.f32 0.0, %v2781
      %v2814 = vsub.f32 0.0, %v2782
      %v2815 = vsub.f32 0.0, %v2783
      %v2816 = vsub.f32 0.0, %v2784
      %v2817 = vsub.f32 0.0, %v2785
      %v2818 = vsub.f32 %v2786, %v2595
      %v2819 = vsub.f32 %v2787, %v2597
      %v2820 = vsub.f32 %v2788, %v2599
      %v2821 = vsub.f32 %v2789, %v2601
      %v2822 = vsub.f32 %v2790, %v2603
      %v2823 = vsub.f32 %v2791, %v2605
      %v2824 = vsub.f32 %v2792, %v2607
      %v2825 = vsub.f32 %v2793, %v2609
      %v2826 = vsub.f32 %v2794, %v2611
      %v2827 = vsub.f32 %v2795, %v2613
      %v2828 = vsub.f32 %v2796, %v2615
      %v2829 = vsub.f32 %v2797, %v2617
      %v2830 = vsub.f32 %v2798, %v2619
      %v2831 = vsub.f32 %v2799, %v2621
      %v2832 = vsub.f32 %v2800, %v2623
      %v2833 = vsub.f32 %v2801, %v2625
      %v2834 = vsub.f32 %v2802, %v2627
      %v2835 = vsub.f32 %v2803, %v2629
      %v2836 = vsub.f32 %v2804, %v2631
      %v2837 = vsub.f32 %v2805, %v2633
      %v2838 = vsub.f32 %v2806, %v2635
      %v2839 = vsub.f32 %v2807, %v2637
      %v2840 = vsub.f32 %v2808, %v2639
      %v2841 = vsub.f32 %v2809, %v2641
      %v2842 = vsub.f32 %v2810, %v2643
      %v2843 = vsub.f32 %v2811, %v2645
      %v2844 = vsub.f32 %v2812, %v2647
      %v2845 = vsub.f32 %v2813, %v2649
      %v2846 = vsub.f32 %v2814, %v2651
      %v2847 = vsub.f32 %v2815, %v2653
      %v2848 = vsub.f32 %v2816, %v2655
      %v2849 = vsub.f32 %v2817, %v2657
      %v2850 = vmax.f32 %v2818, -100.0
      %v2851 = vmax.f32 %v2819, -100.0
      %v2852 = vmax.f32 %v2820, -100.0
      %v2853 = vmax.f32 %v2821, -100.0
      %v2854 = vmax.f32 %v2822, -100.0
      %v2855 = vmax.f32 %v2823, -100.0
      %v2856 = vmax.f32 %v2824, -100.0
      %v2857 = vmax.f32 %v2825, -100.0
      %v2858 = vmax.f32 %v2826, -100.0
      %v2859 = vmax.f32 %v2827, -100.0
      %v2860 = vmax.f32 %v2828, -100.0
      %v2861 = vmax.f32 %v2829, -100.0
      %v2862 = vmax.f32 %v2830, -100.0
      %v2863 = vmax.f32 %v2831, -100.0
      %v2864 = vmax.f32 %v2832, -100.0
      %v2865 = vmax.f32 %v2833, -100.0
      %v2866 = vmax.f32 %v2834, -100.0
      %v2867 = vmax.f32 %v2835, -100.0
      %v2868 = vmax.f32 %v2836, -100.0
      %v2869 = vmax.f32 %v2837, -100.0
      %v2870 = vmax.f32 %v2838, -100.0
      %v2871 = vmax.f32 %v2839, -100.0
      %v2872 = vmax.f32 %v2840, -100.0
      %v2873 = vmax.f32 %v2841, -100.0
      %v2874 = vmax.f32 %v2842, -100.0
      %v2875 = vmax.f32 %v2843, -100.0
      %v2876 = vmax.f32 %v2844, -100.0
      %v2877 = vmax.f32 %v2845, -100.0
      %v2878 = vmax.f32 %v2846, -100.0
      %v2879 = vmax.f32 %v2847, -100.0
      %v2880 = vmax.f32 %v2848, -100.0
      %v2881 = vmax.f32 %v2849, -100.0
      %v2882 = vmul.f32 %v567, %v2722
      %v2883 = vmul.f32 %v568, %v2723
      %v2884 = vmul.f32 %v569, %v2724
      %v2885 = vmul.f32 %v570, %v2725
      %v2886 = vmul.f32 %v571, %v2726
      %v2887 = vmul.f32 %v572, %v2727
      %v2888 = vmul.f32 %v573, %v2728
      %v2889 = vmul.f32 %v574, %v2729
      %v2890 = vmul.f32 %v575, %v2730
      %v2891 = vmul.f32 %v576, %v2731
      %v2892 = vmul.f32 %v577, %v2732
      %v2893 = vmul.f32 %v578, %v2733
      %v2894 = vmul.f32 %v579, %v2734
      %v2895 = vmul.f32 %v580, %v2735
      %v2896 = vmul.f32 %v581, %v2736
      %v2897 = vmul.f32 %v582, %v2737
      %v2898 = vmul.f32 %v583, %v2738
      %v2899 = vmul.f32 %v584, %v2739
      %v2900 = vmul.f32 %v585, %v2740
      %v2901 = vmul.f32 %v586, %v2741
      %v2902 = vmul.f32 %v587, %v2742
      %v2903 = vmul.f32 %v588, %v2743
      %v2904 = vmul.f32 %v589, %v2744
      %v2905 = vmul.f32 %v590, %v2745
      %v2906 = vmul.f32 %v591, %v2746
      %v2907 = vmul.f32 %v592, %v2747
      %v2908 = vmul.f32 %v593, %v2748
      %v2909 = vmul.f32 %v594, %v2749
      %v2910 = vmul.f32 %v595, %v2750
      %v2911 = vmul.f32 %v596, %v2751
      %v2912 = vmul.f32 %v597, %v2752
      %v2913 = vmul.f32 %v598, %v2753
      %v2914 = vsub.f32 1.0, %v567
      %v2915 = vsub.f32 1.0, %v568
      %v2916 = vsub.f32 1.0, %v569
      %v2917 = vsub.f32 1.0, %v570
      %v2918 = vsub.f32 1.0, %v571
      %v2919 = vsub.f32 1.0, %v572
      %v2920 = vsub.f32 1.0, %v573
      %v2921 = vsub.f32 1.0, %v574
      %v2922 = vsub.f32 1.0, %v575
      %v2923 = vsub.f32 1.0, %v576
      %v2924 = vsub.f32 1.0, %v577
      %v2925 = vsub.f32 1.0, %v578
      %v2926 = vsub.f32 1.0, %v579
      %v2927 = vsub.f32 1.0, %v580
      %v2928 = vsub.f32 1.0, %v581
      %v2929 = vsub.f32 1.0, %v582
      %v2930 = vsub.f32 1.0, %v583
      %v2931 = vsub.f32 1.0, %v584
      %v2932 = vsub.f32 1.0, %v585
      %v2933 = vsub.f32 1.0, %v586
      %v2934 = vsub.f32 1.0, %v587
      %v2935 = vsub.f32 1.0, %v588
      %v2936 = vsub.f32 1.0, %v589
      %v2937 = vsub.f32 1.0, %v590
      %v2938 = vsub.f32 1.0, %v591
      %v2939 = vsub.f32 1.0, %v592
      %v2940 = vsub.f32 1.0, %v593
      %v2941 = vsub.f32 1.0, %v594
      %v2942 = vsub.f32 1.0, %v595
      %v2943 = vsub.f32 1.0, %v596
      %v2944 = vsub.f32 1.0, %v597
      %v2945 = vsub.f32 1.0, %v598
      %v2946 = vmul.f32 %v2914, %v2850
      %v2947 = vmul.f32 %v2915, %v2851
      %v2948 = vmul.f32 %v2916, %v2852
      %v2949 = vmul.f32 %v2917, %v2853
      %v2950 = vmul.f32 %v2918, %v2854
      %v2951 = vmul.f32 %v2919, %v2855
      %v2952 = vmul.f32 %v2920, %v2856
      %v2953 = vmul.f32 %v2921, %v2857
      %v2954 = vmul.f32 %v2922, %v2858
      %v2955 = vmul.f32 %v2923, %v2859
      %v2956 = vmul.f32 %v2924, %v2860
      %v2957 = vmul.f32 %v2925, %v2861
      %v2958 = vmul.f32 %v2926, %v2862
      %v2959 = vmul.f32 %v2927, %v2863
      %v2960 = vmul.f32 %v2928, %v2864
      %v2961 = vmul.f32 %v2929, %v2865
      %v2962 = vmul.f32 %v2930, %v2866
      %v2963 = vmul.f32 %v2931, %v2867
      %v2964 = vmul.f32 %v2932, %v2868
      %v2965 = vmul.f32 %v2933, %v2869
      %v2966 = vmul.f32 %v2934, %v2870
      %v2967 = vmul.f32 %v2935, %v2871
      %v2968 = vmul.f32 %v2936, %v2872
      %v2969 = vmul.f32 %v2937, %v2873
      %v2970 = vmul.f32 %v2938, %v2874
      %v2971 = vmul.f32 %v2939, %v2875
      %v2972 = vmul.f32 %v2940, %v2876
      %v2973 = vmul.f32 %v2941, %v2877
      %v2974 = vmul.f32 %v2942, %v2878
      %v2975 = vmul.f32 %v2943, %v2879
      %v2976 = vmul.f32 %v2944, %v2880
      %v2977 = vmul.f32 %v2945, %v2881
      %v2978 = vadd.f32 %v2882, %v2946
      %v2979 = vadd.f32 %v2883, %v2947
      %v2980 = vadd.f32 %v2884, %v2948
      %v2981 = vadd.f32 %v2885, %v2949
      %v2982 = vadd.f32 %v2886, %v2950
      %v2983 = vadd.f32 %v2887, %v2951
      %v2984 = vadd.f32 %v2888, %v2952
      %v2985 = vadd.f32 %v2889, %v2953
      %v2986 = vadd.f32 %v2890, %v2954
      %v2987 = vadd.f32 %v2891, %v2955
      %v2988 = vadd.f32 %v2892, %v2956
      %v2989 = vadd.f32 %v2893, %v2957
      %v2990 = vadd.f32 %v2894, %v2958
      %v2991 = vadd.f32 %v2895, %v2959
      %v2992 = vadd.f32 %v2896, %v2960
      %v2993 = vadd.f32 %v2897, %v2961
      %v2994 = vadd.f32 %v2898, %v2962
      %v2995 = vadd.f32 %v2899, %v2963
      %v2996 = vadd.f32 %v2900, %v2964
      %v2997 = vadd.f32 %v2901, %v2965
      %v2998 = vadd.f32 %v2902, %v2966
      %v2999 = vadd.f32 %v2903, %v2967
      %v3000 = vadd.f32 %v2904, %v2968
      %v3001 = vadd.f32 %v2905, %v2969
      %v3002 = vadd.f32 %v2906, %v2970
      %v3003 = vadd.f32 %v2907, %v2971
      %v3004 = vadd.f32 %v2908, %v2972
      %v3005 = vadd.f32 %v2909, %v2973
      %v3006 = vadd.f32 %v2910, %v2974
      %v3007 = vadd.f32 %v2911, %v2975
      %v3008 = vadd.f32 %v2912, %v2976
      %v3009 = vadd.f32 %v2913, %v2977
      %v3010 = vsub.f32 0.0, %v2978
      %v3011 = vsub.f32 0.0, %v2979
      %v3012 = vsub.f32 0.0, %v2980
      %v3013 = vsub.f32 0.0, %v2981
      %v3014 = vsub.f32 0.0, %v2982
      %v3015 = vsub.f32 0.0, %v2983
      %v3016 = vsub.f32 0.0, %v2984
      %v3017 = vsub.f32 0.0, %v2985
      %v3018 = vsub.f32 0.0, %v2986
      %v3019 = vsub.f32 0.0, %v2987
      %v3020 = vsub.f32 0.0, %v2988
      %v3021 = vsub.f32 0.0, %v2989
      %v3022 = vsub.f32 0.0, %v2990
      %v3023 = vsub.f32 0.0, %v2991
      %v3024 = vsub.f32 0.0, %v2992
      %v3025 = vsub.f32 0.0, %v2993
      %v3026 = vsub.f32 0.0, %v2994
      %v3027 = vsub.f32 0.0, %v2995
      %v3028 = vsub.f32 0.0, %v2996
      %v3029 = vsub.f32 0.0, %v2997
      %v3030 = vsub.f32 0.0, %v2998
      %v3031 = vsub.f32 0.0, %v2999
      %v3032 = vsub.f32 0.0, %v3000
      %v3033 = vsub.f32 0.0, %v3001
      %v3034 = vsub.f32 0.0, %v3002
      %v3035 = vsub.f32 0.0, %v3003
      %v3036 = vsub.f32 0.0, %v3004
      %v3037 = vsub.f32 0.0, %v3005
      %v3038 = vsub.f32 0.0, %v3006
      %v3039 = vsub.f32 0.0, %v3007
      %v3040 = vsub.f32 0.0, %v3008
      %v3041 = vsub.f32 0.0, %v3009
      %v3042 = vsel %vm630, %v3010, 0.0
      %3043 = vadd.xlane.f32.xlu0 %v3042
      %v3044 = vpop.xlane.xlu0 %3043
      %v3045 = vsel %vm630, %v3011, 0.0
      %3046 = vadd.xlane.f32.xlu0 %v3045
      %v3047 = vpop.xlane.xlu0 %3046
      %v3048 = vsel %vm630, %v3012, 0.0
      %3049 = vadd.xlane.f32.xlu0 %v3048
      %v3050 = vpop.xlane.xlu0 %3049
      %v3051 = vsel %vm630, %v3013, 0.0
      %3052 = vadd.xlane.f32.xlu0 %v3051
      %v3053 = vpop.xlane.xlu0 %3052
      %v3054 = vsel %vm630, %v3014, 0.0
      %3055 = vadd.xlane.f32.xlu0 %v3054
      %v3056 = vpop.xlane.xlu0 %3055
      %v3057 = vsel %vm630, %v3015, 0.0
      %3058 = vadd.xlane.f32.xlu0 %v3057
      %v3059 = vpop.xlane.xlu0 %3058
      %v3060 = vsel %vm630, %v3016, 0.0
      %3061 = vadd.xlane.f32.xlu0 %v3060
      %v3062 = vpop.xlane.xlu0 %3061
      %v3063 = vsel %vm630, %v3017, 0.0
      %3064 = vadd.xlane.f32.xlu0 %v3063
      %v3065 = vpop.xlane.xlu0 %3064
      %v3066 = vsel %vm630, %v3018, 0.0
      %3067 = vadd.xlane.f32.xlu0 %v3066
      %v3068 = vpop.xlane.xlu0 %3067
      %v3069 = vsel %vm630, %v3019, 0.0
      %3070 = vadd.xlane.f32.xlu0 %v3069
      %v3071 = vpop.xlane.xlu0 %3070
      %v3072 = vsel %vm630, %v3020, 0.0
      %3073 = vadd.xlane.f32.xlu0 %v3072
      %v3074 = vpop.xlane.xlu0 %3073
      %v3075 = vsel %vm630, %v3021, 0.0
      %3076 = vadd.xlane.f32.xlu0 %v3075
      %v3077 = vpop.xlane.xlu0 %3076
      %v3078 = vsel %vm630, %v3022, 0.0
      %3079 = vadd.xlane.f32.xlu0 %v3078
      %v3080 = vpop.xlane.xlu0 %3079
      %v3081 = vsel %vm630, %v3023, 0.0
      %3082 = vadd.xlane.f32.xlu0 %v3081
      %v3083 = vpop.xlane.xlu0 %3082
      %v3084 = vsel %vm630, %v3024, 0.0
      %3085 = vadd.xlane.f32.xlu0 %v3084
      %v3086 = vpop.xlane.xlu0 %3085
      %v3087 = vsel %vm630, %v3025, 0.0
      %3088 = vadd.xlane.f32.xlu0 %v3087
      %v3089 = vpop.xlane.xlu0 %3088
      %v3090 = vsel %vm630, %v3026, 0.0
      %3091 = vadd.xlane.f32.xlu0 %v3090
      %v3092 = vpop.xlane.xlu0 %3091
      %v3093 = vsel %vm630, %v3027, 0.0
      %3094 = vadd.xlane.f32.xlu0 %v3093
      %v3095 = vpop.xlane.xlu0 %3094
      %v3096 = vsel %vm630, %v3028, 0.0
      %3097 = vadd.xlane.f32.xlu0 %v3096
      %v3098 = vpop.xlane.xlu0 %3097
      %v3099 = vsel %vm630, %v3029, 0.0
      %3100 = vadd.xlane.f32.xlu0 %v3099
      %v3101 = vpop.xlane.xlu0 %3100
      %v3102 = vsel %vm630, %v3030, 0.0
      %3103 = vadd.xlane.f32.xlu0 %v3102
      %v3104 = vpop.xlane.xlu0 %3103
      %v3105 = vsel %vm630, %v3031, 0.0
      %3106 = vadd.xlane.f32.xlu0 %v3105
      %v3107 = vpop.xlane.xlu0 %3106
      %v3108 = vsel %vm630, %v3032, 0.0
      %3109 = vadd.xlane.f32.xlu0 %v3108
      %v3110 = vpop.xlane.xlu0 %3109
      %v3111 = vsel %vm630, %v3033, 0.0
      %3112 = vadd.xlane.f32.xlu0 %v3111
      %v3113 = vpop.xlane.xlu0 %3112
      %v3114 = vsel %vm630, %v3034, 0.0
      %3115 = vadd.xlane.f32.xlu0 %v3114
      %v3116 = vpop.xlane.xlu0 %3115
      %v3117 = vsel %vm630, %v3035, 0.0
      %3118 = vadd.xlane.f32.xlu0 %v3117
      %v3119 = vpop.xlane.xlu0 %3118
      %v3120 = vsel %vm630, %v3036, 0.0
      %3121 = vadd.xlane.f32.xlu0 %v3120
      %v3122 = vpop.xlane.xlu0 %3121
      %v3123 = vsel %vm630, %v3037, 0.0
      %3124 = vadd.xlane.f32.xlu0 %v3123
      %v3125 = vpop.xlane.xlu0 %3124
      %v3126 = vsel %vm630, %v3038, 0.0
      %3127 = vadd.xlane.f32.xlu0 %v3126
      %v3128 = vpop.xlane.xlu0 %3127
      %v3129 = vsel %vm630, %v3039, 0.0
      %3130 = vadd.xlane.f32.xlu0 %v3129
      %v3131 = vpop.xlane.xlu0 %3130
      %v3132 = vsel %vm630, %v3040, 0.0
      %3133 = vadd.xlane.f32.xlu0 %v3132
      %v3134 = vpop.xlane.xlu0 %3133
      %v3135 = vsel %vm630, %v3041, 0.0
      %3136 = vadd.xlane.f32.xlu0 %v3135
      %v3137 = vpop.xlane.xlu0 %3136
      %v3138 = vrcp.pop 16.0
      %v3139 = vmul.f32 %v3044, %v3138
      %v3140 = vmul.f32 %v3047, %v3138
      %v3141 = vmul.f32 %v3050, %v3138
      %v3142 = vmul.f32 %v3053, %v3138
      %v3143 = vmul.f32 %v3056, %v3138
      %v3144 = vmul.f32 %v3059, %v3138
      %v3145 = vmul.f32 %v3062, %v3138
      %v3146 = vmul.f32 %v3065, %v3138
      %v3147 = vmul.f32 %v3068, %v3138
      %v3148 = vmul.f32 %v3071, %v3138
      %v3149 = vmul.f32 %v3074, %v3138
      %v3150 = vmul.f32 %v3077, %v3138
      %v3151 = vmul.f32 %v3080, %v3138
      %v3152 = vmul.f32 %v3083, %v3138
      %v3153 = vmul.f32 %v3086, %v3138
      %v3154 = vmul.f32 %v3089, %v3138
      %v3155 = vmul.f32 %v3092, %v3138
      %v3156 = vmul.f32 %v3095, %v3138
      %v3157 = vmul.f32 %v3098, %v3138
      %v3158 = vmul.f32 %v3101, %v3138
      %v3159 = vmul.f32 %v3104, %v3138
      %v3160 = vmul.f32 %v3107, %v3138
      %v3161 = vmul.f32 %v3110, %v3138
      %v3162 = vmul.f32 %v3113, %v3138
      %v3163 = vmul.f32 %v3116, %v3138
      %v3164 = vmul.f32 %v3119, %v3138
      %v3165 = vmul.f32 %v3122, %v3138
      %v3166 = vmul.f32 %v3125, %v3138
      %v3167 = vmul.f32 %v3128, %v3138
      %v3168 = vmul.f32 %v3131, %v3138
      %v3169 = vmul.f32 %v3134, %v3138
      %v3170 = vmul.f32 %v3137, %v3138
      %vm3171 = vcmask 7168
      %3172 = vst.msk [vmem:[%s532] sm:$0xff] %vm3171, %v3139
      %3173 = vst.msk [vmem:[%s532 + $0x8] sm:$0xff] %vm3171, %v3140
      %3174 = vst.msk [vmem:[%s532 + $0x10] sm:$0xff] %vm3171, %v3141
      %3175 = vst.msk [vmem:[%s532 + $0x18] sm:$0xff] %vm3171, %v3142
      %3176 = vst.msk [vmem:[%s532 + $0x20] sm:$0xff] %vm3171, %v3143
      %3177 = vst.msk [vmem:[%s532 + $0x28] sm:$0xff] %vm3171, %v3144
      %3178 = vst.msk [vmem:[%s532 + $0x30] sm:$0xff] %vm3171, %v3145
      %3179 = vst.msk [vmem:[%s532 + $0x38] sm:$0xff] %vm3171, %v3146
      %3180 = vst.msk [vmem:[%s532 + $0x40] sm:$0xff] %vm3171, %v3147
      %3181 = vst.msk [vmem:[%s532 + $0x48] sm:$0xff] %vm3171, %v3148
      %3182 = vst.msk [vmem:[%s532 + $0x50] sm:$0xff] %vm3171, %v3149
      %3183 = vst.msk [vmem:[%s532 + $0x58] sm:$0xff] %vm3171, %v3150
      %3184 = vst.msk [vmem:[%s532 + $0x60] sm:$0xff] %vm3171, %v3151
      %3185 = vst.msk [vmem:[%s532 + $0x68] sm:$0xff] %vm3171, %v3152
      %3186 = vst.msk [vmem:[%s532 + $0x70] sm:$0xff] %vm3171, %v3153
      %3187 = vst.msk [vmem:[%s532 + $0x78] sm:$0xff] %vm3171, %v3154
      %3188 = vst.msk [vmem:[%s532 + $0x80] sm:$0xff] %vm3171, %v3155
      %3189 = vst.msk [vmem:[%s532 + $0x88] sm:$0xff] %vm3171, %v3156
      %3190 = vst.msk [vmem:[%s532 + $0x90] sm:$0xff] %vm3171, %v3157
      %3191 = vst.msk [vmem:[%s532 + $0x98] sm:$0xff] %vm3171, %v3158
      %3192 = vst.msk [vmem:[%s532 + $0xa0] sm:$0xff] %vm3171, %v3159
      %3193 = vst.msk [vmem:[%s532 + $0xa8] sm:$0xff] %vm3171, %v3160
      %3194 = vst.msk [vmem:[%s532 + $0xb0] sm:$0xff] %vm3171, %v3161
      %3195 = vst.msk [vmem:[%s532 + $0xb8] sm:$0xff] %vm3171, %v3162
      %3196 = vst.msk [vmem:[%s532 + $0xc0] sm:$0xff] %vm3171, %v3163
      %3197 = vst.msk [vmem:[%s532 + $0xc8] sm:$0xff] %vm3171, %v3164
      %3198 = vst.msk [vmem:[%s532 + $0xd0] sm:$0xff] %vm3171, %v3165
      %3199 = vst.msk [vmem:[%s532 + $0xd8] sm:$0xff] %vm3171, %v3166
      %3200 = vst.msk [vmem:[%s532 + $0xe0] sm:$0xff] %vm3171, %v3167
      %3201 = vst.msk [vmem:[%s532 + $0xe8] sm:$0xff] %vm3171, %v3168
      %3202 = vst.msk [vmem:[%s532 + $0xf0] sm:$0xff] %vm3171, %v3169
      %3203 = vst.msk [vmem:[%s532 + $0xf8] sm:$0xff] %vm3171, %v3170
      %s3204 = smul.u32 32, %s27
      %p3205 = scmp.lt.s32.totalorder %s3204, 63
      %s3206 = scalar_select %p3205, %s3204, 63
      %s3207 = smul.addr %s3206, 8
      %s3208 = scalar_lea.vmem %s14, %s3207
      %s3209 = smul.u32 32, %s27
      %p3210 = scmp.lt.s32.totalorder %s3209, 63
      %s3211 = scalar_select %p3210, %s3209, 63
      %s3212 = smul.addr %s3211, 8
      %s3213 = scalar_lea.vmem %s15, %s3212
      // Predicated region
      $region77: #{ae4_forward.1} parent=75 // pred_check
        %p3214 = pneg %p349
      $region78: #{ae4_forward.1} parent=75 // pred_check_branch
        %3216 = sbr.rel (%p3214) target = $region80
      $region79: #{ae4_forward.1} parent=75 // pred_region
        %s3217 = smul.u32 32, %s27
      $region80: #{ae4_forward.1} parent=75 // pred_fallthru
        _
      // Predicated region
      $region81: #{ae4_forward.1} parent=75 // pred_check
        %p3218 = pneg %p375
      $region82: #{ae4_forward.1} parent=75 // pred_check_branch
        %3220 = sbr.rel (%p3218) target = $region84
      $region83: #{ae4_forward.1} parent=75 // pred_region
        %s3221 = smul.u32 32, %s27
      $region84: #{ae4_forward.1} parent=75 // pred_fallthru
        _
    $region76: #{ae4_forward.1} parent=5 // pred_fallthru
      _
    %p3222 = scmp.le.s32.totalorder 2, %s22
    // Predicated region
    $region85: #{ae4_forward.1} parent=5 // pred_check
      %p3223 = pneg %p3222
    $region86: #{ae4_forward.1} parent=5 // pred_check_branch
      %3225 = sbr.rel (%p3223) target = $region88
    $region87: #{ae4_forward.1} parent=5 // pred_region
      %s3226 = ssub.s32 %s22, 2
      // Predicated region
      $region89: #{ae4_forward.1} parent=87 // pred_check
        %p3227 = pneg %p355
      $region90: #{ae4_forward.1} parent=87 // pred_check_branch
        %3229 = sbr.rel (%p3227) target = $region92
      $region91: #{ae4_forward.1} parent=87 // pred_region
        %s3230 = smul.u32 32, %s28
        %p3231 = scmp.lt.s32.totalorder %s3230, 63
        %s3232 = scalar_select %p3231, %s3230, 63
        %s3233 = smul.addr %s3232, 8
        %s3234 = scalar_lea.vmem %s14, %s3233
      $region92: #{ae4_forward.1} parent=87 // pred_fallthru
        _
      // Predicated region
      $region93: #{ae4_forward.1} parent=87 // pred_check
        %p3235 = pneg %p381
      $region94: #{ae4_forward.1} parent=87 // pred_check_branch
        %3237 = sbr.rel (%p3235) target = $region96
      $region95: #{ae4_forward.1} parent=87 // pred_region
        %s3238 = smul.u32 32, %s28
        %p3239 = scmp.lt.s32.totalorder %s3238, 63
        %s3240 = scalar_select %p3239, %s3238, 63
        %s3241 = smul.addr %s3240, 8
        %s3242 = scalar_lea.vmem %s15, %s3241
      $region96: #{ae4_forward.1} parent=87 // pred_fallthru
        _
    $region88: #{ae4_forward.1} parent=5 // pred_fallthru
      _
  $region6: #{ae4_forward.1} parent=0 // loop_footer
    %s26 = sadd.s32 1, %s22
  $region7: #{ae4_forward.1} parent=0 // loop_footer_branch
    %21 = sbr.rel target = $region3
  $region8: #{ae4_forward.1} parent=0 // loop_exit
    _

</llo_original>
